<compile_context>
chip_gen: v5e
topology: v5e:2x2
jax: 0.10.0
libtpu: 0.0.40
codegen_flags: <defaults>
</compile_context>

<pallas_src>
import functools

import jax
import jax.numpy as jnp
from jax import lax
from jax.experimental import pallas as pl
from jax.experimental.pallas import tpu as pltpu


def _pair(v):
    return (v, v) if isinstance(v, int) else tuple(v)


def _sigmoid(v):
    # sigmoid(v) = 0.5 * (tanh(v/2) + 1): one EUP transcendental, no divide,
    # numerically stable for arbitrarily large |v| (no exp overflow).
    return 0.5 * (jnp.tanh(0.5 * v) + 1.0)


def _convgru_cell_kernel(xp_ref, hp_ref, hflat_ref, w_in_ref, b_in_ref,
                         w_hid_ref, o_ref, *, NB, Hc, OH, OW,
                         KHI, KWI, KHH, KWH):
    """Fused ConvGRU2dCell forward for NB batch samples.

    xp_ref:    (NB, XPH, XPW, Cin)  bf16  zero-padded input (pre-padded)
    hp_ref:    (NB, HPH, HPW, Hc)   bf16  zero-padded previous hidden
    hflat_ref: (NB*OH*OW, Hc)       f32   previous hidden, flat, blend path
    w_in_ref:  (KHI*KWI*Cin, 3*Hc)  bf16  im2col-ordered input-conv weight
    b_in_ref:  (1, 3*Hc)            f32   input-conv bias
    w_hid_ref: (KHH*KWH*Hc, 3*Hc)   bf16  im2col-ordered hidden-conv weight
    o_ref:     (NB*OH*OW, Hc)             new hidden state (flat)
    """
    f32 = jnp.float32
    Cin = xp_ref.shape[-1]
    M = NB * OH * OW

    xp = xp_ref[...]                       # bf16, already zero padded
    hp = hp_ref[...]                       # bf16, already zero padded

    # im2col: one fat-K slab per conv, flattened to 2-D so the MXU sees a
    # single (M, K) x (K, 3*Hc) contraction with M = NB*OH*OW rows.
    # TODO(synk): for very small Cin, benchmark per-tap accumulated dots
    # against this lane-concat (the concat is XLU-relayout bound at Cin=4).
    x_cols = jnp.concatenate(
        [xp[:, kh:kh + OH, kw:kw + OW, :]
         for kh in range(KHI) for kw in range(KWI)],
        axis=-1).reshape(M, KHI * KWI * Cin)
    h_cols = jnp.concatenate(
        [hp[:, kh:kh + OH, kw:kw + OW, :]
         for kh in range(KHH) for kw in range(KWH)],
        axis=-1).reshape(M, KHH * KWH * Hc)

    i_all = jnp.dot(x_cols, w_in_ref[...],
                    preferred_element_type=f32) + b_in_ref[...]   # (M, 3*Hc)
    h_all = jnp.dot(h_cols, w_hid_ref[...],
                    preferred_element_type=f32)                   # (M, 3*Hc)

    # GRU gates + blend: all f32 elementwise (v5e has no bf16 VPU/EUP).
    reset = _sigmoid(i_all[:, 0:Hc] + h_all[:, 0:Hc])
    update = _sigmoid(i_all[:, Hc:2 * Hc] + h_all[:, Hc:2 * Hc])
    cand = jnp.tanh(i_all[:, 2 * Hc:3 * Hc] + reset * h_all[:, 2 * Hc:3 * Hc])

    h_prev = hflat_ref[...]                                       # (M, Hc) f32
    # update*cand + (1-update)*h_prev == h_prev + update*(cand - h_prev)
    o_ref[...] = (h_prev + update * (cand - h_prev)).astype(o_ref.dtype)


def pack_conv_gru_params(params):
    """One-time repack of the PyTorch-layout Conv2d weights for the kernel.

    Hoisted out of the per-step call so a recurrent rollout pays the OIHW
    transpose / reshape / bf16 cast exactly once, not on every timestep.
    """
    w_in, b_in, w_hid = params["w_in"], params["b_in"], params["w_hid"]
    C3, Cin, KHI, KWI = w_in.shape
    _, Hc, KHH, KWH = w_hid.shape
    assert C3 == 3 * Hc
    return dict(
        w_in_mat=jnp.transpose(w_in, (2, 3, 1, 0))
        .reshape(KHI * KWI * Cin, C3).astype(jnp.bfloat16),
        b_in=b_in.reshape(1, C3).astype(jnp.float32),
        w_hid_mat=jnp.transpose(w_hid, (2, 3, 1, 0))
        .reshape(KHH * KWH * Hc, C3).astype(jnp.bfloat16),
        # static metadata (plain Python ints; mark static if jitting wrapper)
        Cin=int(Cin), Hc=int(Hc),
        KHI=int(KHI), KWI=int(KWI), KHH=int(KHH), KWH=int(KWH),
    )


def conv_gru_2d_cell(x_nchw, hidden_nchw, packed, *,
                     padding_input=0, padding_hidden=1):
    """Forward pass of ConvGRU2dCell.  x / hidden / output are NCHW (f32)."""
    Cin, Hc = packed["Cin"], packed["Hc"]
    KHI, KWI = packed["KHI"], packed["KWI"]
    KHH, KWH = packed["KHH"], packed["KWH"]
    C3 = 3 * Hc
    N, Cx, H, W = x_nchw.shape
    assert Cx == Cin
    PIH, PIW = _pair(padding_input)
    PHH, PHW = _pair(padding_hidden)

    # compute_hidden_shape (stride=1, dilation=1 as in the module)
    OH = H + 2 * PIH - KHI + 1
    OW = W + 2 * PIW - KWI + 1
    assert OH + 2 * PHH - KHH + 1 == OH and OW + 2 * PHW - KWH + 1 == OW, (
        "hidden conv must preserve the hidden spatial shape")

    if hidden_nchw is None:
        hidden_nchw = jnp.zeros((N, Hc, OH, OW), x_nchw.dtype)
    assert hidden_nchw.shape == (N, Hc, OH, OW), hidden_nchw.shape

    # ---- batch fold: NB samples per grid step -> matmul M = NB*OH*OW -------
    target_m = 2048
    NB = 1
    for d in range(1, N + 1):
        if N % d == 0 and d * OH * OW <= max(OH * OW, target_m):
            NB = d
    M = NB * OH * OW

    # ---- layout glue (pad fuses into the NCHW->NHWC transpose) -------------
    x_nhwc = jnp.transpose(x_nchw, (0, 2, 3, 1))
    h_nhwc = jnp.transpose(hidden_nchw, (0, 2, 3, 1))
    x_pad = jnp.pad(x_nhwc, ((0, 0), (PIH, PIH), (PIW, PIW), (0, 0))
                    ).astype(jnp.bfloat16)
    h_pad = jnp.pad(h_nhwc, ((0, 0), (PHH, PHH), (PHW, PHW), (0, 0))
                    ).astype(jnp.bfloat16)
    # f32 copy of the hidden state for the final blend, flat (rows, Hc)
    h_flat = h_nhwc.reshape(N * OH * OW, Hc).astype(jnp.float32)

    XPH, XPW = H + 2 * PIH, W + 2 * PIW
    HPH, HPW = OH + 2 * PHH, OW + 2 * PHW

    kernel = functools.partial(
        _convgru_cell_kernel, NB=NB, Hc=Hc, OH=OH, OW=OW,
        KHI=KHI, KWI=KWI, KHH=KHH, KWH=KWH)

    # VMEM budget: double-buffered blocks + in-kernel im2col / gate
    # temporaries, with 2x headroom; clamped well below physical VMEM on
    # v5e/v6e (128 MiB) and v7x (64 MiB).
    block_bytes = (NB * XPH * XPW * Cin * 2 + NB * HPH * HPW * Hc * 2
                   + M * Hc * 4                       # h_flat in
                   + KHI * KWI * Cin * C3 * 2 + C3 * 4
                   + KHH * KWH * Hc * C3 * 2
                   + M * Hc * 4)                      # out
    interm_bytes = (M * (KHI * KWI * Cin + KHH * KWH * Hc) * 2
                    + 2 * M * C3 * 4 + 6 * M * Hc * 4)
    vmem_limit = int(min(96 * 2 ** 20,
                         max(4 * 2 ** 20, 2 * (2 * block_bytes + interm_bytes))))

    out_flat = pl.pallas_call(
        kernel,
        out_shape=jax.ShapeDtypeStruct((N * OH * OW, Hc), x_nchw.dtype),
        grid_spec=pltpu.PrefetchScalarGridSpec(
            num_scalar_prefetch=0,
            grid=(N // NB,),                          # NB samples per step
            in_specs=[
                pl.BlockSpec((NB, XPH, XPW, Cin), lambda n: (n, 0, 0, 0)),
                pl.BlockSpec((NB, HPH, HPW, Hc), lambda n: (n, 0, 0, 0)),
                pl.BlockSpec((M, Hc), lambda n: (n, 0)),
                # Invariant weights/bias: at production Hc (>=128) add
                # pipeline_mode=pl.Buffered(1) to avoid double-buffering them.
                pl.BlockSpec((KHI * KWI * Cin, C3), lambda n: (0, 0)),
                pl.BlockSpec((1, C3), lambda n: (0, 0)),
                pl.BlockSpec((KHH * KWH * Hc, C3), lambda n: (0, 0)),
            ],
            out_specs=pl.BlockSpec((M, Hc), lambda n: (n, 0)),
        ),
        compiler_params=pltpu.CompilerParams(
            dimension_semantics=("parallel",),        # batch over 2 TCs on v7x
            vmem_limit_bytes=vmem_limit),
    )(x_pad, h_pad, h_flat, packed["w_in_mat"], packed["b_in"],
      packed["w_hid_mat"])

    # NHWC(flat) -> NCHW.  (For production sizes pick Hc a multiple of 128 or
    # emit (Hc, OH*OW) orientation for unmasked lane-dense stores.)
    return jnp.transpose(out_flat.reshape(N, OH, OW, Hc), (0, 3, 1, 2))


def init_params(key, in_channels, hidden_channels, kernel_size_input,
                kernel_size_hidden=(3, 3)):
    """Deterministic synthetic parameters for the two Conv2d layers."""
    k1, k2, k3 = jax.random.split(key, 3)
    khi, kwi = _pair(kernel_size_input)
    khh, kwh = _pair(kernel_size_hidden)
    c3 = 3 * hidden_channels
    return dict(
        w_in=0.1 * jax.random.normal(k1, (c3, in_channels, khi, kwi), jnp.float32),
        b_in=0.05 * jax.random.normal(k2, (c3,), jnp.float32),
        w_hid=0.05 * jax.random.normal(k3, (c3, hidden_channels, khh, kwh), jnp.float32),
    )


def _reference(x, hidden, params, padding_input, padding_hidden):
    """Pure-JAX (XLA conv) reference mirroring the PyTorch forward."""
    PIH, PIW = _pair(padding_input)
    PHH, PHW = _pair(padding_hidden)
    Hc = params["w_hid"].shape[1]
    i_all = lax.conv_general_dilated(
        x, params["w_in"], (1, 1), ((PIH, PIH), (PIW, PIW)),
        dimension_numbers=("NCHW", "OIHW", "NCHW")) + params["b_in"][None, :, None, None]
    if hidden is None:
        hidden = jnp.zeros((x.shape[0], Hc, i_all.shape[2], i_all.shape[3]), x.dtype)
    h_all = lax.conv_general_dilated(
        hidden, params["w_hid"], (1, 1), ((PHH, PHH), (PHW, PHW)),
        dimension_numbers=("NCHW", "OIHW", "NCHW"))
    i1, i2, i3 = jnp.split(i_all, 3, axis=1)
    h1, h2, h3 = jnp.split(h_all, 3, axis=1)
    r = jax.nn.sigmoid(i1 + h1)
    z = jax.nn.sigmoid(i2 + h2)
    n = jnp.tanh(i3 + r * h3)
    return z * n + (1.0 - z) * hidden


if __name__ == "__main__":
    key = jax.random.PRNGKey(0)
    kx, kh, kp = jax.random.split(key, 3)

    N, Cin, H, W = 2, 4, 16, 16
    Hc = 32
    kernel_size_input, padding_input = (3, 3), (1, 1)      # hidden spatial = 16x16
    kernel_size_hidden, padding_hidden = (3, 3), (1, 1)

    x = jax.random.normal(kx, (N, Cin, H, W), jnp.float32)
    hidden = 0.5 * jax.random.normal(kh, (N, Hc, H, W), jnp.float32)
    params = init_params(kp, Cin, Hc, kernel_size_input, kernel_size_hidden)

    # One-time weight repack, hoisted out of the (recurrent) step call.
    packed = pack_conv_gru_params(params)

    out = conv_gru_2d_cell(x, hidden, packed,
                           padding_input=padding_input,
                           padding_hidden=padding_hidden)
    out = jax.block_until_ready(out)

    # Also exercise the hidden=None branch of the module.
    out0 = conv_gru_2d_cell(x, None, packed,
                            padding_input=padding_input,
                            padding_hidden=padding_hidden)
    out0 = jax.block_until_ready(out0)

    ref = _reference(x, hidden, params, padding_input, padding_hidden)
    ref0 = _reference(x, None, params, padding_input, padding_hidden)
    assert out.shape == ref.shape, (out.shape, ref.shape)
    assert out0.shape == ref0.shape, (out0.shape, ref0.shape)

    # bf16 MXU operands vs an all-f32 XLA reference -> loosened tolerance.
    err = float(jnp.max(jnp.abs(out - ref)))
    err0 = float(jnp.max(jnp.abs(out0 - ref0)))
    if not (bool(jnp.allclose(out, ref, rtol=2e-2, atol=2e-2)) and
            bool(jnp.allclose(out0, ref0, rtol=2e-2, atol=2e-2))):
        raise AssertionError(
            f"Pallas output mismatches reference: max abs err = {err} (hidden), "
            f"{err0} (hidden=None)")

    print("KERNEL_OK")
</pallas_src>

<mosaic_0001>
module attributes {stable_mosaic.version = 11 : i64} {
  func.func @_convgru_cell_kernel(%arg0: i32, %arg1: memref<2x18x18x4xbf16, #tpu.memory_space<vmem>>, %arg2: memref<2x18x18x32xbf16, #tpu.memory_space<vmem>>, %arg3: memref<512x32xf32, #tpu.memory_space<vmem>>, %arg4: memref<36x96xbf16, #tpu.memory_space<vmem>>, %arg5: memref<1x96xf32, #tpu.memory_space<vmem>>, %arg6: memref<288x96xbf16, #tpu.memory_space<vmem>>, %arg7: memref<512x32xf32, #tpu.memory_space<vmem>>) attributes {dimension_semantics = [#tpu.dimension_semantics<parallel>], iteration_bounds = array<i64: 1>, scalar_prefetch = 0 : i64, scratch_operands = 0 : i64, tpu.core_type = #tpu.core_type<tc>, window_params = [{transform_indices = @transform_0, window_bounds = array<i64: 2, 18, 18, 4>}, {transform_indices = @transform_1, window_bounds = array<i64: 2, 18, 18, 32>}, {transform_indices = @transform_2, window_bounds = array<i64: 512, 32>}, {pipeline_mode = #tpu.pipeline_mode<synchronous>, transform_indices = @transform_3, window_bounds = array<i64: 36, 96>}, {pipeline_mode = #tpu.pipeline_mode<synchronous>, transform_indices = @transform_4, window_bounds = array<i64: 1, 96>}, {pipeline_mode = #tpu.pipeline_mode<synchronous>, transform_indices = @transform_5, window_bounds = array<i64: 288, 96>}, {transform_indices = @transform_6, window_bounds = array<i64: 512, 32>}]} {
    %c0 = arith.constant 0 : index
    %c0_0 = arith.constant 0 : index
    %c0_1 = arith.constant 0 : index
    %c0_2 = arith.constant 0 : index
    %0 = vector.load %arg1[%c0, %c0_0, %c0_1, %c0_2] : memref<2x18x18x4xbf16, #tpu.memory_space<vmem>>, vector<2x18x18x4xbf16>
    %c0_3 = arith.constant 0 : index
    %c0_4 = arith.constant 0 : index
    %c0_5 = arith.constant 0 : index
    %c0_6 = arith.constant 0 : index
    %1 = vector.load %arg2[%c0_3, %c0_4, %c0_5, %c0_6] : memref<2x18x18x32xbf16, #tpu.memory_space<vmem>>, vector<2x18x18x32xbf16>
    %2 = vector.extract_strided_slice %0 {offsets = [0, 0, 0, 0], sizes = [2, 16, 16, 4], strides = [1, 1, 1, 1]} : vector<2x18x18x4xbf16> to vector<2x16x16x4xbf16>
    %3 = vector.extract_strided_slice %0 {offsets = [0, 0, 1, 0], sizes = [2, 16, 16, 4], strides = [1, 1, 1, 1]} : vector<2x18x18x4xbf16> to vector<2x16x16x4xbf16>
    %4 = vector.extract_strided_slice %0 {offsets = [0, 0, 2, 0], sizes = [2, 16, 16, 4], strides = [1, 1, 1, 1]} : vector<2x18x18x4xbf16> to vector<2x16x16x4xbf16>
    %5 = vector.extract_strided_slice %0 {offsets = [0, 1, 0, 0], sizes = [2, 16, 16, 4], strides = [1, 1, 1, 1]} : vector<2x18x18x4xbf16> to vector<2x16x16x4xbf16>
    %6 = vector.extract_strided_slice %0 {offsets = [0, 1, 1, 0], sizes = [2, 16, 16, 4], strides = [1, 1, 1, 1]} : vector<2x18x18x4xbf16> to vector<2x16x16x4xbf16>
    %7 = vector.extract_strided_slice %0 {offsets = [0, 1, 2, 0], sizes = [2, 16, 16, 4], strides = [1, 1, 1, 1]} : vector<2x18x18x4xbf16> to vector<2x16x16x4xbf16>
    %8 = vector.extract_strided_slice %0 {offsets = [0, 2, 0, 0], sizes = [2, 16, 16, 4], strides = [1, 1, 1, 1]} : vector<2x18x18x4xbf16> to vector<2x16x16x4xbf16>
    %9 = vector.extract_strided_slice %0 {offsets = [0, 2, 1, 0], sizes = [2, 16, 16, 4], strides = [1, 1, 1, 1]} : vector<2x18x18x4xbf16> to vector<2x16x16x4xbf16>
    %10 = vector.extract_strided_slice %0 {offsets = [0, 2, 2, 0], sizes = [2, 16, 16, 4], strides = [1, 1, 1, 1]} : vector<2x18x18x4xbf16> to vector<2x16x16x4xbf16>
    %11 = tpu.concatenate %2, %3, %4, %5, %6, %7, %8, %9, %10 in 3 : vector<2x16x16x4xbf16>, vector<2x16x16x4xbf16>, vector<2x16x16x4xbf16>, vector<2x16x16x4xbf16>, vector<2x16x16x4xbf16>, vector<2x16x16x4xbf16>, vector<2x16x16x4xbf16>, vector<2x16x16x4xbf16>, vector<2x16x16x4xbf16> -> vector<2x16x16x36xbf16>
    %12 = vector.shape_cast %11 : vector<2x16x16x36xbf16> to vector<512x36xbf16>
    %13 = vector.extract_strided_slice %1 {offsets = [0, 0, 0, 0], sizes = [2, 16, 16, 32], strides = [1, 1, 1, 1]} : vector<2x18x18x32xbf16> to vector<2x16x16x32xbf16>
    %14 = vector.extract_strided_slice %1 {offsets = [0, 0, 1, 0], sizes = [2, 16, 16, 32], strides = [1, 1, 1, 1]} : vector<2x18x18x32xbf16> to vector<2x16x16x32xbf16>
    %15 = vector.extract_strided_slice %1 {offsets = [0, 0, 2, 0], sizes = [2, 16, 16, 32], strides = [1, 1, 1, 1]} : vector<2x18x18x32xbf16> to vector<2x16x16x32xbf16>
    %16 = vector.extract_strided_slice %1 {offsets = [0, 1, 0, 0], sizes = [2, 16, 16, 32], strides = [1, 1, 1, 1]} : vector<2x18x18x32xbf16> to vector<2x16x16x32xbf16>
    %17 = vector.extract_strided_slice %1 {offsets = [0, 1, 1, 0], sizes = [2, 16, 16, 32], strides = [1, 1, 1, 1]} : vector<2x18x18x32xbf16> to vector<2x16x16x32xbf16>
    %18 = vector.extract_strided_slice %1 {offsets = [0, 1, 2, 0], sizes = [2, 16, 16, 32], strides = [1, 1, 1, 1]} : vector<2x18x18x32xbf16> to vector<2x16x16x32xbf16>
    %19 = vector.extract_strided_slice %1 {offsets = [0, 2, 0, 0], sizes = [2, 16, 16, 32], strides = [1, 1, 1, 1]} : vector<2x18x18x32xbf16> to vector<2x16x16x32xbf16>
    %20 = vector.extract_strided_slice %1 {offsets = [0, 2, 1, 0], sizes = [2, 16, 16, 32], strides = [1, 1, 1, 1]} : vector<2x18x18x32xbf16> to vector<2x16x16x32xbf16>
    %21 = vector.extract_strided_slice %1 {offsets = [0, 2, 2, 0], sizes = [2, 16, 16, 32], strides = [1, 1, 1, 1]} : vector<2x18x18x32xbf16> to vector<2x16x16x32xbf16>
    %22 = tpu.concatenate %13, %14, %15, %16, %17, %18, %19, %20, %21 in 3 : vector<2x16x16x32xbf16>, vector<2x16x16x32xbf16>, vector<2x16x16x32xbf16>, vector<2x16x16x32xbf16>, vector<2x16x16x32xbf16>, vector<2x16x16x32xbf16>, vector<2x16x16x32xbf16>, vector<2x16x16x32xbf16>, vector<2x16x16x32xbf16> -> vector<2x16x16x288xbf16>
    %23 = vector.shape_cast %22 : vector<2x16x16x288xbf16> to vector<512x288xbf16>
    %c0_7 = arith.constant 0 : index
    %c0_8 = arith.constant 0 : index
    %24 = vector.load %arg4[%c0_7, %c0_8] : memref<36x96xbf16, #tpu.memory_space<vmem>>, vector<36x96xbf16>
    %cst = arith.constant dense<0.000000e+00> : vector<512x96xf32>
    %25 = tpu.matmul %12, %24, %cst {dimension_numbers = #tpu.dot_dimension_numbers<[1], [0], [0], [1], [0, 0, 1, 1], [], []>} : vector<512x36xbf16>, vector<36x96xbf16>, vector<512x96xf32> -> vector<512x96xf32>
    %c0_9 = arith.constant 0 : index
    %c0_10 = arith.constant 0 : index
    %26 = vector.load %arg5[%c0_9, %c0_10] : memref<1x96xf32, #tpu.memory_space<vmem>>, vector<1x96xf32>
    %27 = vector.broadcast %26 : vector<1x96xf32> to vector<512x96xf32>
    %28 = arith.addf %25, %27 : vector<512x96xf32>
    %c0_11 = arith.constant 0 : index
    %c0_12 = arith.constant 0 : index
    %29 = vector.load %arg6[%c0_11, %c0_12] : memref<288x96xbf16, #tpu.memory_space<vmem>>, vector<288x96xbf16>
    %cst_13 = arith.constant dense<0.000000e+00> : vector<512x96xf32>
    %30 = tpu.matmul %23, %29, %cst_13 {dimension_numbers = #tpu.dot_dimension_numbers<[1], [0], [0], [1], [0, 0, 1, 1], [], []>} : vector<512x288xbf16>, vector<288x96xbf16>, vector<512x96xf32> -> vector<512x96xf32>
    %31 = vector.extract_strided_slice %28 {offsets = [0, 0], sizes = [512, 32], strides = [1, 1]} : vector<512x96xf32> to vector<512x32xf32>
    %32 = vector.extract_strided_slice %30 {offsets = [0, 0], sizes = [512, 32], strides = [1, 1]} : vector<512x96xf32> to vector<512x32xf32>
    %33 = arith.addf %31, %32 : vector<512x32xf32>
    %cst_14 = arith.constant 5.000000e-01 : f32
    %34 = vector.broadcast %cst_14 : f32 to vector<512x32xf32>
    %35 = arith.mulf %34, %33 : vector<512x32xf32>
    %36 = math.tanh %35 : vector<512x32xf32>
    %cst_15 = arith.constant 1.000000e+00 : f32
    %37 = vector.broadcast %cst_15 : f32 to vector<512x32xf32>
    %38 = arith.addf %36, %37 : vector<512x32xf32>
    %cst_16 = arith.constant 5.000000e-01 : f32
    %39 = vector.broadcast %cst_16 : f32 to vector<512x32xf32>
    %40 = arith.mulf %39, %38 : vector<512x32xf32>
    %41 = vector.extract_strided_slice %28 {offsets = [0, 32], sizes = [512, 32], strides = [1, 1]} : vector<512x96xf32> to vector<512x32xf32>
    %42 = vector.extract_strided_slice %30 {offsets = [0, 32], sizes = [512, 32], strides = [1, 1]} : vector<512x96xf32> to vector<512x32xf32>
    %43 = arith.addf %41, %42 : vector<512x32xf32>
    %cst_17 = arith.constant 5.000000e-01 : f32
    %44 = vector.broadcast %cst_17 : f32 to vector<512x32xf32>
    %45 = arith.mulf %44, %43 : vector<512x32xf32>
    %46 = math.tanh %45 : vector<512x32xf32>
    %cst_18 = arith.constant 1.000000e+00 : f32
    %47 = vector.broadcast %cst_18 : f32 to vector<512x32xf32>
    %48 = arith.addf %46, %47 : vector<512x32xf32>
    %cst_19 = arith.constant 5.000000e-01 : f32
    %49 = vector.broadcast %cst_19 : f32 to vector<512x32xf32>
    %50 = arith.mulf %49, %48 : vector<512x32xf32>
    %51 = vector.extract_strided_slice %28 {offsets = [0, 64], sizes = [512, 32], strides = [1, 1]} : vector<512x96xf32> to vector<512x32xf32>
    %52 = vector.extract_strided_slice %30 {offsets = [0, 64], sizes = [512, 32], strides = [1, 1]} : vector<512x96xf32> to vector<512x32xf32>
    %53 = arith.mulf %40, %52 : vector<512x32xf32>
    %54 = arith.addf %51, %53 : vector<512x32xf32>
    %55 = math.tanh %54 : vector<512x32xf32>
    %c0_20 = arith.constant 0 : index
    %c0_21 = arith.constant 0 : index
    %56 = vector.load %arg3[%c0_20, %c0_21] : memref<512x32xf32, #tpu.memory_space<vmem>>, vector<512x32xf32>
    %57 = arith.subf %55, %56 : vector<512x32xf32>
    %58 = arith.mulf %50, %57 : vector<512x32xf32>
    %59 = arith.addf %56, %58 : vector<512x32xf32>
    %c0_22 = arith.constant 0 : index
    %c0_23 = arith.constant 0 : index
    %60 = vector.load %arg7[%c0_22, %c0_23] : memref<512x32xf32, #tpu.memory_space<vmem>>, vector<512x32xf32>
    tpu.vector_store %arg7[%c0_22, %c0_23], %59 {strides = array<i32>} : memref<512x32xf32, #tpu.memory_space<vmem>>, vector<512x32xf32>,
    return
  }
  func.func @transform_0(%arg0: i32) -> (i32, i32, i32, i32) {
    %c0_i32 = arith.constant 0 : i32
    %c0_i32_0 = arith.constant 0 : i32
    %c0_i32_1 = arith.constant 0 : i32
    %c0_i32_2 = arith.constant 0 : i32
    return %arg0, %c0_i32, %c0_i32_0, %c0_i32_1 : i32, i32, i32, i32
  }
  func.func @transform_1(%arg0: i32) -> (i32, i32, i32, i32) {
    %c0_i32 = arith.constant 0 : i32
    %c0_i32_0 = arith.constant 0 : i32
    %c0_i32_1 = arith.constant 0 : i32
    %c0_i32_2 = arith.constant 0 : i32
    return %arg0, %c0_i32, %c0_i32_0, %c0_i32_1 : i32, i32, i32, i32
  }
  func.func @transform_2(%arg0: i32) -> (i32, i32) {
    %c0_i32 = arith.constant 0 : i32
    %c0_i32_0 = arith.constant 0 : i32
    return %arg0, %c0_i32 : i32, i32
  }
  func.func @transform_3(%arg0: i32) -> (i32, i32) {
    %c0_i32 = arith.constant 0 : i32
    %c0_i32_0 = arith.constant 0 : i32
    %c0_i32_1 = arith.constant 0 : i32
    return %c0_i32, %c0_i32_0 : i32, i32
  }
  func.func @transform_4(%arg0: i32) -> (i32, i32) {
    %c0_i32 = arith.constant 0 : i32
    %c0_i32_0 = arith.constant 0 : i32
    %c0_i32_1 = arith.constant 0 : i32
    return %c0_i32, %c0_i32_0 : i32, i32
  }
  func.func @transform_5(%arg0: i32) -> (i32, i32) {
    %c0_i32 = arith.constant 0 : i32
    %c0_i32_0 = arith.constant 0 : i32
    %c0_i32_1 = arith.constant 0 : i32
    return %c0_i32, %c0_i32_0 : i32, i32
  }
  func.func @transform_6(%arg0: i32) -> (i32, i32) {
    %c0_i32 = arith.constant 0 : i32
    %c0_i32_0 = arith.constant 0 : i32
    return %arg0, %c0_i32 : i32, i32
  }
}

</mosaic_0001>

<llo_original>
// kernel: tpu_custom_call.1
$region0: #{tpu_custom_call.1}
  #allocation0 [shape = 'u32[]', space=smem, size = 0x4, offset = 0x4, fixed_abs, tag = 'smem constant byte address 0x4 - core index']
  #allocation1 [shape = 'u32[72,128]{1,0:T(1,128)}', space=vmem, size = 0x9000, scoped, tag = 'internal scratch']
  %s0 = inlined_call_operand.vmem [shape: bf16[2,18,18,4], index: 0, kind: input, shape index: {}]
  %s1 = inlined_call_operand.vmem [shape: bf16[2,18,18,32], index: 1, kind: input, shape index: {}]
  %s2 = inlined_call_operand.vmem [shape: f32[512,32], index: 2, kind: input, shape index: {}]
  %s3 = inlined_call_operand.vmem [shape: bf16[36,96], index: 3, kind: input, shape index: {}]
  %s4 = inlined_call_operand.vmem [shape: f32[1,96], index: 4, kind: input, shape index: {}]
  %s5 = inlined_call_operand.vmem [shape: bf16[288,96], index: 5, kind: input, shape index: {}]
  %s6 = inlined_call_operand.vmem [shape: f32[512,32], index: 6, kind: output, shape index: {}]
  %s7 = sld [smem:[#allocation0]]
  $region34: #{tpu_custom_call.1} parent=0
    _
  %s9 = ssub.s32 1, %s7
  %s10 = scalar_select 0, %s9, %s7
  // Predicated region
  $region2: #{tpu_custom_call.1} parent=0 // pred_check
    _
  $region3: #{tpu_custom_call.1} parent=0 // pred_check_branch
    %12 = sbr.rel (0) target = $region5
  $region4: #{tpu_custom_call.1} parent=0 // pred_region
    _
  $region5: #{tpu_custom_call.1} parent=0 // pred_fallthru
    _
  // Predicated region
  $region6: #{tpu_custom_call.1} parent=0 // pred_check
    _
  $region7: #{tpu_custom_call.1} parent=0 // pred_check_branch
    %14 = sbr.rel (0) target = $region9
  $region8: #{tpu_custom_call.1} parent=0 // pred_region
    _
  $region9: #{tpu_custom_call.1} parent=0 // pred_fallthru
    _
  // Predicated region
  $region10: #{tpu_custom_call.1} parent=0 // pred_check
    _
  $region11: #{tpu_custom_call.1} parent=0 // pred_check_branch
    %16 = sbr.rel (0) target = $region13
  $region12: #{tpu_custom_call.1} parent=0 // pred_region
    _
  $region13: #{tpu_custom_call.1} parent=0 // pred_fallthru
    _
  // Predicated region
  $region14: #{tpu_custom_call.1} parent=0 // pred_check
    _
  $region15: #{tpu_custom_call.1} parent=0 // pred_check_branch
    %18 = sbr.rel (0) target = $region17
  $region16: #{tpu_custom_call.1} parent=0 // pred_region
    _
  $region17: #{tpu_custom_call.1} parent=0 // pred_fallthru
    _
  // Predicated region
  $region18: #{tpu_custom_call.1} parent=0 // pred_check
    _
  $region19: #{tpu_custom_call.1} parent=0 // pred_check_branch
    %20 = sbr.rel (0) target = $region21
  $region20: #{tpu_custom_call.1} parent=0 // pred_region
    _
  $region21: #{tpu_custom_call.1} parent=0 // pred_fallthru
    _
  // Predicated region
  $region22: #{tpu_custom_call.1} parent=0 // pred_check
    _
  $region23: #{tpu_custom_call.1} parent=0 // pred_check_branch
    %22 = sbr.rel (0) target = $region25
  $region24: #{tpu_custom_call.1} parent=0 // pred_region
    _
  $region25: #{tpu_custom_call.1} parent=0 // pred_fallthru
    _
  %v24 = vld [vmem:[%s0] sm:$0xf]
  %v25 = vld [vmem:[%s0 + $0x4] sm:$0xf]
  %v26 = vld [vmem:[%s0 + $0x8] sm:$0x1]
  %v27 = vld [vmem:[%s0 + $0xc] sm:$0xf]
  %v28 = vld [vmem:[%s0 + $0x10] sm:$0xf]
  %v29 = vld [vmem:[%s0 + $0x14] sm:$0x1]
  %v30 = vld [vmem:[%s0 + $0x18] sm:$0xf]
  %v31 = vld [vmem:[%s0 + $0x1c] sm:$0xf]
  %v32 = vld [vmem:[%s0 + $0x20] sm:$0x1]
  %v33 = vld [vmem:[%s0 + $0x24] sm:$0xf]
  %v34 = vld [vmem:[%s0 + $0x28] sm:$0xf]
  %v35 = vld [vmem:[%s0 + $0x2c] sm:$0x1]
  %v36 = vld [vmem:[%s0 + $0x30] sm:$0xf]
  %v37 = vld [vmem:[%s0 + $0x34] sm:$0xf]
  %v38 = vld [vmem:[%s0 + $0x38] sm:$0x1]
  %v39 = vld [vmem:[%s0 + $0x3c] sm:$0xf]
  %v40 = vld [vmem:[%s0 + $0x40] sm:$0xf]
  %v41 = vld [vmem:[%s0 + $0x44] sm:$0x1]
  %v42 = vld [vmem:[%s0 + $0x48] sm:$0xf]
  %v43 = vld [vmem:[%s0 + $0x4c] sm:$0xf]
  %v44 = vld [vmem:[%s0 + $0x50] sm:$0x1]
  %v45 = vld [vmem:[%s0 + $0x54] sm:$0xf]
  %v46 = vld [vmem:[%s0 + $0x58] sm:$0xf]
  %v47 = vld [vmem:[%s0 + $0x5c] sm:$0x1]
  %v48 = vld [vmem:[%s0 + $0x60] sm:$0xf]
  %v49 = vld [vmem:[%s0 + $0x64] sm:$0xf]
  %v50 = vld [vmem:[%s0 + $0x68] sm:$0x1]
  %v51 = vld [vmem:[%s0 + $0x6c] sm:$0xf]
  %v52 = vld [vmem:[%s0 + $0x70] sm:$0xf]
  %v53 = vld [vmem:[%s0 + $0x74] sm:$0x1]
  %v54 = vld [vmem:[%s0 + $0x78] sm:$0xf]
  %v55 = vld [vmem:[%s0 + $0x7c] sm:$0xf]
  %v56 = vld [vmem:[%s0 + $0x80] sm:$0x1]
  %v57 = vld [vmem:[%s0 + $0x84] sm:$0xf]
  %v58 = vld [vmem:[%s0 + $0x88] sm:$0xf]
  %v59 = vld [vmem:[%s0 + $0x8c] sm:$0x1]
  %v60 = vld [vmem:[%s0 + $0x90] sm:$0xf]
  %v61 = vld [vmem:[%s0 + $0x94] sm:$0xf]
  %v62 = vld [vmem:[%s0 + $0x98] sm:$0x1]
  %v63 = vld [vmem:[%s0 + $0x9c] sm:$0xf]
  %v64 = vld [vmem:[%s0 + $0xa0] sm:$0xf]
  %v65 = vld [vmem:[%s0 + $0xa4] sm:$0x1]
  %v66 = vld [vmem:[%s0 + $0xa8] sm:$0xf]
  %v67 = vld [vmem:[%s0 + $0xac] sm:$0xf]
  %v68 = vld [vmem:[%s0 + $0xb0] sm:$0x1]
  %v69 = vld [vmem:[%s0 + $0xb4] sm:$0xf]
  %v70 = vld [vmem:[%s0 + $0xb8] sm:$0xf]
  %v71 = vld [vmem:[%s0 + $0xbc] sm:$0x1]
  %v72 = vld [vmem:[%s0 + $0xc0] sm:$0xf]
  %v73 = vld [vmem:[%s0 + $0xc4] sm:$0xf]
  %v74 = vld [vmem:[%s0 + $0xc8] sm:$0x1]
  %v75 = vld [vmem:[%s0 + $0xcc] sm:$0xf]
  %v76 = vld [vmem:[%s0 + $0xd0] sm:$0xf]
  %v77 = vld [vmem:[%s0 + $0xd4] sm:$0x1]
  %v78 = vld [vmem:[%s0 + $0xd8] sm:$0xf]
  %v79 = vld [vmem:[%s0 + $0xdc] sm:$0xf]
  %v80 = vld [vmem:[%s0 + $0xe0] sm:$0x1]
  %v81 = vld [vmem:[%s0 + $0xe4] sm:$0xf]
  %v82 = vld [vmem:[%s0 + $0xe8] sm:$0xf]
  %v83 = vld [vmem:[%s0 + $0xec] sm:$0x1]
  %v84 = vld [vmem:[%s0 + $0xf0] sm:$0xf]
  %v85 = vld [vmem:[%s0 + $0xf4] sm:$0xf]
  %v86 = vld [vmem:[%s0 + $0xf8] sm:$0x1]
  %v87 = vld [vmem:[%s0 + $0xfc] sm:$0xf]
  %v88 = vld [vmem:[%s0 + $0x100] sm:$0xf]
  %v89 = vld [vmem:[%s0 + $0x104] sm:$0x1]
  %v90 = vld [vmem:[%s0 + $0x108] sm:$0xf]
  %v91 = vld [vmem:[%s0 + $0x10c] sm:$0xf]
  %v92 = vld [vmem:[%s0 + $0x110] sm:$0x1]
  %v93 = vld [vmem:[%s0 + $0x114] sm:$0xf]
  %v94 = vld [vmem:[%s0 + $0x118] sm:$0xf]
  %v95 = vld [vmem:[%s0 + $0x11c] sm:$0x1]
  %v96 = vld [vmem:[%s0 + $0x120] sm:$0xf]
  %v97 = vld [vmem:[%s0 + $0x124] sm:$0xf]
  %v98 = vld [vmem:[%s0 + $0x128] sm:$0x1]
  %v99 = vld [vmem:[%s0 + $0x12c] sm:$0xf]
  %v100 = vld [vmem:[%s0 + $0x130] sm:$0xf]
  %v101 = vld [vmem:[%s0 + $0x134] sm:$0x1]
  %v102 = vld [vmem:[%s0 + $0x138] sm:$0xf]
  %v103 = vld [vmem:[%s0 + $0x13c] sm:$0xf]
  %v104 = vld [vmem:[%s0 + $0x140] sm:$0x1]
  %v105 = vld [vmem:[%s0 + $0x144] sm:$0xf]
  %v106 = vld [vmem:[%s0 + $0x148] sm:$0xf]
  %v107 = vld [vmem:[%s0 + $0x14c] sm:$0x1]
  %v108 = vld [vmem:[%s0 + $0x150] sm:$0xf]
  %v109 = vld [vmem:[%s0 + $0x154] sm:$0xf]
  %v110 = vld [vmem:[%s0 + $0x158] sm:$0x1]
  %v111 = vld [vmem:[%s0 + $0x15c] sm:$0xf]
  %v112 = vld [vmem:[%s0 + $0x160] sm:$0xf]
  %v113 = vld [vmem:[%s0 + $0x164] sm:$0x1]
  %v114 = vld [vmem:[%s0 + $0x168] sm:$0xf]
  %v115 = vld [vmem:[%s0 + $0x16c] sm:$0xf]
  %v116 = vld [vmem:[%s0 + $0x170] sm:$0x1]
  %v117 = vld [vmem:[%s0 + $0x174] sm:$0xf]
  %v118 = vld [vmem:[%s0 + $0x178] sm:$0xf]
  %v119 = vld [vmem:[%s0 + $0x17c] sm:$0x1]
  %v120 = vld [vmem:[%s0 + $0x180] sm:$0xf]
  %v121 = vld [vmem:[%s0 + $0x184] sm:$0xf]
  %v122 = vld [vmem:[%s0 + $0x188] sm:$0x1]
  %v123 = vld [vmem:[%s0 + $0x18c] sm:$0xf]
  %v124 = vld [vmem:[%s0 + $0x190] sm:$0xf]
  %v125 = vld [vmem:[%s0 + $0x194] sm:$0x1]
  %v126 = vld [vmem:[%s0 + $0x198] sm:$0xf]
  %v127 = vld [vmem:[%s0 + $0x19c] sm:$0xf]
  %v128 = vld [vmem:[%s0 + $0x1a0] sm:$0x1]
  %v129 = vld [vmem:[%s0 + $0x1a4] sm:$0xf]
  %v130 = vld [vmem:[%s0 + $0x1a8] sm:$0xf]
  %v131 = vld [vmem:[%s0 + $0x1ac] sm:$0x1]
  %v132 = vld [vmem:[%s1] sm:$0xf]
  %v133 = vld [vmem:[%s1 + $0x4] sm:$0xf]
  %v134 = vld [vmem:[%s1 + $0x8] sm:$0x1]
  %v135 = vld [vmem:[%s1 + $0xc] sm:$0xf]
  %v136 = vld [vmem:[%s1 + $0x10] sm:$0xf]
  %v137 = vld [vmem:[%s1 + $0x14] sm:$0x1]
  %v138 = vld [vmem:[%s1 + $0x18] sm:$0xf]
  %v139 = vld [vmem:[%s1 + $0x1c] sm:$0xf]
  %v140 = vld [vmem:[%s1 + $0x20] sm:$0x1]
  %v141 = vld [vmem:[%s1 + $0x24] sm:$0xf]
  %v142 = vld [vmem:[%s1 + $0x28] sm:$0xf]
  %v143 = vld [vmem:[%s1 + $0x2c] sm:$0x1]
  %v144 = vld [vmem:[%s1 + $0x30] sm:$0xf]
  %v145 = vld [vmem:[%s1 + $0x34] sm:$0xf]
  %v146 = vld [vmem:[%s1 + $0x38] sm:$0x1]
  %v147 = vld [vmem:[%s1 + $0x3c] sm:$0xf]
  %v148 = vld [vmem:[%s1 + $0x40] sm:$0xf]
  %v149 = vld [vmem:[%s1 + $0x44] sm:$0x1]
  %v150 = vld [vmem:[%s1 + $0x48] sm:$0xf]
  %v151 = vld [vmem:[%s1 + $0x4c] sm:$0xf]
  %v152 = vld [vmem:[%s1 + $0x50] sm:$0x1]
  %v153 = vld [vmem:[%s1 + $0x54] sm:$0xf]
  %v154 = vld [vmem:[%s1 + $0x58] sm:$0xf]
  %v155 = vld [vmem:[%s1 + $0x5c] sm:$0x1]
  %v156 = vld [vmem:[%s1 + $0x60] sm:$0xf]
  %v157 = vld [vmem:[%s1 + $0x64] sm:$0xf]
  %v158 = vld [vmem:[%s1 + $0x68] sm:$0x1]
  %v159 = vld [vmem:[%s1 + $0x6c] sm:$0xf]
  %v160 = vld [vmem:[%s1 + $0x70] sm:$0xf]
  %v161 = vld [vmem:[%s1 + $0x74] sm:$0x1]
  %v162 = vld [vmem:[%s1 + $0x78] sm:$0xf]
  %v163 = vld [vmem:[%s1 + $0x7c] sm:$0xf]
  %v164 = vld [vmem:[%s1 + $0x80] sm:$0x1]
  %v165 = vld [vmem:[%s1 + $0x84] sm:$0xf]
  %v166 = vld [vmem:[%s1 + $0x88] sm:$0xf]
  %v167 = vld [vmem:[%s1 + $0x8c] sm:$0x1]
  %v168 = vld [vmem:[%s1 + $0x90] sm:$0xf]
  %v169 = vld [vmem:[%s1 + $0x94] sm:$0xf]
  %v170 = vld [vmem:[%s1 + $0x98] sm:$0x1]
  %v171 = vld [vmem:[%s1 + $0x9c] sm:$0xf]
  %v172 = vld [vmem:[%s1 + $0xa0] sm:$0xf]
  %v173 = vld [vmem:[%s1 + $0xa4] sm:$0x1]
  %v174 = vld [vmem:[%s1 + $0xa8] sm:$0xf]
  %v175 = vld [vmem:[%s1 + $0xac] sm:$0xf]
  %v176 = vld [vmem:[%s1 + $0xb0] sm:$0x1]
  %v177 = vld [vmem:[%s1 + $0xb4] sm:$0xf]
  %v178 = vld [vmem:[%s1 + $0xb8] sm:$0xf]
  %v179 = vld [vmem:[%s1 + $0xbc] sm:$0x1]
  %v180 = vld [vmem:[%s1 + $0xc0] sm:$0xf]
  %v181 = vld [vmem:[%s1 + $0xc4] sm:$0xf]
  %v182 = vld [vmem:[%s1 + $0xc8] sm:$0x1]
  %v183 = vld [vmem:[%s1 + $0xcc] sm:$0xf]
  %v184 = vld [vmem:[%s1 + $0xd0] sm:$0xf]
  %v185 = vld [vmem:[%s1 + $0xd4] sm:$0x1]
  %v186 = vld [vmem:[%s1 + $0xd8] sm:$0xf]
  %v187 = vld [vmem:[%s1 + $0xdc] sm:$0xf]
  %v188 = vld [vmem:[%s1 + $0xe0] sm:$0x1]
  %v189 = vld [vmem:[%s1 + $0xe4] sm:$0xf]
  %v190 = vld [vmem:[%s1 + $0xe8] sm:$0xf]
  %v191 = vld [vmem:[%s1 + $0xec] sm:$0x1]
  %v192 = vld [vmem:[%s1 + $0xf0] sm:$0xf]
  %v193 = vld [vmem:[%s1 + $0xf4] sm:$0xf]
  %v194 = vld [vmem:[%s1 + $0xf8] sm:$0x1]
  %v195 = vld [vmem:[%s1 + $0xfc] sm:$0xf]
  %v196 = vld [vmem:[%s1 + $0x100] sm:$0xf]
  %v197 = vld [vmem:[%s1 + $0x104] sm:$0x1]
  %v198 = vld [vmem:[%s1 + $0x108] sm:$0xf]
  %v199 = vld [vmem:[%s1 + $0x10c] sm:$0xf]
  %v200 = vld [vmem:[%s1 + $0x110] sm:$0x1]
  %v201 = vld [vmem:[%s1 + $0x114] sm:$0xf]
  %v202 = vld [vmem:[%s1 + $0x118] sm:$0xf]
  %v203 = vld [vmem:[%s1 + $0x11c] sm:$0x1]
  %v204 = vld [vmem:[%s1 + $0x120] sm:$0xf]
  %v205 = vld [vmem:[%s1 + $0x124] sm:$0xf]
  %v206 = vld [vmem:[%s1 + $0x128] sm:$0x1]
  %v207 = vld [vmem:[%s1 + $0x12c] sm:$0xf]
  %v208 = vld [vmem:[%s1 + $0x130] sm:$0xf]
  %v209 = vld [vmem:[%s1 + $0x134] sm:$0x1]
  %v210 = vld [vmem:[%s1 + $0x138] sm:$0xf]
  %v211 = vld [vmem:[%s1 + $0x13c] sm:$0xf]
  %v212 = vld [vmem:[%s1 + $0x140] sm:$0x1]
  %v213 = vld [vmem:[%s1 + $0x144] sm:$0xf]
  %v214 = vld [vmem:[%s1 + $0x148] sm:$0xf]
  %v215 = vld [vmem:[%s1 + $0x14c] sm:$0x1]
  %v216 = vld [vmem:[%s1 + $0x150] sm:$0xf]
  %v217 = vld [vmem:[%s1 + $0x154] sm:$0xf]
  %v218 = vld [vmem:[%s1 + $0x158] sm:$0x1]
  %v219 = vld [vmem:[%s1 + $0x15c] sm:$0xf]
  %v220 = vld [vmem:[%s1 + $0x160] sm:$0xf]
  %v221 = vld [vmem:[%s1 + $0x164] sm:$0x1]
  %v222 = vld [vmem:[%s1 + $0x168] sm:$0xf]
  %v223 = vld [vmem:[%s1 + $0x16c] sm:$0xf]
  %v224 = vld [vmem:[%s1 + $0x170] sm:$0x1]
  %v225 = vld [vmem:[%s1 + $0x174] sm:$0xf]
  %v226 = vld [vmem:[%s1 + $0x178] sm:$0xf]
  %v227 = vld [vmem:[%s1 + $0x17c] sm:$0x1]
  %v228 = vld [vmem:[%s1 + $0x180] sm:$0xf]
  %v229 = vld [vmem:[%s1 + $0x184] sm:$0xf]
  %v230 = vld [vmem:[%s1 + $0x188] sm:$0x1]
  %v231 = vld [vmem:[%s1 + $0x18c] sm:$0xf]
  %v232 = vld [vmem:[%s1 + $0x190] sm:$0xf]
  %v233 = vld [vmem:[%s1 + $0x194] sm:$0x1]
  %v234 = vld [vmem:[%s1 + $0x198] sm:$0xf]
  %v235 = vld [vmem:[%s1 + $0x19c] sm:$0xf]
  %v236 = vld [vmem:[%s1 + $0x1a0] sm:$0x1]
  %v237 = vld [vmem:[%s1 + $0x1a4] sm:$0xf]
  %v238 = vld [vmem:[%s1 + $0x1a8] sm:$0xf]
  %v239 = vld [vmem:[%s1 + $0x1ac] sm:$0x1]
  %v304 = vunpack.c.l.b16 %v24
  %v305 = vunpack.c.l.b16 %v25
  %v306 = vunpack.c.l.b16 %v27
  %v307 = vunpack.c.l.b16 %v28
  %v308 = vunpack.c.l.b16 %v30
  %v309 = vunpack.c.l.b16 %v31
  %v310 = vunpack.c.l.b16 %v33
  %v311 = vunpack.c.l.b16 %v34
  %v312 = vunpack.c.l.b16 %v36
  %v313 = vunpack.c.l.b16 %v37
  %v314 = vunpack.c.l.b16 %v39
  %v315 = vunpack.c.l.b16 %v40
  %v316 = vunpack.c.l.b16 %v42
  %v317 = vunpack.c.l.b16 %v43
  %v318 = vunpack.c.l.b16 %v45
  %v319 = vunpack.c.l.b16 %v46
  %v320 = vunpack.c.l.b16 %v48
  %v321 = vunpack.c.l.b16 %v49
  %v322 = vunpack.c.l.b16 %v51
  %v323 = vunpack.c.l.b16 %v52
  %v324 = vunpack.c.l.b16 %v54
  %v325 = vunpack.c.l.b16 %v55
  %v326 = vunpack.c.l.b16 %v57
  %v327 = vunpack.c.l.b16 %v58
  %v328 = vunpack.c.l.b16 %v60
  %v329 = vunpack.c.l.b16 %v61
  %v330 = vunpack.c.l.b16 %v63
  %v331 = vunpack.c.l.b16 %v64
  %v332 = vunpack.c.l.b16 %v66
  %v333 = vunpack.c.l.b16 %v67
  %v334 = vunpack.c.l.b16 %v69
  %v335 = vunpack.c.l.b16 %v70
  %v336 = vunpack.c.l.b16 %v78
  %v337 = vunpack.c.l.b16 %v79
  %v338 = vunpack.c.l.b16 %v81
  %v339 = vunpack.c.l.b16 %v82
  %v340 = vunpack.c.l.b16 %v84
  %v341 = vunpack.c.l.b16 %v85
  %v342 = vunpack.c.l.b16 %v87
  %v343 = vunpack.c.l.b16 %v88
  %v344 = vunpack.c.l.b16 %v90
  %v345 = vunpack.c.l.b16 %v91
  %v346 = vunpack.c.l.b16 %v93
  %v347 = vunpack.c.l.b16 %v94
  %v348 = vunpack.c.l.b16 %v96
  %v349 = vunpack.c.l.b16 %v97
  %v350 = vunpack.c.l.b16 %v99
  %v351 = vunpack.c.l.b16 %v100
  %v352 = vunpack.c.l.b16 %v102
  %v353 = vunpack.c.l.b16 %v103
  %v354 = vunpack.c.l.b16 %v105
  %v355 = vunpack.c.l.b16 %v106
  %v356 = vunpack.c.l.b16 %v108
  %v357 = vunpack.c.l.b16 %v109
  %v358 = vunpack.c.l.b16 %v111
  %v359 = vunpack.c.l.b16 %v112
  %v360 = vunpack.c.l.b16 %v114
  %v361 = vunpack.c.l.b16 %v115
  %v362 = vunpack.c.l.b16 %v117
  %v363 = vunpack.c.l.b16 %v118
  %v364 = vunpack.c.l.b16 %v120
  %v365 = vunpack.c.l.b16 %v121
  %v366 = vunpack.c.l.b16 %v123
  %v367 = vunpack.c.l.b16 %v124
  %v368 = vpack.c.b16 %v305, %v304
  %v369 = vpack.c.b16 %v307, %v306
  %v370 = vpack.c.b16 %v309, %v308
  %v371 = vpack.c.b16 %v311, %v310
  %v372 = vpack.c.b16 %v313, %v312
  %v373 = vpack.c.b16 %v315, %v314
  %v374 = vpack.c.b16 %v317, %v316
  %v375 = vpack.c.b16 %v319, %v318
  %v376 = vpack.c.b16 %v321, %v320
  %v377 = vpack.c.b16 %v323, %v322
  %v378 = vpack.c.b16 %v325, %v324
  %v379 = vpack.c.b16 %v327, %v326
  %v380 = vpack.c.b16 %v329, %v328
  %v381 = vpack.c.b16 %v331, %v330
  %v382 = vpack.c.b16 %v333, %v332
  %v383 = vpack.c.b16 %v335, %v334
  %v384 = vpack.c.b16 %v337, %v336
  %v385 = vpack.c.b16 %v339, %v338
  %v386 = vpack.c.b16 %v341, %v340
  %v387 = vpack.c.b16 %v343, %v342
  %v388 = vpack.c.b16 %v345, %v344
  %v389 = vpack.c.b16 %v347, %v346
  %v390 = vpack.c.b16 %v349, %v348
  %v391 = vpack.c.b16 %v351, %v350
  %v392 = vpack.c.b16 %v353, %v352
  %v393 = vpack.c.b16 %v355, %v354
  %v394 = vpack.c.b16 %v357, %v356
  %v395 = vpack.c.b16 %v359, %v358
  %v396 = vpack.c.b16 %v361, %v360
  %v397 = vpack.c.b16 %v363, %v362
  %v398 = vpack.c.b16 %v365, %v364
  %v399 = vpack.c.b16 %v367, %v366
  %v432 = vunpack.c.l.b16 %v26
  %v433 = vunpack.c.l.b16 %v29
  %v434 = vunpack.c.l.b16 %v32
  %v435 = vunpack.c.l.b16 %v35
  %v436 = vunpack.c.l.b16 %v38
  %v437 = vunpack.c.l.b16 %v41
  %v438 = vunpack.c.l.b16 %v44
  %v439 = vunpack.c.l.b16 %v47
  %v440 = vunpack.c.l.b16 %v50
  %v441 = vunpack.c.l.b16 %v53
  %v442 = vunpack.c.l.b16 %v56
  %v443 = vunpack.c.l.b16 %v59
  %v444 = vunpack.c.l.b16 %v62
  %v445 = vunpack.c.l.b16 %v65
  %v446 = vunpack.c.l.b16 %v68
  %v447 = vunpack.c.l.b16 %v71
  %v448 = vunpack.c.l.b16 %v80
  %v449 = vunpack.c.l.b16 %v83
  %v450 = vunpack.c.l.b16 %v86
  %v451 = vunpack.c.l.b16 %v89
  %v452 = vunpack.c.l.b16 %v92
  %v453 = vunpack.c.l.b16 %v95
  %v454 = vunpack.c.l.b16 %v98
  %v455 = vunpack.c.l.b16 %v101
  %v456 = vunpack.c.l.b16 %v104
  %v457 = vunpack.c.l.b16 %v107
  %v458 = vunpack.c.l.b16 %v110
  %v459 = vunpack.c.l.b16 %v113
  %v460 = vunpack.c.l.b16 %v116
  %v461 = vunpack.c.l.b16 %v119
  %v462 = vunpack.c.l.b16 %v122
  %v463 = vunpack.c.l.b16 %v125
  %v464 = vpack.c.b16 %v432, %v432
  %v465 = vpack.c.b16 %v433, %v433
  %v466 = vpack.c.b16 %v434, %v434
  %v467 = vpack.c.b16 %v435, %v435
  %v468 = vpack.c.b16 %v436, %v436
  %v469 = vpack.c.b16 %v437, %v437
  %v470 = vpack.c.b16 %v438, %v438
  %v471 = vpack.c.b16 %v439, %v439
  %v472 = vpack.c.b16 %v440, %v440
  %v473 = vpack.c.b16 %v441, %v441
  %v474 = vpack.c.b16 %v442, %v442
  %v475 = vpack.c.b16 %v443, %v443
  %v476 = vpack.c.b16 %v444, %v444
  %v477 = vpack.c.b16 %v445, %v445
  %v478 = vpack.c.b16 %v446, %v446
  %v479 = vpack.c.b16 %v447, %v447
  %v480 = vpack.c.b16 %v448, %v448
  %v481 = vpack.c.b16 %v449, %v449
  %v482 = vpack.c.b16 %v450, %v450
  %v483 = vpack.c.b16 %v451, %v451
  %v484 = vpack.c.b16 %v452, %v452
  %v485 = vpack.c.b16 %v453, %v453
  %v486 = vpack.c.b16 %v454, %v454
  %v487 = vpack.c.b16 %v455, %v455
  %v488 = vpack.c.b16 %v456, %v456
  %v489 = vpack.c.b16 %v457, %v457
  %v490 = vpack.c.b16 %v458, %v458
  %v491 = vpack.c.b16 %v459, %v459
  %v492 = vpack.c.b16 %v460, %v460
  %v493 = vpack.c.b16 %v461, %v461
  %v494 = vpack.c.b16 %v462, %v462
  %v495 = vpack.c.b16 %v463, %v463
  %vm496 = vsmask.f32 7424
  %v498 = vshrl.u32 %v368, 16
  %v500 = vshll.u32 %v368, 16
  %v502 = vrot.slane %v500, 1
  %v503 = vor.u32 %v498, %v502
  %v505 = vshll.u32 %v464, 16
  %v507 = vrot.slane %v505, 1
  %v508 = vsel %vm496, %v503, %v507
  %v510 = vshrl.u32 %v369, 16
  %v512 = vshll.u32 %v369, 16
  %v514 = vrot.slane %v512, 1
  %v515 = vor.u32 %v510, %v514
  %v517 = vshll.u32 %v465, 16
  %v519 = vrot.slane %v517, 1
  %v520 = vsel %vm496, %v515, %v519
  %v522 = vshrl.u32 %v370, 16
  %v524 = vshll.u32 %v370, 16
  %v526 = vrot.slane %v524, 1
  %v527 = vor.u32 %v522, %v526
  %v529 = vshll.u32 %v466, 16
  %v531 = vrot.slane %v529, 1
  %v532 = vsel %vm496, %v527, %v531
  %v534 = vshrl.u32 %v371, 16
  %v536 = vshll.u32 %v371, 16
  %v538 = vrot.slane %v536, 1
  %v539 = vor.u32 %v534, %v538
  %v541 = vshll.u32 %v467, 16
  %v543 = vrot.slane %v541, 1
  %v544 = vsel %vm496, %v539, %v543
  %v546 = vshrl.u32 %v372, 16
  %v548 = vshll.u32 %v372, 16
  %v550 = vrot.slane %v548, 1
  %v551 = vor.u32 %v546, %v550
  %v553 = vshll.u32 %v468, 16
  %v555 = vrot.slane %v553, 1
  %v556 = vsel %vm496, %v551, %v555
  %v558 = vshrl.u32 %v373, 16
  %v560 = vshll.u32 %v373, 16
  %v562 = vrot.slane %v560, 1
  %v563 = vor.u32 %v558, %v562
  %v565 = vshll.u32 %v469, 16
  %v567 = vrot.slane %v565, 1
  %v568 = vsel %vm496, %v563, %v567
  %v570 = vshrl.u32 %v374, 16
  %v572 = vshll.u32 %v374, 16
  %v574 = vrot.slane %v572, 1
  %v575 = vor.u32 %v570, %v574
  %v577 = vshll.u32 %v470, 16
  %v579 = vrot.slane %v577, 1
  %v580 = vsel %vm496, %v575, %v579
  %v582 = vshrl.u32 %v375, 16
  %v584 = vshll.u32 %v375, 16
  %v586 = vrot.slane %v584, 1
  %v587 = vor.u32 %v582, %v586
  %v589 = vshll.u32 %v471, 16
  %v591 = vrot.slane %v589, 1
  %v592 = vsel %vm496, %v587, %v591
  %v594 = vshrl.u32 %v376, 16
  %v596 = vshll.u32 %v376, 16
  %v598 = vrot.slane %v596, 1
  %v599 = vor.u32 %v594, %v598
  %v601 = vshll.u32 %v472, 16
  %v603 = vrot.slane %v601, 1
  %v604 = vsel %vm496, %v599, %v603
  %v606 = vshrl.u32 %v377, 16
  %v608 = vshll.u32 %v377, 16
  %v610 = vrot.slane %v608, 1
  %v611 = vor.u32 %v606, %v610
  %v613 = vshll.u32 %v473, 16
  %v615 = vrot.slane %v613, 1
  %v616 = vsel %vm496, %v611, %v615
  %v618 = vshrl.u32 %v378, 16
  %v620 = vshll.u32 %v378, 16
  %v622 = vrot.slane %v620, 1
  %v623 = vor.u32 %v618, %v622
  %v625 = vshll.u32 %v474, 16
  %v627 = vrot.slane %v625, 1
  %v628 = vsel %vm496, %v623, %v627
  %v630 = vshrl.u32 %v379, 16
  %v632 = vshll.u32 %v379, 16
  %v634 = vrot.slane %v632, 1
  %v635 = vor.u32 %v630, %v634
  %v637 = vshll.u32 %v475, 16
  %v639 = vrot.slane %v637, 1
  %v640 = vsel %vm496, %v635, %v639
  %v642 = vshrl.u32 %v380, 16
  %v644 = vshll.u32 %v380, 16
  %v646 = vrot.slane %v644, 1
  %v647 = vor.u32 %v642, %v646
  %v649 = vshll.u32 %v476, 16
  %v651 = vrot.slane %v649, 1
  %v652 = vsel %vm496, %v647, %v651
  %v654 = vshrl.u32 %v381, 16
  %v656 = vshll.u32 %v381, 16
  %v658 = vrot.slane %v656, 1
  %v659 = vor.u32 %v654, %v658
  %v661 = vshll.u32 %v477, 16
  %v663 = vrot.slane %v661, 1
  %v664 = vsel %vm496, %v659, %v663
  %v666 = vshrl.u32 %v382, 16
  %v668 = vshll.u32 %v382, 16
  %v670 = vrot.slane %v668, 1
  %v671 = vor.u32 %v666, %v670
  %v673 = vshll.u32 %v478, 16
  %v675 = vrot.slane %v673, 1
  %v676 = vsel %vm496, %v671, %v675
  %v678 = vshrl.u32 %v383, 16
  %v680 = vshll.u32 %v383, 16
  %v682 = vrot.slane %v680, 1
  %v683 = vor.u32 %v678, %v682
  %v685 = vshll.u32 %v479, 16
  %v687 = vrot.slane %v685, 1
  %v688 = vsel %vm496, %v683, %v687
  %v690 = vshrl.u32 %v384, 16
  %v692 = vshll.u32 %v384, 16
  %v694 = vrot.slane %v692, 1
  %v695 = vor.u32 %v690, %v694
  %v697 = vshll.u32 %v480, 16
  %v699 = vrot.slane %v697, 1
  %v700 = vsel %vm496, %v695, %v699
  %v702 = vshrl.u32 %v385, 16
  %v704 = vshll.u32 %v385, 16
  %v706 = vrot.slane %v704, 1
  %v707 = vor.u32 %v702, %v706
  %v709 = vshll.u32 %v481, 16
  %v711 = vrot.slane %v709, 1
  %v712 = vsel %vm496, %v707, %v711
  %v714 = vshrl.u32 %v386, 16
  %v716 = vshll.u32 %v386, 16
  %v718 = vrot.slane %v716, 1
  %v719 = vor.u32 %v714, %v718
  %v721 = vshll.u32 %v482, 16
  %v723 = vrot.slane %v721, 1
  %v724 = vsel %vm496, %v719, %v723
  %v726 = vshrl.u32 %v387, 16
  %v728 = vshll.u32 %v387, 16
  %v730 = vrot.slane %v728, 1
  %v731 = vor.u32 %v726, %v730
  %v733 = vshll.u32 %v483, 16
  %v735 = vrot.slane %v733, 1
  %v736 = vsel %vm496, %v731, %v735
  %v738 = vshrl.u32 %v388, 16
  %v740 = vshll.u32 %v388, 16
  %v742 = vrot.slane %v740, 1
  %v743 = vor.u32 %v738, %v742
  %v745 = vshll.u32 %v484, 16
  %v747 = vrot.slane %v745, 1
  %v748 = vsel %vm496, %v743, %v747
  %v750 = vshrl.u32 %v389, 16
  %v752 = vshll.u32 %v389, 16
  %v754 = vrot.slane %v752, 1
  %v755 = vor.u32 %v750, %v754
  %v757 = vshll.u32 %v485, 16
  %v759 = vrot.slane %v757, 1
  %v760 = vsel %vm496, %v755, %v759
  %v762 = vshrl.u32 %v390, 16
  %v764 = vshll.u32 %v390, 16
  %v766 = vrot.slane %v764, 1
  %v767 = vor.u32 %v762, %v766
  %v769 = vshll.u32 %v486, 16
  %v771 = vrot.slane %v769, 1
  %v772 = vsel %vm496, %v767, %v771
  %v774 = vshrl.u32 %v391, 16
  %v776 = vshll.u32 %v391, 16
  %v778 = vrot.slane %v776, 1
  %v779 = vor.u32 %v774, %v778
  %v781 = vshll.u32 %v487, 16
  %v783 = vrot.slane %v781, 1
  %v784 = vsel %vm496, %v779, %v783
  %v786 = vshrl.u32 %v392, 16
  %v788 = vshll.u32 %v392, 16
  %v790 = vrot.slane %v788, 1
  %v791 = vor.u32 %v786, %v790
  %v793 = vshll.u32 %v488, 16
  %v795 = vrot.slane %v793, 1
  %v796 = vsel %vm496, %v791, %v795
  %v798 = vshrl.u32 %v393, 16
  %v800 = vshll.u32 %v393, 16
  %v802 = vrot.slane %v800, 1
  %v803 = vor.u32 %v798, %v802
  %v805 = vshll.u32 %v489, 16
  %v807 = vrot.slane %v805, 1
  %v808 = vsel %vm496, %v803, %v807
  %v810 = vshrl.u32 %v394, 16
  %v812 = vshll.u32 %v394, 16
  %v814 = vrot.slane %v812, 1
  %v815 = vor.u32 %v810, %v814
  %v817 = vshll.u32 %v490, 16
  %v819 = vrot.slane %v817, 1
  %v820 = vsel %vm496, %v815, %v819
  %v822 = vshrl.u32 %v395, 16
  %v824 = vshll.u32 %v395, 16
  %v826 = vrot.slane %v824, 1
  %v827 = vor.u32 %v822, %v826
  %v829 = vshll.u32 %v491, 16
  %v831 = vrot.slane %v829, 1
  %v832 = vsel %vm496, %v827, %v831
  %v834 = vshrl.u32 %v396, 16
  %v836 = vshll.u32 %v396, 16
  %v838 = vrot.slane %v836, 1
  %v839 = vor.u32 %v834, %v838
  %v841 = vshll.u32 %v492, 16
  %v843 = vrot.slane %v841, 1
  %v844 = vsel %vm496, %v839, %v843
  %v846 = vshrl.u32 %v397, 16
  %v848 = vshll.u32 %v397, 16
  %v850 = vrot.slane %v848, 1
  %v851 = vor.u32 %v846, %v850
  %v853 = vshll.u32 %v493, 16
  %v855 = vrot.slane %v853, 1
  %v856 = vsel %vm496, %v851, %v855
  %v858 = vshrl.u32 %v398, 16
  %v860 = vshll.u32 %v398, 16
  %v862 = vrot.slane %v860, 1
  %v863 = vor.u32 %v858, %v862
  %v865 = vshll.u32 %v494, 16
  %v867 = vrot.slane %v865, 1
  %v868 = vsel %vm496, %v863, %v867
  %v870 = vshrl.u32 %v399, 16
  %v872 = vshll.u32 %v399, 16
  %v874 = vrot.slane %v872, 1
  %v875 = vor.u32 %v870, %v874
  %v877 = vshll.u32 %v495, 16
  %v879 = vrot.slane %v877, 1
  %v880 = vsel %vm496, %v875, %v879
  %881 = vrot.lane.b32.xlu0 %v508, 4
  %v882 = vpop.permute.xlu0 %881
  %883 = vrot.lane.b32.xlu0 %v520, 4
  %v884 = vpop.permute.xlu0 %883
  %885 = vrot.lane.b32.xlu0 %v532, 4
  %v886 = vpop.permute.xlu0 %885
  %887 = vrot.lane.b32.xlu0 %v544, 4
  %v888 = vpop.permute.xlu0 %887
  %889 = vrot.lane.b32.xlu0 %v556, 4
  %v890 = vpop.permute.xlu0 %889
  %891 = vrot.lane.b32.xlu0 %v568, 4
  %v892 = vpop.permute.xlu0 %891
  %893 = vrot.lane.b32.xlu0 %v580, 4
  %v894 = vpop.permute.xlu0 %893
  %895 = vrot.lane.b32.xlu0 %v592, 4
  %v896 = vpop.permute.xlu0 %895
  %897 = vrot.lane.b32.xlu0 %v604, 4
  %v898 = vpop.permute.xlu0 %897
  %899 = vrot.lane.b32.xlu0 %v616, 4
  %v900 = vpop.permute.xlu0 %899
  %901 = vrot.lane.b32.xlu0 %v628, 4
  %v902 = vpop.permute.xlu0 %901
  %903 = vrot.lane.b32.xlu0 %v640, 4
  %v904 = vpop.permute.xlu0 %903
  %905 = vrot.lane.b32.xlu0 %v652, 4
  %v906 = vpop.permute.xlu0 %905
  %907 = vrot.lane.b32.xlu0 %v664, 4
  %v908 = vpop.permute.xlu0 %907
  %909 = vrot.lane.b32.xlu0 %v676, 4
  %v910 = vpop.permute.xlu0 %909
  %911 = vrot.lane.b32.xlu0 %v688, 4
  %v912 = vpop.permute.xlu0 %911
  %913 = vrot.lane.b32.xlu0 %v700, 4
  %v914 = vpop.permute.xlu0 %913
  %915 = vrot.lane.b32.xlu0 %v712, 4
  %v916 = vpop.permute.xlu0 %915
  %917 = vrot.lane.b32.xlu0 %v724, 4
  %v918 = vpop.permute.xlu0 %917
  %919 = vrot.lane.b32.xlu0 %v736, 4
  %v920 = vpop.permute.xlu0 %919
  %921 = vrot.lane.b32.xlu0 %v748, 4
  %v922 = vpop.permute.xlu0 %921
  %923 = vrot.lane.b32.xlu0 %v760, 4
  %v924 = vpop.permute.xlu0 %923
  %925 = vrot.lane.b32.xlu0 %v772, 4
  %v926 = vpop.permute.xlu0 %925
  %927 = vrot.lane.b32.xlu0 %v784, 4
  %v928 = vpop.permute.xlu0 %927
  %929 = vrot.lane.b32.xlu0 %v796, 4
  %v930 = vpop.permute.xlu0 %929
  %931 = vrot.lane.b32.xlu0 %v808, 4
  %v932 = vpop.permute.xlu0 %931
  %933 = vrot.lane.b32.xlu0 %v820, 4
  %v934 = vpop.permute.xlu0 %933
  %935 = vrot.lane.b32.xlu0 %v832, 4
  %v936 = vpop.permute.xlu0 %935
  %937 = vrot.lane.b32.xlu0 %v844, 4
  %v938 = vpop.permute.xlu0 %937
  %939 = vrot.lane.b32.xlu0 %v856, 4
  %v940 = vpop.permute.xlu0 %939
  %941 = vrot.lane.b32.xlu0 %v868, 4
  %v942 = vpop.permute.xlu0 %941
  %943 = vrot.lane.b32.xlu0 %v880, 4
  %v944 = vpop.permute.xlu0 %943
  %vm945 = vcmask 1046528
  %v946 = vrot.slane %v368, 1
  %v947 = vrot.slane %v464, 1
  %v948 = vsel %vm945, %v946, %v947
  %v949 = vrot.slane %v369, 1
  %v950 = vrot.slane %v465, 1
  %v951 = vsel %vm945, %v949, %v950
  %v952 = vrot.slane %v370, 1
  %v953 = vrot.slane %v466, 1
  %v954 = vsel %vm945, %v952, %v953
  %v955 = vrot.slane %v371, 1
  %v956 = vrot.slane %v467, 1
  %v957 = vsel %vm945, %v955, %v956
  %v958 = vrot.slane %v372, 1
  %v959 = vrot.slane %v468, 1
  %v960 = vsel %vm945, %v958, %v959
  %v961 = vrot.slane %v373, 1
  %v962 = vrot.slane %v469, 1
  %v963 = vsel %vm945, %v961, %v962
  %v964 = vrot.slane %v374, 1
  %v965 = vrot.slane %v470, 1
  %v966 = vsel %vm945, %v964, %v965
  %v967 = vrot.slane %v375, 1
  %v968 = vrot.slane %v471, 1
  %v969 = vsel %vm945, %v967, %v968
  %v970 = vrot.slane %v376, 1
  %v971 = vrot.slane %v472, 1
  %v972 = vsel %vm945, %v970, %v971
  %v973 = vrot.slane %v377, 1
  %v974 = vrot.slane %v473, 1
  %v975 = vsel %vm945, %v973, %v974
  %v976 = vrot.slane %v378, 1
  %v977 = vrot.slane %v474, 1
  %v978 = vsel %vm945, %v976, %v977
  %v979 = vrot.slane %v379, 1
  %v980 = vrot.slane %v475, 1
  %v981 = vsel %vm945, %v979, %v980
  %v982 = vrot.slane %v380, 1
  %v983 = vrot.slane %v476, 1
  %v984 = vsel %vm945, %v982, %v983
  %v985 = vrot.slane %v381, 1
  %v986 = vrot.slane %v477, 1
  %v987 = vsel %vm945, %v985, %v986
  %v988 = vrot.slane %v382, 1
  %v989 = vrot.slane %v478, 1
  %v990 = vsel %vm945, %v988, %v989
  %v991 = vrot.slane %v383, 1
  %v992 = vrot.slane %v479, 1
  %v993 = vsel %vm945, %v991, %v992
  %v994 = vrot.slane %v384, 1
  %v995 = vrot.slane %v480, 1
  %v996 = vsel %vm945, %v994, %v995
  %v997 = vrot.slane %v385, 1
  %v998 = vrot.slane %v481, 1
  %v999 = vsel %vm945, %v997, %v998
  %v1000 = vrot.slane %v386, 1
  %v1001 = vrot.slane %v482, 1
  %v1002 = vsel %vm945, %v1000, %v1001
  %v1003 = vrot.slane %v387, 1
  %v1004 = vrot.slane %v483, 1
  %v1005 = vsel %vm945, %v1003, %v1004
  %v1006 = vrot.slane %v388, 1
  %v1007 = vrot.slane %v484, 1
  %v1008 = vsel %vm945, %v1006, %v1007
  %v1009 = vrot.slane %v389, 1
  %v1010 = vrot.slane %v485, 1
  %v1011 = vsel %vm945, %v1009, %v1010
  %v1012 = vrot.slane %v390, 1
  %v1013 = vrot.slane %v486, 1
  %v1014 = vsel %vm945, %v1012, %v1013
  %v1015 = vrot.slane %v391, 1
  %v1016 = vrot.slane %v487, 1
  %v1017 = vsel %vm945, %v1015, %v1016
  %v1018 = vrot.slane %v392, 1
  %v1019 = vrot.slane %v488, 1
  %v1020 = vsel %vm945, %v1018, %v1019
  %v1021 = vrot.slane %v393, 1
  %v1022 = vrot.slane %v489, 1
  %v1023 = vsel %vm945, %v1021, %v1022
  %v1024 = vrot.slane %v394, 1
  %v1025 = vrot.slane %v490, 1
  %v1026 = vsel %vm945, %v1024, %v1025
  %v1027 = vrot.slane %v395, 1
  %v1028 = vrot.slane %v491, 1
  %v1029 = vsel %vm945, %v1027, %v1028
  %v1030 = vrot.slane %v396, 1
  %v1031 = vrot.slane %v492, 1
  %v1032 = vsel %vm945, %v1030, %v1031
  %v1033 = vrot.slane %v397, 1
  %v1034 = vrot.slane %v493, 1
  %v1035 = vsel %vm945, %v1033, %v1034
  %v1036 = vrot.slane %v398, 1
  %v1037 = vrot.slane %v494, 1
  %v1038 = vsel %vm945, %v1036, %v1037
  %v1039 = vrot.slane %v399, 1
  %v1040 = vrot.slane %v495, 1
  %v1041 = vsel %vm945, %v1039, %v1040
  %1042 = vrot.lane.b32.xlu0 %v948, 8
  %v1043 = vpop.permute.xlu0 %1042
  %1044 = vrot.lane.b32.xlu0 %v951, 8
  %v1045 = vpop.permute.xlu0 %1044
  %1046 = vrot.lane.b32.xlu0 %v954, 8
  %v1047 = vpop.permute.xlu0 %1046
  %1048 = vrot.lane.b32.xlu0 %v957, 8
  %v1049 = vpop.permute.xlu0 %1048
  %1050 = vrot.lane.b32.xlu0 %v960, 8
  %v1051 = vpop.permute.xlu0 %1050
  %1052 = vrot.lane.b32.xlu0 %v963, 8
  %v1053 = vpop.permute.xlu0 %1052
  %1054 = vrot.lane.b32.xlu0 %v966, 8
  %v1055 = vpop.permute.xlu0 %1054
  %1056 = vrot.lane.b32.xlu0 %v969, 8
  %v1057 = vpop.permute.xlu0 %1056
  %1058 = vrot.lane.b32.xlu0 %v972, 8
  %v1059 = vpop.permute.xlu0 %1058
  %1060 = vrot.lane.b32.xlu0 %v975, 8
  %v1061 = vpop.permute.xlu0 %1060
  %1062 = vrot.lane.b32.xlu0 %v978, 8
  %v1063 = vpop.permute.xlu0 %1062
  %1064 = vrot.lane.b32.xlu0 %v981, 8
  %v1065 = vpop.permute.xlu0 %1064
  %1066 = vrot.lane.b32.xlu0 %v984, 8
  %v1067 = vpop.permute.xlu0 %1066
  %1068 = vrot.lane.b32.xlu0 %v987, 8
  %v1069 = vpop.permute.xlu0 %1068
  %1070 = vrot.lane.b32.xlu0 %v990, 8
  %v1071 = vpop.permute.xlu0 %1070
  %1072 = vrot.lane.b32.xlu0 %v993, 8
  %v1073 = vpop.permute.xlu0 %1072
  %1074 = vrot.lane.b32.xlu0 %v996, 8
  %v1075 = vpop.permute.xlu0 %1074
  %1076 = vrot.lane.b32.xlu0 %v999, 8
  %v1077 = vpop.permute.xlu0 %1076
  %1078 = vrot.lane.b32.xlu0 %v1002, 8
  %v1079 = vpop.permute.xlu0 %1078
  %1080 = vrot.lane.b32.xlu0 %v1005, 8
  %v1081 = vpop.permute.xlu0 %1080
  %1082 = vrot.lane.b32.xlu0 %v1008, 8
  %v1083 = vpop.permute.xlu0 %1082
  %1084 = vrot.lane.b32.xlu0 %v1011, 8
  %v1085 = vpop.permute.xlu0 %1084
  %1086 = vrot.lane.b32.xlu0 %v1014, 8
  %v1087 = vpop.permute.xlu0 %1086
  %1088 = vrot.lane.b32.xlu0 %v1017, 8
  %v1089 = vpop.permute.xlu0 %1088
  %1090 = vrot.lane.b32.xlu0 %v1020, 8
  %v1091 = vpop.permute.xlu0 %1090
  %1092 = vrot.lane.b32.xlu0 %v1023, 8
  %v1093 = vpop.permute.xlu0 %1092
  %1094 = vrot.lane.b32.xlu0 %v1026, 8
  %v1095 = vpop.permute.xlu0 %1094
  %1096 = vrot.lane.b32.xlu0 %v1029, 8
  %v1097 = vpop.permute.xlu0 %1096
  %1098 = vrot.lane.b32.xlu0 %v1032, 8
  %v1099 = vpop.permute.xlu0 %1098
  %1100 = vrot.lane.b32.xlu0 %v1035, 8
  %v1101 = vpop.permute.xlu0 %1100
  %1102 = vrot.lane.b32.xlu0 %v1038, 8
  %v1103 = vpop.permute.xlu0 %1102
  %1104 = vrot.lane.b32.xlu0 %v1041, 8
  %v1105 = vpop.permute.xlu0 %1104
  %v1110 = vunpack.c.l.b16 %v72
  %v1111 = vunpack.c.l.b16 %v73
  %v1112 = vunpack.c.l.b16 %v126
  %v1113 = vunpack.c.l.b16 %v127
  %v1114 = vpack.c.b16 %v1111, %v1110
  %v1115 = vpack.c.b16 %v1113, %v1112
  %1116 = vrot.lane.b32.xlu0 %v369, 12
  %v1117 = vpop.permute.xlu0 %1116
  %1118 = vrot.lane.b32.xlu0 %v370, 12
  %v1119 = vpop.permute.xlu0 %1118
  %1120 = vrot.lane.b32.xlu0 %v371, 12
  %v1121 = vpop.permute.xlu0 %1120
  %1122 = vrot.lane.b32.xlu0 %v372, 12
  %v1123 = vpop.permute.xlu0 %1122
  %1124 = vrot.lane.b32.xlu0 %v373, 12
  %v1125 = vpop.permute.xlu0 %1124
  %1126 = vrot.lane.b32.xlu0 %v374, 12
  %v1127 = vpop.permute.xlu0 %1126
  %1128 = vrot.lane.b32.xlu0 %v375, 12
  %v1129 = vpop.permute.xlu0 %1128
  %1130 = vrot.lane.b32.xlu0 %v376, 12
  %v1131 = vpop.permute.xlu0 %1130
  %1132 = vrot.lane.b32.xlu0 %v377, 12
  %v1133 = vpop.permute.xlu0 %1132
  %1134 = vrot.lane.b32.xlu0 %v378, 12
  %v1135 = vpop.permute.xlu0 %1134
  %1136 = vrot.lane.b32.xlu0 %v379, 12
  %v1137 = vpop.permute.xlu0 %1136
  %1138 = vrot.lane.b32.xlu0 %v380, 12
  %v1139 = vpop.permute.xlu0 %1138
  %1140 = vrot.lane.b32.xlu0 %v381, 12
  %v1141 = vpop.permute.xlu0 %1140
  %1142 = vrot.lane.b32.xlu0 %v382, 12
  %v1143 = vpop.permute.xlu0 %1142
  %1144 = vrot.lane.b32.xlu0 %v383, 12
  %v1145 = vpop.permute.xlu0 %1144
  %1146 = vrot.lane.b32.xlu0 %v1114, 12
  %v1147 = vpop.permute.xlu0 %1146
  %1148 = vrot.lane.b32.xlu0 %v385, 12
  %v1149 = vpop.permute.xlu0 %1148
  %1150 = vrot.lane.b32.xlu0 %v386, 12
  %v1151 = vpop.permute.xlu0 %1150
  %1152 = vrot.lane.b32.xlu0 %v387, 12
  %v1153 = vpop.permute.xlu0 %1152
  %1154 = vrot.lane.b32.xlu0 %v388, 12
  %v1155 = vpop.permute.xlu0 %1154
  %1156 = vrot.lane.b32.xlu0 %v389, 12
  %v1157 = vpop.permute.xlu0 %1156
  %1158 = vrot.lane.b32.xlu0 %v390, 12
  %v1159 = vpop.permute.xlu0 %1158
  %1160 = vrot.lane.b32.xlu0 %v391, 12
  %v1161 = vpop.permute.xlu0 %1160
  %1162 = vrot.lane.b32.xlu0 %v392, 12
  %v1163 = vpop.permute.xlu0 %1162
  %1164 = vrot.lane.b32.xlu0 %v393, 12
  %v1165 = vpop.permute.xlu0 %1164
  %1166 = vrot.lane.b32.xlu0 %v394, 12
  %v1167 = vpop.permute.xlu0 %1166
  %1168 = vrot.lane.b32.xlu0 %v395, 12
  %v1169 = vpop.permute.xlu0 %1168
  %1170 = vrot.lane.b32.xlu0 %v396, 12
  %v1171 = vpop.permute.xlu0 %1170
  %1172 = vrot.lane.b32.xlu0 %v397, 12
  %v1173 = vpop.permute.xlu0 %1172
  %1174 = vrot.lane.b32.xlu0 %v398, 12
  %v1175 = vpop.permute.xlu0 %1174
  %1176 = vrot.lane.b32.xlu0 %v399, 12
  %v1177 = vpop.permute.xlu0 %1176
  %1178 = vrot.lane.b32.xlu0 %v1115, 12
  %v1179 = vpop.permute.xlu0 %1178
  %v1182 = vunpack.c.l.b16 %v74
  %v1183 = vunpack.c.l.b16 %v128
  %v1184 = vpack.c.b16 %v1182, %v1182
  %v1185 = vpack.c.b16 %v1183, %v1183
  %v1187 = vshrl.u32 %v1114, 16
  %v1189 = vshll.u32 %v1114, 16
  %v1191 = vrot.slane %v1189, 1
  %v1192 = vor.u32 %v1187, %v1191
  %v1194 = vshll.u32 %v1184, 16
  %v1196 = vrot.slane %v1194, 1
  %v1197 = vsel %vm496, %v1192, %v1196
  %v1199 = vshrl.u32 %v1115, 16
  %v1201 = vshll.u32 %v1115, 16
  %v1203 = vrot.slane %v1201, 1
  %v1204 = vor.u32 %v1199, %v1203
  %v1206 = vshll.u32 %v1185, 16
  %v1208 = vrot.slane %v1206, 1
  %v1209 = vsel %vm496, %v1204, %v1208
  %1210 = vrot.lane.b32.xlu0 %v520, 16
  %v1211 = vpop.permute.xlu0 %1210
  %1212 = vrot.lane.b32.xlu0 %v532, 16
  %v1213 = vpop.permute.xlu0 %1212
  %1214 = vrot.lane.b32.xlu0 %v544, 16
  %v1215 = vpop.permute.xlu0 %1214
  %1216 = vrot.lane.b32.xlu0 %v556, 16
  %v1217 = vpop.permute.xlu0 %1216
  %1218 = vrot.lane.b32.xlu0 %v568, 16
  %v1219 = vpop.permute.xlu0 %1218
  %1220 = vrot.lane.b32.xlu0 %v580, 16
  %v1221 = vpop.permute.xlu0 %1220
  %1222 = vrot.lane.b32.xlu0 %v592, 16
  %v1223 = vpop.permute.xlu0 %1222
  %1224 = vrot.lane.b32.xlu0 %v604, 16
  %v1225 = vpop.permute.xlu0 %1224
  %1226 = vrot.lane.b32.xlu0 %v616, 16
  %v1227 = vpop.permute.xlu0 %1226
  %1228 = vrot.lane.b32.xlu0 %v628, 16
  %v1229 = vpop.permute.xlu0 %1228
  %1230 = vrot.lane.b32.xlu0 %v640, 16
  %v1231 = vpop.permute.xlu0 %1230
  %1232 = vrot.lane.b32.xlu0 %v652, 16
  %v1233 = vpop.permute.xlu0 %1232
  %1234 = vrot.lane.b32.xlu0 %v664, 16
  %v1235 = vpop.permute.xlu0 %1234
  %1236 = vrot.lane.b32.xlu0 %v676, 16
  %v1237 = vpop.permute.xlu0 %1236
  %1238 = vrot.lane.b32.xlu0 %v688, 16
  %v1239 = vpop.permute.xlu0 %1238
  %1240 = vrot.lane.b32.xlu0 %v1197, 16
  %v1241 = vpop.permute.xlu0 %1240
  %1242 = vrot.lane.b32.xlu0 %v712, 16
  %v1243 = vpop.permute.xlu0 %1242
  %1244 = vrot.lane.b32.xlu0 %v724, 16
  %v1245 = vpop.permute.xlu0 %1244
  %1246 = vrot.lane.b32.xlu0 %v736, 16
  %v1247 = vpop.permute.xlu0 %1246
  %1248 = vrot.lane.b32.xlu0 %v748, 16
  %v1249 = vpop.permute.xlu0 %1248
  %1250 = vrot.lane.b32.xlu0 %v760, 16
  %v1251 = vpop.permute.xlu0 %1250
  %1252 = vrot.lane.b32.xlu0 %v772, 16
  %v1253 = vpop.permute.xlu0 %1252
  %1254 = vrot.lane.b32.xlu0 %v784, 16
  %v1255 = vpop.permute.xlu0 %1254
  %1256 = vrot.lane.b32.xlu0 %v796, 16
  %v1257 = vpop.permute.xlu0 %1256
  %1258 = vrot.lane.b32.xlu0 %v808, 16
  %v1259 = vpop.permute.xlu0 %1258
  %1260 = vrot.lane.b32.xlu0 %v820, 16
  %v1261 = vpop.permute.xlu0 %1260
  %1262 = vrot.lane.b32.xlu0 %v832, 16
  %v1263 = vpop.permute.xlu0 %1262
  %1264 = vrot.lane.b32.xlu0 %v844, 16
  %v1265 = vpop.permute.xlu0 %1264
  %1266 = vrot.lane.b32.xlu0 %v856, 16
  %v1267 = vpop.permute.xlu0 %1266
  %1268 = vrot.lane.b32.xlu0 %v868, 16
  %v1269 = vpop.permute.xlu0 %1268
  %1270 = vrot.lane.b32.xlu0 %v880, 16
  %v1271 = vpop.permute.xlu0 %1270
  %1272 = vrot.lane.b32.xlu0 %v1209, 16
  %v1273 = vpop.permute.xlu0 %1272
  %v1274 = vrot.slane %v1114, 1
  %v1275 = vrot.slane %v1184, 1
  %v1276 = vsel %vm945, %v1274, %v1275
  %v1277 = vrot.slane %v1115, 1
  %v1278 = vrot.slane %v1185, 1
  %v1279 = vsel %vm945, %v1277, %v1278
  %1280 = vrot.lane.b32.xlu0 %v951, 20
  %v1281 = vpop.permute.xlu0 %1280
  %1282 = vrot.lane.b32.xlu0 %v954, 20
  %v1283 = vpop.permute.xlu0 %1282
  %1284 = vrot.lane.b32.xlu0 %v957, 20
  %v1285 = vpop.permute.xlu0 %1284
  %1286 = vrot.lane.b32.xlu0 %v960, 20
  %v1287 = vpop.permute.xlu0 %1286
  %1288 = vrot.lane.b32.xlu0 %v963, 20
  %v1289 = vpop.permute.xlu0 %1288
  %1290 = vrot.lane.b32.xlu0 %v966, 20
  %v1291 = vpop.permute.xlu0 %1290
  %1292 = vrot.lane.b32.xlu0 %v969, 20
  %v1293 = vpop.permute.xlu0 %1292
  %1294 = vrot.lane.b32.xlu0 %v972, 20
  %v1295 = vpop.permute.xlu0 %1294
  %1296 = vrot.lane.b32.xlu0 %v975, 20
  %v1297 = vpop.permute.xlu0 %1296
  %1298 = vrot.lane.b32.xlu0 %v978, 20
  %v1299 = vpop.permute.xlu0 %1298
  %1300 = vrot.lane.b32.xlu0 %v981, 20
  %v1301 = vpop.permute.xlu0 %1300
  %1302 = vrot.lane.b32.xlu0 %v984, 20
  %v1303 = vpop.permute.xlu0 %1302
  %1304 = vrot.lane.b32.xlu0 %v987, 20
  %v1305 = vpop.permute.xlu0 %1304
  %1306 = vrot.lane.b32.xlu0 %v990, 20
  %v1307 = vpop.permute.xlu0 %1306
  %1308 = vrot.lane.b32.xlu0 %v993, 20
  %v1309 = vpop.permute.xlu0 %1308
  %1310 = vrot.lane.b32.xlu0 %v1276, 20
  %v1311 = vpop.permute.xlu0 %1310
  %1312 = vrot.lane.b32.xlu0 %v999, 20
  %v1313 = vpop.permute.xlu0 %1312
  %1314 = vrot.lane.b32.xlu0 %v1002, 20
  %v1315 = vpop.permute.xlu0 %1314
  %1316 = vrot.lane.b32.xlu0 %v1005, 20
  %v1317 = vpop.permute.xlu0 %1316
  %1318 = vrot.lane.b32.xlu0 %v1008, 20
  %v1319 = vpop.permute.xlu0 %1318
  %1320 = vrot.lane.b32.xlu0 %v1011, 20
  %v1321 = vpop.permute.xlu0 %1320
  %1322 = vrot.lane.b32.xlu0 %v1014, 20
  %v1323 = vpop.permute.xlu0 %1322
  %1324 = vrot.lane.b32.xlu0 %v1017, 20
  %v1325 = vpop.permute.xlu0 %1324
  %1326 = vrot.lane.b32.xlu0 %v1020, 20
  %v1327 = vpop.permute.xlu0 %1326
  %1328 = vrot.lane.b32.xlu0 %v1023, 20
  %v1329 = vpop.permute.xlu0 %1328
  %1330 = vrot.lane.b32.xlu0 %v1026, 20
  %v1331 = vpop.permute.xlu0 %1330
  %1332 = vrot.lane.b32.xlu0 %v1029, 20
  %v1333 = vpop.permute.xlu0 %1332
  %1334 = vrot.lane.b32.xlu0 %v1032, 20
  %v1335 = vpop.permute.xlu0 %1334
  %1336 = vrot.lane.b32.xlu0 %v1035, 20
  %v1337 = vpop.permute.xlu0 %1336
  %1338 = vrot.lane.b32.xlu0 %v1038, 20
  %v1339 = vpop.permute.xlu0 %1338
  %1340 = vrot.lane.b32.xlu0 %v1041, 20
  %v1341 = vpop.permute.xlu0 %1340
  %1342 = vrot.lane.b32.xlu0 %v1279, 20
  %v1343 = vpop.permute.xlu0 %1342
  %v1348 = vunpack.c.l.b16 %v75
  %v1349 = vunpack.c.l.b16 %v76
  %v1350 = vunpack.c.l.b16 %v129
  %v1351 = vunpack.c.l.b16 %v130
  %v1352 = vpack.c.b16 %v1349, %v1348
  %v1353 = vpack.c.b16 %v1351, %v1350
  %1354 = vrot.lane.b32.xlu0 %v370, 24
  %v1355 = vpop.permute.xlu0 %1354
  %1356 = vrot.lane.b32.xlu0 %v371, 24
  %v1357 = vpop.permute.xlu0 %1356
  %1358 = vrot.lane.b32.xlu0 %v372, 24
  %v1359 = vpop.permute.xlu0 %1358
  %1360 = vrot.lane.b32.xlu0 %v373, 24
  %v1361 = vpop.permute.xlu0 %1360
  %1362 = vrot.lane.b32.xlu0 %v374, 24
  %v1363 = vpop.permute.xlu0 %1362
  %1364 = vrot.lane.b32.xlu0 %v375, 24
  %v1365 = vpop.permute.xlu0 %1364
  %1366 = vrot.lane.b32.xlu0 %v376, 24
  %v1367 = vpop.permute.xlu0 %1366
  %1368 = vrot.lane.b32.xlu0 %v377, 24
  %v1369 = vpop.permute.xlu0 %1368
  %1370 = vrot.lane.b32.xlu0 %v378, 24
  %v1371 = vpop.permute.xlu0 %1370
  %1372 = vrot.lane.b32.xlu0 %v379, 24
  %v1373 = vpop.permute.xlu0 %1372
  %1374 = vrot.lane.b32.xlu0 %v380, 24
  %v1375 = vpop.permute.xlu0 %1374
  %1376 = vrot.lane.b32.xlu0 %v381, 24
  %v1377 = vpop.permute.xlu0 %1376
  %1378 = vrot.lane.b32.xlu0 %v382, 24
  %v1379 = vpop.permute.xlu0 %1378
  %1380 = vrot.lane.b32.xlu0 %v383, 24
  %v1381 = vpop.permute.xlu0 %1380
  %1382 = vrot.lane.b32.xlu0 %v1114, 24
  %v1383 = vpop.permute.xlu0 %1382
  %1384 = vrot.lane.b32.xlu0 %v1352, 24
  %v1385 = vpop.permute.xlu0 %1384
  %1386 = vrot.lane.b32.xlu0 %v386, 24
  %v1387 = vpop.permute.xlu0 %1386
  %1388 = vrot.lane.b32.xlu0 %v387, 24
  %v1389 = vpop.permute.xlu0 %1388
  %1390 = vrot.lane.b32.xlu0 %v388, 24
  %v1391 = vpop.permute.xlu0 %1390
  %1392 = vrot.lane.b32.xlu0 %v389, 24
  %v1393 = vpop.permute.xlu0 %1392
  %1394 = vrot.lane.b32.xlu0 %v390, 24
  %v1395 = vpop.permute.xlu0 %1394
  %1396 = vrot.lane.b32.xlu0 %v391, 24
  %v1397 = vpop.permute.xlu0 %1396
  %1398 = vrot.lane.b32.xlu0 %v392, 24
  %v1399 = vpop.permute.xlu0 %1398
  %1400 = vrot.lane.b32.xlu0 %v393, 24
  %v1401 = vpop.permute.xlu0 %1400
  %1402 = vrot.lane.b32.xlu0 %v394, 24
  %v1403 = vpop.permute.xlu0 %1402
  %1404 = vrot.lane.b32.xlu0 %v395, 24
  %v1405 = vpop.permute.xlu0 %1404
  %1406 = vrot.lane.b32.xlu0 %v396, 24
  %v1407 = vpop.permute.xlu0 %1406
  %1408 = vrot.lane.b32.xlu0 %v397, 24
  %v1409 = vpop.permute.xlu0 %1408
  %1410 = vrot.lane.b32.xlu0 %v398, 24
  %v1411 = vpop.permute.xlu0 %1410
  %1412 = vrot.lane.b32.xlu0 %v399, 24
  %v1413 = vpop.permute.xlu0 %1412
  %1414 = vrot.lane.b32.xlu0 %v1115, 24
  %v1415 = vpop.permute.xlu0 %1414
  %1416 = vrot.lane.b32.xlu0 %v1353, 24
  %v1417 = vpop.permute.xlu0 %1416
  %v1420 = vunpack.c.l.b16 %v77
  %v1421 = vunpack.c.l.b16 %v131
  %v1422 = vpack.c.b16 %v1420, %v1420
  %v1423 = vpack.c.b16 %v1421, %v1421
  %v1425 = vshrl.u32 %v1352, 16
  %v1427 = vshll.u32 %v1352, 16
  %v1429 = vrot.slane %v1427, 1
  %v1430 = vor.u32 %v1425, %v1429
  %v1432 = vshll.u32 %v1422, 16
  %v1434 = vrot.slane %v1432, 1
  %v1435 = vsel %vm496, %v1430, %v1434
  %v1437 = vshrl.u32 %v1353, 16
  %v1439 = vshll.u32 %v1353, 16
  %v1441 = vrot.slane %v1439, 1
  %v1442 = vor.u32 %v1437, %v1441
  %v1444 = vshll.u32 %v1423, 16
  %v1446 = vrot.slane %v1444, 1
  %v1447 = vsel %vm496, %v1442, %v1446
  %1448 = vrot.lane.b32.xlu0 %v532, 28
  %v1449 = vpop.permute.xlu0 %1448
  %1450 = vrot.lane.b32.xlu0 %v544, 28
  %v1451 = vpop.permute.xlu0 %1450
  %1452 = vrot.lane.b32.xlu0 %v556, 28
  %v1453 = vpop.permute.xlu0 %1452
  %1454 = vrot.lane.b32.xlu0 %v568, 28
  %v1455 = vpop.permute.xlu0 %1454
  %1456 = vrot.lane.b32.xlu0 %v580, 28
  %v1457 = vpop.permute.xlu0 %1456
  %1458 = vrot.lane.b32.xlu0 %v592, 28
  %v1459 = vpop.permute.xlu0 %1458
  %1460 = vrot.lane.b32.xlu0 %v604, 28
  %v1461 = vpop.permute.xlu0 %1460
  %1462 = vrot.lane.b32.xlu0 %v616, 28
  %v1463 = vpop.permute.xlu0 %1462
  %1464 = vrot.lane.b32.xlu0 %v628, 28
  %v1465 = vpop.permute.xlu0 %1464
  %1466 = vrot.lane.b32.xlu0 %v640, 28
  %v1467 = vpop.permute.xlu0 %1466
  %1468 = vrot.lane.b32.xlu0 %v652, 28
  %v1469 = vpop.permute.xlu0 %1468
  %1470 = vrot.lane.b32.xlu0 %v664, 28
  %v1471 = vpop.permute.xlu0 %1470
  %1472 = vrot.lane.b32.xlu0 %v676, 28
  %v1473 = vpop.permute.xlu0 %1472
  %1474 = vrot.lane.b32.xlu0 %v688, 28
  %v1475 = vpop.permute.xlu0 %1474
  %1476 = vrot.lane.b32.xlu0 %v1197, 28
  %v1477 = vpop.permute.xlu0 %1476
  %1478 = vrot.lane.b32.xlu0 %v1435, 28
  %v1479 = vpop.permute.xlu0 %1478
  %1480 = vrot.lane.b32.xlu0 %v724, 28
  %v1481 = vpop.permute.xlu0 %1480
  %1482 = vrot.lane.b32.xlu0 %v736, 28
  %v1483 = vpop.permute.xlu0 %1482
  %1484 = vrot.lane.b32.xlu0 %v748, 28
  %v1485 = vpop.permute.xlu0 %1484
  %1486 = vrot.lane.b32.xlu0 %v760, 28
  %v1487 = vpop.permute.xlu0 %1486
  %1488 = vrot.lane.b32.xlu0 %v772, 28
  %v1489 = vpop.permute.xlu0 %1488
  %1490 = vrot.lane.b32.xlu0 %v784, 28
  %v1491 = vpop.permute.xlu0 %1490
  %1492 = vrot.lane.b32.xlu0 %v796, 28
  %v1493 = vpop.permute.xlu0 %1492
  %1494 = vrot.lane.b32.xlu0 %v808, 28
  %v1495 = vpop.permute.xlu0 %1494
  %1496 = vrot.lane.b32.xlu0 %v820, 28
  %v1497 = vpop.permute.xlu0 %1496
  %1498 = vrot.lane.b32.xlu0 %v832, 28
  %v1499 = vpop.permute.xlu0 %1498
  %1500 = vrot.lane.b32.xlu0 %v844, 28
  %v1501 = vpop.permute.xlu0 %1500
  %1502 = vrot.lane.b32.xlu0 %v856, 28
  %v1503 = vpop.permute.xlu0 %1502
  %1504 = vrot.lane.b32.xlu0 %v868, 28
  %v1505 = vpop.permute.xlu0 %1504
  %1506 = vrot.lane.b32.xlu0 %v880, 28
  %v1507 = vpop.permute.xlu0 %1506
  %1508 = vrot.lane.b32.xlu0 %v1209, 28
  %v1509 = vpop.permute.xlu0 %1508
  %1510 = vrot.lane.b32.xlu0 %v1447, 28
  %v1511 = vpop.permute.xlu0 %1510
  %v1512 = vrot.slane %v1352, 1
  %v1513 = vrot.slane %v1422, 1
  %v1514 = vsel %vm945, %v1512, %v1513
  %v1515 = vrot.slane %v1353, 1
  %v1516 = vrot.slane %v1423, 1
  %v1517 = vsel %vm945, %v1515, %v1516
  %1518 = vrot.lane.b32.xlu0 %v954, 32
  %v1519 = vpop.permute.xlu0 %1518
  %1520 = vrot.lane.b32.xlu0 %v957, 32
  %v1521 = vpop.permute.xlu0 %1520
  %1522 = vrot.lane.b32.xlu0 %v960, 32
  %v1523 = vpop.permute.xlu0 %1522
  %1524 = vrot.lane.b32.xlu0 %v963, 32
  %v1525 = vpop.permute.xlu0 %1524
  %1526 = vrot.lane.b32.xlu0 %v966, 32
  %v1527 = vpop.permute.xlu0 %1526
  %1528 = vrot.lane.b32.xlu0 %v969, 32
  %v1529 = vpop.permute.xlu0 %1528
  %1530 = vrot.lane.b32.xlu0 %v972, 32
  %v1531 = vpop.permute.xlu0 %1530
  %1532 = vrot.lane.b32.xlu0 %v975, 32
  %v1533 = vpop.permute.xlu0 %1532
  %1534 = vrot.lane.b32.xlu0 %v978, 32
  %v1535 = vpop.permute.xlu0 %1534
  %1536 = vrot.lane.b32.xlu0 %v981, 32
  %v1537 = vpop.permute.xlu0 %1536
  %1538 = vrot.lane.b32.xlu0 %v984, 32
  %v1539 = vpop.permute.xlu0 %1538
  %1540 = vrot.lane.b32.xlu0 %v987, 32
  %v1541 = vpop.permute.xlu0 %1540
  %1542 = vrot.lane.b32.xlu0 %v990, 32
  %v1543 = vpop.permute.xlu0 %1542
  %1544 = vrot.lane.b32.xlu0 %v993, 32
  %v1545 = vpop.permute.xlu0 %1544
  %1546 = vrot.lane.b32.xlu0 %v1276, 32
  %v1547 = vpop.permute.xlu0 %1546
  %1548 = vrot.lane.b32.xlu0 %v1514, 32
  %v1549 = vpop.permute.xlu0 %1548
  %1550 = vrot.lane.b32.xlu0 %v1002, 32
  %v1551 = vpop.permute.xlu0 %1550
  %1552 = vrot.lane.b32.xlu0 %v1005, 32
  %v1553 = vpop.permute.xlu0 %1552
  %1554 = vrot.lane.b32.xlu0 %v1008, 32
  %v1555 = vpop.permute.xlu0 %1554
  %1556 = vrot.lane.b32.xlu0 %v1011, 32
  %v1557 = vpop.permute.xlu0 %1556
  %1558 = vrot.lane.b32.xlu0 %v1014, 32
  %v1559 = vpop.permute.xlu0 %1558
  %1560 = vrot.lane.b32.xlu0 %v1017, 32
  %v1561 = vpop.permute.xlu0 %1560
  %1562 = vrot.lane.b32.xlu0 %v1020, 32
  %v1563 = vpop.permute.xlu0 %1562
  %1564 = vrot.lane.b32.xlu0 %v1023, 32
  %v1565 = vpop.permute.xlu0 %1564
  %1566 = vrot.lane.b32.xlu0 %v1026, 32
  %v1567 = vpop.permute.xlu0 %1566
  %1568 = vrot.lane.b32.xlu0 %v1029, 32
  %v1569 = vpop.permute.xlu0 %1568
  %1570 = vrot.lane.b32.xlu0 %v1032, 32
  %v1571 = vpop.permute.xlu0 %1570
  %1572 = vrot.lane.b32.xlu0 %v1035, 32
  %v1573 = vpop.permute.xlu0 %1572
  %1574 = vrot.lane.b32.xlu0 %v1038, 32
  %v1575 = vpop.permute.xlu0 %1574
  %1576 = vrot.lane.b32.xlu0 %v1041, 32
  %v1577 = vpop.permute.xlu0 %1576
  %1578 = vrot.lane.b32.xlu0 %v1279, 32
  %v1579 = vpop.permute.xlu0 %1578
  %1580 = vrot.lane.b32.xlu0 %v1517, 32
  %v1581 = vpop.permute.xlu0 %1580
  %vm1582 = vcmask 31744
  %v1584 = vsel %vm1582, %v368, %v882
  %v1586 = vsel %vm1582, %v369, %v884
  %v1588 = vsel %vm1582, %v370, %v886
  %v1590 = vsel %vm1582, %v371, %v888
  %v1592 = vsel %vm1582, %v372, %v890
  %v1594 = vsel %vm1582, %v373, %v892
  %v1596 = vsel %vm1582, %v374, %v894
  %v1598 = vsel %vm1582, %v375, %v896
  %v1600 = vsel %vm1582, %v376, %v898
  %v1602 = vsel %vm1582, %v377, %v900
  %v1604 = vsel %vm1582, %v378, %v902
  %v1606 = vsel %vm1582, %v379, %v904
  %v1608 = vsel %vm1582, %v380, %v906
  %v1610 = vsel %vm1582, %v381, %v908
  %v1612 = vsel %vm1582, %v382, %v910
  %v1614 = vsel %vm1582, %v383, %v912
  %v1616 = vsel %vm1582, %v384, %v914
  %v1618 = vsel %vm1582, %v385, %v916
  %v1620 = vsel %vm1582, %v386, %v918
  %v1622 = vsel %vm1582, %v387, %v920
  %v1624 = vsel %vm1582, %v388, %v922
  %v1626 = vsel %vm1582, %v389, %v924
  %v1628 = vsel %vm1582, %v390, %v926
  %v1630 = vsel %vm1582, %v391, %v928
  %v1632 = vsel %vm1582, %v392, %v930
  %v1634 = vsel %vm1582, %v393, %v932
  %v1636 = vsel %vm1582, %v394, %v934
  %v1638 = vsel %vm1582, %v395, %v936
  %v1640 = vsel %vm1582, %v396, %v938
  %v1642 = vsel %vm1582, %v397, %v940
  %v1644 = vsel %vm1582, %v398, %v942
  %v1646 = vsel %vm1582, %v399, %v944
  %vm1647 = vcmask 64512
  %v1649 = vsel %vm1647, %v1584, %v1043
  %v1651 = vsel %vm1647, %v1586, %v1045
  %v1653 = vsel %vm1647, %v1588, %v1047
  %v1655 = vsel %vm1647, %v1590, %v1049
  %v1657 = vsel %vm1647, %v1592, %v1051
  %v1659 = vsel %vm1647, %v1594, %v1053
  %v1661 = vsel %vm1647, %v1596, %v1055
  %v1663 = vsel %vm1647, %v1598, %v1057
  %v1665 = vsel %vm1647, %v1600, %v1059
  %v1667 = vsel %vm1647, %v1602, %v1061
  %v1669 = vsel %vm1647, %v1604, %v1063
  %v1671 = vsel %vm1647, %v1606, %v1065
  %v1673 = vsel %vm1647, %v1608, %v1067
  %v1675 = vsel %vm1647, %v1610, %v1069
  %v1677 = vsel %vm1647, %v1612, %v1071
  %v1679 = vsel %vm1647, %v1614, %v1073
  %v1681 = vsel %vm1647, %v1616, %v1075
  %v1683 = vsel %vm1647, %v1618, %v1077
  %v1685 = vsel %vm1647, %v1620, %v1079
  %v1687 = vsel %vm1647, %v1622, %v1081
  %v1689 = vsel %vm1647, %v1624, %v1083
  %v1691 = vsel %vm1647, %v1626, %v1085
  %v1693 = vsel %vm1647, %v1628, %v1087
  %v1695 = vsel %vm1647, %v1630, %v1089
  %v1697 = vsel %vm1647, %v1632, %v1091
  %v1699 = vsel %vm1647, %v1634, %v1093
  %v1701 = vsel %vm1647, %v1636, %v1095
  %v1703 = vsel %vm1647, %v1638, %v1097
  %v1705 = vsel %vm1647, %v1640, %v1099
  %v1707 = vsel %vm1647, %v1642, %v1101
  %v1709 = vsel %vm1647, %v1644, %v1103
  %v1711 = vsel %vm1647, %v1646, %v1105
  %vm1712 = vcmask 97280
  %v1714 = vsel %vm1712, %v1649, %v1117
  %v1716 = vsel %vm1712, %v1651, %v1119
  %v1718 = vsel %vm1712, %v1653, %v1121
  %v1720 = vsel %vm1712, %v1655, %v1123
  %v1722 = vsel %vm1712, %v1657, %v1125
  %v1724 = vsel %vm1712, %v1659, %v1127
  %v1726 = vsel %vm1712, %v1661, %v1129
  %v1728 = vsel %vm1712, %v1663, %v1131
  %v1730 = vsel %vm1712, %v1665, %v1133
  %v1732 = vsel %vm1712, %v1667, %v1135
  %v1734 = vsel %vm1712, %v1669, %v1137
  %v1736 = vsel %vm1712, %v1671, %v1139
  %v1738 = vsel %vm1712, %v1673, %v1141
  %v1740 = vsel %vm1712, %v1675, %v1143
  %v1742 = vsel %vm1712, %v1677, %v1145
  %v1744 = vsel %vm1712, %v1679, %v1147
  %v1746 = vsel %vm1712, %v1681, %v1149
  %v1748 = vsel %vm1712, %v1683, %v1151
  %v1750 = vsel %vm1712, %v1685, %v1153
  %v1752 = vsel %vm1712, %v1687, %v1155
  %v1754 = vsel %vm1712, %v1689, %v1157
  %v1756 = vsel %vm1712, %v1691, %v1159
  %v1758 = vsel %vm1712, %v1693, %v1161
  %v1760 = vsel %vm1712, %v1695, %v1163
  %v1762 = vsel %vm1712, %v1697, %v1165
  %v1764 = vsel %vm1712, %v1699, %v1167
  %v1766 = vsel %vm1712, %v1701, %v1169
  %v1768 = vsel %vm1712, %v1703, %v1171
  %v1770 = vsel %vm1712, %v1705, %v1173
  %v1772 = vsel %vm1712, %v1707, %v1175
  %v1774 = vsel %vm1712, %v1709, %v1177
  %v1776 = vsel %vm1712, %v1711, %v1179
  %vm1777 = vcmask 130048
  %v1779 = vsel %vm1777, %v1714, %v1211
  %v1781 = vsel %vm1777, %v1716, %v1213
  %v1783 = vsel %vm1777, %v1718, %v1215
  %v1785 = vsel %vm1777, %v1720, %v1217
  %v1787 = vsel %vm1777, %v1722, %v1219
  %v1789 = vsel %vm1777, %v1724, %v1221
  %v1791 = vsel %vm1777, %v1726, %v1223
  %v1793 = vsel %vm1777, %v1728, %v1225
  %v1795 = vsel %vm1777, %v1730, %v1227
  %v1797 = vsel %vm1777, %v1732, %v1229
  %v1799 = vsel %vm1777, %v1734, %v1231
  %v1801 = vsel %vm1777, %v1736, %v1233
  %v1803 = vsel %vm1777, %v1738, %v1235
  %v1805 = vsel %vm1777, %v1740, %v1237
  %v1807 = vsel %vm1777, %v1742, %v1239
  %v1809 = vsel %vm1777, %v1744, %v1241
  %v1811 = vsel %vm1777, %v1746, %v1243
  %v1813 = vsel %vm1777, %v1748, %v1245
  %v1815 = vsel %vm1777, %v1750, %v1247
  %v1817 = vsel %vm1777, %v1752, %v1249
  %v1819 = vsel %vm1777, %v1754, %v1251
  %v1821 = vsel %vm1777, %v1756, %v1253
  %v1823 = vsel %vm1777, %v1758, %v1255
  %v1825 = vsel %vm1777, %v1760, %v1257
  %v1827 = vsel %vm1777, %v1762, %v1259
  %v1829 = vsel %vm1777, %v1764, %v1261
  %v1831 = vsel %vm1777, %v1766, %v1263
  %v1833 = vsel %vm1777, %v1768, %v1265
  %v1835 = vsel %vm1777, %v1770, %v1267
  %v1837 = vsel %vm1777, %v1772, %v1269
  %v1839 = vsel %vm1777, %v1774, %v1271
  %v1841 = vsel %vm1777, %v1776, %v1273
  %vm1842 = vcmask 162816
  %v1844 = vsel %vm1842, %v1779, %v1281
  %v1846 = vsel %vm1842, %v1781, %v1283
  %v1848 = vsel %vm1842, %v1783, %v1285
  %v1850 = vsel %vm1842, %v1785, %v1287
  %v1852 = vsel %vm1842, %v1787, %v1289
  %v1854 = vsel %vm1842, %v1789, %v1291
  %v1856 = vsel %vm1842, %v1791, %v1293
  %v1858 = vsel %vm1842, %v1793, %v1295
  %v1860 = vsel %vm1842, %v1795, %v1297
  %v1862 = vsel %vm1842, %v1797, %v1299
  %v1864 = vsel %vm1842, %v1799, %v1301
  %v1866 = vsel %vm1842, %v1801, %v1303
  %v1868 = vsel %vm1842, %v1803, %v1305
  %v1870 = vsel %vm1842, %v1805, %v1307
  %v1872 = vsel %vm1842, %v1807, %v1309
  %v1874 = vsel %vm1842, %v1809, %v1311
  %v1876 = vsel %vm1842, %v1811, %v1313
  %v1878 = vsel %vm1842, %v1813, %v1315
  %v1880 = vsel %vm1842, %v1815, %v1317
  %v1882 = vsel %vm1842, %v1817, %v1319
  %v1884 = vsel %vm1842, %v1819, %v1321
  %v1886 = vsel %vm1842, %v1821, %v1323
  %v1888 = vsel %vm1842, %v1823, %v1325
  %v1890 = vsel %vm1842, %v1825, %v1327
  %v1892 = vsel %vm1842, %v1827, %v1329
  %v1894 = vsel %vm1842, %v1829, %v1331
  %v1896 = vsel %vm1842, %v1831, %v1333
  %v1898 = vsel %vm1842, %v1833, %v1335
  %v1900 = vsel %vm1842, %v1835, %v1337
  %v1902 = vsel %vm1842, %v1837, %v1339
  %v1904 = vsel %vm1842, %v1839, %v1341
  %v1906 = vsel %vm1842, %v1841, %v1343
  %vm1907 = vcmask 195584
  %v1909 = vsel %vm1907, %v1844, %v1355
  %v1911 = vsel %vm1907, %v1846, %v1357
  %v1913 = vsel %vm1907, %v1848, %v1359
  %v1915 = vsel %vm1907, %v1850, %v1361
  %v1917 = vsel %vm1907, %v1852, %v1363
  %v1919 = vsel %vm1907, %v1854, %v1365
  %v1921 = vsel %vm1907, %v1856, %v1367
  %v1923 = vsel %vm1907, %v1858, %v1369
  %v1925 = vsel %vm1907, %v1860, %v1371
  %v1927 = vsel %vm1907, %v1862, %v1373
  %v1929 = vsel %vm1907, %v1864, %v1375
  %v1931 = vsel %vm1907, %v1866, %v1377
  %v1933 = vsel %vm1907, %v1868, %v1379
  %v1935 = vsel %vm1907, %v1870, %v1381
  %v1937 = vsel %vm1907, %v1872, %v1383
  %v1939 = vsel %vm1907, %v1874, %v1385
  %v1941 = vsel %vm1907, %v1876, %v1387
  %v1943 = vsel %vm1907, %v1878, %v1389
  %v1945 = vsel %vm1907, %v1880, %v1391
  %v1947 = vsel %vm1907, %v1882, %v1393
  %v1949 = vsel %vm1907, %v1884, %v1395
  %v1951 = vsel %vm1907, %v1886, %v1397
  %v1953 = vsel %vm1907, %v1888, %v1399
  %v1955 = vsel %vm1907, %v1890, %v1401
  %v1957 = vsel %vm1907, %v1892, %v1403
  %v1959 = vsel %vm1907, %v1894, %v1405
  %v1961 = vsel %vm1907, %v1896, %v1407
  %v1963 = vsel %vm1907, %v1898, %v1409
  %v1965 = vsel %vm1907, %v1900, %v1411
  %v1967 = vsel %vm1907, %v1902, %v1413
  %v1969 = vsel %vm1907, %v1904, %v1415
  %v1971 = vsel %vm1907, %v1906, %v1417
  %vm1972 = vcmask 228352
  %v1974 = vsel %vm1972, %v1909, %v1449
  %v1976 = vsel %vm1972, %v1911, %v1451
  %v1978 = vsel %vm1972, %v1913, %v1453
  %v1980 = vsel %vm1972, %v1915, %v1455
  %v1982 = vsel %vm1972, %v1917, %v1457
  %v1984 = vsel %vm1972, %v1919, %v1459
  %v1986 = vsel %vm1972, %v1921, %v1461
  %v1988 = vsel %vm1972, %v1923, %v1463
  %v1990 = vsel %vm1972, %v1925, %v1465
  %v1992 = vsel %vm1972, %v1927, %v1467
  %v1994 = vsel %vm1972, %v1929, %v1469
  %v1996 = vsel %vm1972, %v1931, %v1471
  %v1998 = vsel %vm1972, %v1933, %v1473
  %v2000 = vsel %vm1972, %v1935, %v1475
  %v2002 = vsel %vm1972, %v1937, %v1477
  %v2004 = vsel %vm1972, %v1939, %v1479
  %v2006 = vsel %vm1972, %v1941, %v1481
  %v2008 = vsel %vm1972, %v1943, %v1483
  %v2010 = vsel %vm1972, %v1945, %v1485
  %v2012 = vsel %vm1972, %v1947, %v1487
  %v2014 = vsel %vm1972, %v1949, %v1489
  %v2016 = vsel %vm1972, %v1951, %v1491
  %v2018 = vsel %vm1972, %v1953, %v1493
  %v2020 = vsel %vm1972, %v1955, %v1495
  %v2022 = vsel %vm1972, %v1957, %v1497
  %v2024 = vsel %vm1972, %v1959, %v1499
  %v2026 = vsel %vm1972, %v1961, %v1501
  %v2028 = vsel %vm1972, %v1963, %v1503
  %v2030 = vsel %vm1972, %v1965, %v1505
  %v2032 = vsel %vm1972, %v1967, %v1507
  %v2034 = vsel %vm1972, %v1969, %v1509
  %v2036 = vsel %vm1972, %v1971, %v1511
  %vm2037 = vcmask 261120
  %v2039 = vsel %vm2037, %v1974, %v1519
  %v2041 = vsel %vm2037, %v1976, %v1521
  %v2043 = vsel %vm2037, %v1978, %v1523
  %v2045 = vsel %vm2037, %v1980, %v1525
  %v2047 = vsel %vm2037, %v1982, %v1527
  %v2049 = vsel %vm2037, %v1984, %v1529
  %v2051 = vsel %vm2037, %v1986, %v1531
  %v2053 = vsel %vm2037, %v1988, %v1533
  %v2055 = vsel %vm2037, %v1990, %v1535
  %v2057 = vsel %vm2037, %v1992, %v1537
  %v2059 = vsel %vm2037, %v1994, %v1539
  %v2061 = vsel %vm2037, %v1996, %v1541
  %v2063 = vsel %vm2037, %v1998, %v1543
  %v2065 = vsel %vm2037, %v2000, %v1545
  %v2067 = vsel %vm2037, %v2002, %v1547
  %v2069 = vsel %vm2037, %v2004, %v1549
  %v2071 = vsel %vm2037, %v2006, %v1551
  %v2073 = vsel %vm2037, %v2008, %v1553
  %v2075 = vsel %vm2037, %v2010, %v1555
  %v2077 = vsel %vm2037, %v2012, %v1557
  %v2079 = vsel %vm2037, %v2014, %v1559
  %v2081 = vsel %vm2037, %v2016, %v1561
  %v2083 = vsel %vm2037, %v2018, %v1563
  %v2085 = vsel %vm2037, %v2020, %v1565
  %v2087 = vsel %vm2037, %v2022, %v1567
  %v2089 = vsel %vm2037, %v2024, %v1569
  %v2091 = vsel %vm2037, %v2026, %v1571
  %v2093 = vsel %vm2037, %v2028, %v1573
  %v2095 = vsel %vm2037, %v2030, %v1575
  %v2097 = vsel %vm2037, %v2032, %v1577
  %v2099 = vsel %vm2037, %v2034, %v1579
  %v2101 = vsel %vm2037, %v2036, %v1581
  %v2166 = vunpack.c.l.b16 %v132
  %v2167 = vunpack.c.l.b16 %v133
  %v2168 = vunpack.c.l.b16 %v135
  %v2169 = vunpack.c.l.b16 %v136
  %v2170 = vunpack.c.l.b16 %v138
  %v2171 = vunpack.c.l.b16 %v139
  %v2172 = vunpack.c.l.b16 %v141
  %v2173 = vunpack.c.l.b16 %v142
  %v2174 = vunpack.c.l.b16 %v144
  %v2175 = vunpack.c.l.b16 %v145
  %v2176 = vunpack.c.l.b16 %v147
  %v2177 = vunpack.c.l.b16 %v148
  %v2178 = vunpack.c.l.b16 %v150
  %v2179 = vunpack.c.l.b16 %v151
  %v2180 = vunpack.c.l.b16 %v153
  %v2181 = vunpack.c.l.b16 %v154
  %v2182 = vunpack.c.l.b16 %v156
  %v2183 = vunpack.c.l.b16 %v157
  %v2184 = vunpack.c.l.b16 %v159
  %v2185 = vunpack.c.l.b16 %v160
  %v2186 = vunpack.c.l.b16 %v162
  %v2187 = vunpack.c.l.b16 %v163
  %v2188 = vunpack.c.l.b16 %v165
  %v2189 = vunpack.c.l.b16 %v166
  %v2190 = vunpack.c.l.b16 %v168
  %v2191 = vunpack.c.l.b16 %v169
  %v2192 = vunpack.c.l.b16 %v171
  %v2193 = vunpack.c.l.b16 %v172
  %v2194 = vunpack.c.l.b16 %v174
  %v2195 = vunpack.c.l.b16 %v175
  %v2196 = vunpack.c.l.b16 %v177
  %v2197 = vunpack.c.l.b16 %v178
  %v2198 = vunpack.c.l.b16 %v186
  %v2199 = vunpack.c.l.b16 %v187
  %v2200 = vunpack.c.l.b16 %v189
  %v2201 = vunpack.c.l.b16 %v190
  %v2202 = vunpack.c.l.b16 %v192
  %v2203 = vunpack.c.l.b16 %v193
  %v2204 = vunpack.c.l.b16 %v195
  %v2205 = vunpack.c.l.b16 %v196
  %v2206 = vunpack.c.l.b16 %v198
  %v2207 = vunpack.c.l.b16 %v199
  %v2208 = vunpack.c.l.b16 %v201
  %v2209 = vunpack.c.l.b16 %v202
  %v2210 = vunpack.c.l.b16 %v204
  %v2211 = vunpack.c.l.b16 %v205
  %v2212 = vunpack.c.l.b16 %v207
  %v2213 = vunpack.c.l.b16 %v208
  %v2214 = vunpack.c.l.b16 %v210
  %v2215 = vunpack.c.l.b16 %v211
  %v2216 = vunpack.c.l.b16 %v213
  %v2217 = vunpack.c.l.b16 %v214
  %v2218 = vunpack.c.l.b16 %v216
  %v2219 = vunpack.c.l.b16 %v217
  %v2220 = vunpack.c.l.b16 %v219
  %v2221 = vunpack.c.l.b16 %v220
  %v2222 = vunpack.c.l.b16 %v222
  %v2223 = vunpack.c.l.b16 %v223
  %v2224 = vunpack.c.l.b16 %v225
  %v2225 = vunpack.c.l.b16 %v226
  %v2226 = vunpack.c.l.b16 %v228
  %v2227 = vunpack.c.l.b16 %v229
  %v2228 = vunpack.c.l.b16 %v231
  %v2229 = vunpack.c.l.b16 %v232
  %v2230 = vpack.c.b16 %v2167, %v2166
  %v2231 = vpack.c.b16 %v2169, %v2168
  %v2232 = vpack.c.b16 %v2171, %v2170
  %v2233 = vpack.c.b16 %v2173, %v2172
  %v2234 = vpack.c.b16 %v2175, %v2174
  %v2235 = vpack.c.b16 %v2177, %v2176
  %v2236 = vpack.c.b16 %v2179, %v2178
  %v2237 = vpack.c.b16 %v2181, %v2180
  %v2238 = vpack.c.b16 %v2183, %v2182
  %v2239 = vpack.c.b16 %v2185, %v2184
  %v2240 = vpack.c.b16 %v2187, %v2186
  %v2241 = vpack.c.b16 %v2189, %v2188
  %v2242 = vpack.c.b16 %v2191, %v2190
  %v2243 = vpack.c.b16 %v2193, %v2192
  %v2244 = vpack.c.b16 %v2195, %v2194
  %v2245 = vpack.c.b16 %v2197, %v2196
  %v2246 = vpack.c.b16 %v2199, %v2198
  %v2247 = vpack.c.b16 %v2201, %v2200
  %v2248 = vpack.c.b16 %v2203, %v2202
  %v2249 = vpack.c.b16 %v2205, %v2204
  %v2250 = vpack.c.b16 %v2207, %v2206
  %v2251 = vpack.c.b16 %v2209, %v2208
  %v2252 = vpack.c.b16 %v2211, %v2210
  %v2253 = vpack.c.b16 %v2213, %v2212
  %v2254 = vpack.c.b16 %v2215, %v2214
  %v2255 = vpack.c.b16 %v2217, %v2216
  %v2256 = vpack.c.b16 %v2219, %v2218
  %v2257 = vpack.c.b16 %v2221, %v2220
  %v2258 = vpack.c.b16 %v2223, %v2222
  %v2259 = vpack.c.b16 %v2225, %v2224
  %v2260 = vpack.c.b16 %v2227, %v2226
  %v2261 = vpack.c.b16 %v2229, %v2228
  %v2294 = vunpack.c.l.b16 %v134
  %v2295 = vunpack.c.l.b16 %v137
  %v2296 = vunpack.c.l.b16 %v140
  %v2297 = vunpack.c.l.b16 %v143
  %v2298 = vunpack.c.l.b16 %v146
  %v2299 = vunpack.c.l.b16 %v149
  %v2300 = vunpack.c.l.b16 %v152
  %v2301 = vunpack.c.l.b16 %v155
  %v2302 = vunpack.c.l.b16 %v158
  %v2303 = vunpack.c.l.b16 %v161
  %v2304 = vunpack.c.l.b16 %v164
  %v2305 = vunpack.c.l.b16 %v167
  %v2306 = vunpack.c.l.b16 %v170
  %v2307 = vunpack.c.l.b16 %v173
  %v2308 = vunpack.c.l.b16 %v176
  %v2309 = vunpack.c.l.b16 %v179
  %v2310 = vunpack.c.l.b16 %v188
  %v2311 = vunpack.c.l.b16 %v191
  %v2312 = vunpack.c.l.b16 %v194
  %v2313 = vunpack.c.l.b16 %v197
  %v2314 = vunpack.c.l.b16 %v200
  %v2315 = vunpack.c.l.b16 %v203
  %v2316 = vunpack.c.l.b16 %v206
  %v2317 = vunpack.c.l.b16 %v209
  %v2318 = vunpack.c.l.b16 %v212
  %v2319 = vunpack.c.l.b16 %v215
  %v2320 = vunpack.c.l.b16 %v218
  %v2321 = vunpack.c.l.b16 %v221
  %v2322 = vunpack.c.l.b16 %v224
  %v2323 = vunpack.c.l.b16 %v227
  %v2324 = vunpack.c.l.b16 %v230
  %v2325 = vunpack.c.l.b16 %v233
  %v2326 = vpack.c.b16 %v2294, %v2294
  %v2327 = vpack.c.b16 %v2295, %v2295
  %v2328 = vpack.c.b16 %v2296, %v2296
  %v2329 = vpack.c.b16 %v2297, %v2297
  %v2330 = vpack.c.b16 %v2298, %v2298
  %v2331 = vpack.c.b16 %v2299, %v2299
  %v2332 = vpack.c.b16 %v2300, %v2300
  %v2333 = vpack.c.b16 %v2301, %v2301
  %v2334 = vpack.c.b16 %v2302, %v2302
  %v2335 = vpack.c.b16 %v2303, %v2303
  %v2336 = vpack.c.b16 %v2304, %v2304
  %v2337 = vpack.c.b16 %v2305, %v2305
  %v2338 = vpack.c.b16 %v2306, %v2306
  %v2339 = vpack.c.b16 %v2307, %v2307
  %v2340 = vpack.c.b16 %v2308, %v2308
  %v2341 = vpack.c.b16 %v2309, %v2309
  %v2342 = vpack.c.b16 %v2310, %v2310
  %v2343 = vpack.c.b16 %v2311, %v2311
  %v2344 = vpack.c.b16 %v2312, %v2312
  %v2345 = vpack.c.b16 %v2313, %v2313
  %v2346 = vpack.c.b16 %v2314, %v2314
  %v2347 = vpack.c.b16 %v2315, %v2315
  %v2348 = vpack.c.b16 %v2316, %v2316
  %v2349 = vpack.c.b16 %v2317, %v2317
  %v2350 = vpack.c.b16 %v2318, %v2318
  %v2351 = vpack.c.b16 %v2319, %v2319
  %v2352 = vpack.c.b16 %v2320, %v2320
  %v2353 = vpack.c.b16 %v2321, %v2321
  %v2354 = vpack.c.b16 %v2322, %v2322
  %v2355 = vpack.c.b16 %v2323, %v2323
  %v2356 = vpack.c.b16 %v2324, %v2324
  %v2357 = vpack.c.b16 %v2325, %v2325
  %v2359 = vshrl.u32 %v2230, 16
  %v2361 = vshll.u32 %v2230, 16
  %v2363 = vrot.slane %v2361, 1
  %v2364 = vor.u32 %v2359, %v2363
  %v2366 = vshll.u32 %v2326, 16
  %v2368 = vrot.slane %v2366, 1
  %v2369 = vsel %vm496, %v2364, %v2368
  %v2371 = vshrl.u32 %v2231, 16
  %v2373 = vshll.u32 %v2231, 16
  %v2375 = vrot.slane %v2373, 1
  %v2376 = vor.u32 %v2371, %v2375
  %v2378 = vshll.u32 %v2327, 16
  %v2380 = vrot.slane %v2378, 1
  %v2381 = vsel %vm496, %v2376, %v2380
  %v2383 = vshrl.u32 %v2232, 16
  %v2385 = vshll.u32 %v2232, 16
  %v2387 = vrot.slane %v2385, 1
  %v2388 = vor.u32 %v2383, %v2387
  %v2390 = vshll.u32 %v2328, 16
  %v2392 = vrot.slane %v2390, 1
  %v2393 = vsel %vm496, %v2388, %v2392
  %v2395 = vshrl.u32 %v2233, 16
  %v2397 = vshll.u32 %v2233, 16
  %v2399 = vrot.slane %v2397, 1
  %v2400 = vor.u32 %v2395, %v2399
  %v2402 = vshll.u32 %v2329, 16
  %v2404 = vrot.slane %v2402, 1
  %v2405 = vsel %vm496, %v2400, %v2404
  %v2407 = vshrl.u32 %v2234, 16
  %v2409 = vshll.u32 %v2234, 16
  %v2411 = vrot.slane %v2409, 1
  %v2412 = vor.u32 %v2407, %v2411
  %v2414 = vshll.u32 %v2330, 16
  %v2416 = vrot.slane %v2414, 1
  %v2417 = vsel %vm496, %v2412, %v2416
  %v2419 = vshrl.u32 %v2235, 16
  %v2421 = vshll.u32 %v2235, 16
  %v2423 = vrot.slane %v2421, 1
  %v2424 = vor.u32 %v2419, %v2423
  %v2426 = vshll.u32 %v2331, 16
  %v2428 = vrot.slane %v2426, 1
  %v2429 = vsel %vm496, %v2424, %v2428
  %v2431 = vshrl.u32 %v2236, 16
  %v2433 = vshll.u32 %v2236, 16
  %v2435 = vrot.slane %v2433, 1
  %v2436 = vor.u32 %v2431, %v2435
  %v2438 = vshll.u32 %v2332, 16
  %v2440 = vrot.slane %v2438, 1
  %v2441 = vsel %vm496, %v2436, %v2440
  %v2443 = vshrl.u32 %v2237, 16
  %v2445 = vshll.u32 %v2237, 16
  %v2447 = vrot.slane %v2445, 1
  %v2448 = vor.u32 %v2443, %v2447
  %v2450 = vshll.u32 %v2333, 16
  %v2452 = vrot.slane %v2450, 1
  %v2453 = vsel %vm496, %v2448, %v2452
  %v2455 = vshrl.u32 %v2238, 16
  %v2457 = vshll.u32 %v2238, 16
  %v2459 = vrot.slane %v2457, 1
  %v2460 = vor.u32 %v2455, %v2459
  %v2462 = vshll.u32 %v2334, 16
  %v2464 = vrot.slane %v2462, 1
  %v2465 = vsel %vm496, %v2460, %v2464
  %v2467 = vshrl.u32 %v2239, 16
  %v2469 = vshll.u32 %v2239, 16
  %v2471 = vrot.slane %v2469, 1
  %v2472 = vor.u32 %v2467, %v2471
  %v2474 = vshll.u32 %v2335, 16
  %v2476 = vrot.slane %v2474, 1
  %v2477 = vsel %vm496, %v2472, %v2476
  %v2479 = vshrl.u32 %v2240, 16
  %v2481 = vshll.u32 %v2240, 16
  %v2483 = vrot.slane %v2481, 1
  %v2484 = vor.u32 %v2479, %v2483
  %v2486 = vshll.u32 %v2336, 16
  %v2488 = vrot.slane %v2486, 1
  %v2489 = vsel %vm496, %v2484, %v2488
  %v2491 = vshrl.u32 %v2241, 16
  %v2493 = vshll.u32 %v2241, 16
  %v2495 = vrot.slane %v2493, 1
  %v2496 = vor.u32 %v2491, %v2495
  %v2498 = vshll.u32 %v2337, 16
  %v2500 = vrot.slane %v2498, 1
  %v2501 = vsel %vm496, %v2496, %v2500
  %v2503 = vshrl.u32 %v2242, 16
  %v2505 = vshll.u32 %v2242, 16
  %v2507 = vrot.slane %v2505, 1
  %v2508 = vor.u32 %v2503, %v2507
  %v2510 = vshll.u32 %v2338, 16
  %v2512 = vrot.slane %v2510, 1
  %v2513 = vsel %vm496, %v2508, %v2512
  %v2515 = vshrl.u32 %v2243, 16
  %v2517 = vshll.u32 %v2243, 16
  %v2519 = vrot.slane %v2517, 1
  %v2520 = vor.u32 %v2515, %v2519
  %v2522 = vshll.u32 %v2339, 16
  %v2524 = vrot.slane %v2522, 1
  %v2525 = vsel %vm496, %v2520, %v2524
  %v2527 = vshrl.u32 %v2244, 16
  %v2529 = vshll.u32 %v2244, 16
  %v2531 = vrot.slane %v2529, 1
  %v2532 = vor.u32 %v2527, %v2531
  %v2534 = vshll.u32 %v2340, 16
  %v2536 = vrot.slane %v2534, 1
  %v2537 = vsel %vm496, %v2532, %v2536
  %v2539 = vshrl.u32 %v2245, 16
  %v2541 = vshll.u32 %v2245, 16
  %v2543 = vrot.slane %v2541, 1
  %v2544 = vor.u32 %v2539, %v2543
  %v2546 = vshll.u32 %v2341, 16
  %v2548 = vrot.slane %v2546, 1
  %v2549 = vsel %vm496, %v2544, %v2548
  %v2551 = vshrl.u32 %v2246, 16
  %v2553 = vshll.u32 %v2246, 16
  %v2555 = vrot.slane %v2553, 1
  %v2556 = vor.u32 %v2551, %v2555
  %v2558 = vshll.u32 %v2342, 16
  %v2560 = vrot.slane %v2558, 1
  %v2561 = vsel %vm496, %v2556, %v2560
  %v2563 = vshrl.u32 %v2247, 16
  %v2565 = vshll.u32 %v2247, 16
  %v2567 = vrot.slane %v2565, 1
  %v2568 = vor.u32 %v2563, %v2567
  %v2570 = vshll.u32 %v2343, 16
  %v2572 = vrot.slane %v2570, 1
  %v2573 = vsel %vm496, %v2568, %v2572
  %v2575 = vshrl.u32 %v2248, 16
  %v2577 = vshll.u32 %v2248, 16
  %v2579 = vrot.slane %v2577, 1
  %v2580 = vor.u32 %v2575, %v2579
  %v2582 = vshll.u32 %v2344, 16
  %v2584 = vrot.slane %v2582, 1
  %v2585 = vsel %vm496, %v2580, %v2584
  %v2587 = vshrl.u32 %v2249, 16
  %v2589 = vshll.u32 %v2249, 16
  %v2591 = vrot.slane %v2589, 1
  %v2592 = vor.u32 %v2587, %v2591
  %v2594 = vshll.u32 %v2345, 16
  %v2596 = vrot.slane %v2594, 1
  %v2597 = vsel %vm496, %v2592, %v2596
  %v2599 = vshrl.u32 %v2250, 16
  %v2601 = vshll.u32 %v2250, 16
  %v2603 = vrot.slane %v2601, 1
  %v2604 = vor.u32 %v2599, %v2603
  %v2606 = vshll.u32 %v2346, 16
  %v2608 = vrot.slane %v2606, 1
  %v2609 = vsel %vm496, %v2604, %v2608
  %v2611 = vshrl.u32 %v2251, 16
  %v2613 = vshll.u32 %v2251, 16
  %v2615 = vrot.slane %v2613, 1
  %v2616 = vor.u32 %v2611, %v2615
  %v2618 = vshll.u32 %v2347, 16
  %v2620 = vrot.slane %v2618, 1
  %v2621 = vsel %vm496, %v2616, %v2620
  %v2623 = vshrl.u32 %v2252, 16
  %v2625 = vshll.u32 %v2252, 16
  %v2627 = vrot.slane %v2625, 1
  %v2628 = vor.u32 %v2623, %v2627
  %v2630 = vshll.u32 %v2348, 16
  %v2632 = vrot.slane %v2630, 1
  %v2633 = vsel %vm496, %v2628, %v2632
  %v2635 = vshrl.u32 %v2253, 16
  %v2637 = vshll.u32 %v2253, 16
  %v2639 = vrot.slane %v2637, 1
  %v2640 = vor.u32 %v2635, %v2639
  %v2642 = vshll.u32 %v2349, 16
  %v2644 = vrot.slane %v2642, 1
  %v2645 = vsel %vm496, %v2640, %v2644
  %v2647 = vshrl.u32 %v2254, 16
  %v2649 = vshll.u32 %v2254, 16
  %v2651 = vrot.slane %v2649, 1
  %v2652 = vor.u32 %v2647, %v2651
  %v2654 = vshll.u32 %v2350, 16
  %v2656 = vrot.slane %v2654, 1
  %v2657 = vsel %vm496, %v2652, %v2656
  %v2659 = vshrl.u32 %v2255, 16
  %v2661 = vshll.u32 %v2255, 16
  %v2663 = vrot.slane %v2661, 1
  %v2664 = vor.u32 %v2659, %v2663
  %v2666 = vshll.u32 %v2351, 16
  %v2668 = vrot.slane %v2666, 1
  %v2669 = vsel %vm496, %v2664, %v2668
  %v2671 = vshrl.u32 %v2256, 16
  %v2673 = vshll.u32 %v2256, 16
  %v2675 = vrot.slane %v2673, 1
  %v2676 = vor.u32 %v2671, %v2675
  %v2678 = vshll.u32 %v2352, 16
  %v2680 = vrot.slane %v2678, 1
  %v2681 = vsel %vm496, %v2676, %v2680
  %v2683 = vshrl.u32 %v2257, 16
  %v2685 = vshll.u32 %v2257, 16
  %v2687 = vrot.slane %v2685, 1
  %v2688 = vor.u32 %v2683, %v2687
  %v2690 = vshll.u32 %v2353, 16
  %v2692 = vrot.slane %v2690, 1
  %v2693 = vsel %vm496, %v2688, %v2692
  %v2695 = vshrl.u32 %v2258, 16
  %v2697 = vshll.u32 %v2258, 16
  %v2699 = vrot.slane %v2697, 1
  %v2700 = vor.u32 %v2695, %v2699
  %v2702 = vshll.u32 %v2354, 16
  %v2704 = vrot.slane %v2702, 1
  %v2705 = vsel %vm496, %v2700, %v2704
  %v2707 = vshrl.u32 %v2259, 16
  %v2709 = vshll.u32 %v2259, 16
  %v2711 = vrot.slane %v2709, 1
  %v2712 = vor.u32 %v2707, %v2711
  %v2714 = vshll.u32 %v2355, 16
  %v2716 = vrot.slane %v2714, 1
  %v2717 = vsel %vm496, %v2712, %v2716
  %v2719 = vshrl.u32 %v2260, 16
  %v2721 = vshll.u32 %v2260, 16
  %v2723 = vrot.slane %v2721, 1
  %v2724 = vor.u32 %v2719, %v2723
  %v2726 = vshll.u32 %v2356, 16
  %v2728 = vrot.slane %v2726, 1
  %v2729 = vsel %vm496, %v2724, %v2728
  %v2731 = vshrl.u32 %v2261, 16
  %v2733 = vshll.u32 %v2261, 16
  %v2735 = vrot.slane %v2733, 1
  %v2736 = vor.u32 %v2731, %v2735
  %v2738 = vshll.u32 %v2357, 16
  %v2740 = vrot.slane %v2738, 1
  %v2741 = vsel %vm496, %v2736, %v2740
  %2742 = vrot.lane.b32.xlu0 %v2369, 32
  %v2743 = vpop.permute.xlu0 %2742
  %2744 = vrot.lane.b32.xlu0 %v2381, 32
  %v2745 = vpop.permute.xlu0 %2744
  %2746 = vrot.lane.b32.xlu0 %v2393, 32
  %v2747 = vpop.permute.xlu0 %2746
  %2748 = vrot.lane.b32.xlu0 %v2405, 32
  %v2749 = vpop.permute.xlu0 %2748
  %2750 = vrot.lane.b32.xlu0 %v2417, 32
  %v2751 = vpop.permute.xlu0 %2750
  %2752 = vrot.lane.b32.xlu0 %v2429, 32
  %v2753 = vpop.permute.xlu0 %2752
  %2754 = vrot.lane.b32.xlu0 %v2441, 32
  %v2755 = vpop.permute.xlu0 %2754
  %2756 = vrot.lane.b32.xlu0 %v2453, 32
  %v2757 = vpop.permute.xlu0 %2756
  %2758 = vrot.lane.b32.xlu0 %v2465, 32
  %v2759 = vpop.permute.xlu0 %2758
  %2760 = vrot.lane.b32.xlu0 %v2477, 32
  %v2761 = vpop.permute.xlu0 %2760
  %2762 = vrot.lane.b32.xlu0 %v2489, 32
  %v2763 = vpop.permute.xlu0 %2762
  %2764 = vrot.lane.b32.xlu0 %v2501, 32
  %v2765 = vpop.permute.xlu0 %2764
  %2766 = vrot.lane.b32.xlu0 %v2513, 32
  %v2767 = vpop.permute.xlu0 %2766
  %2768 = vrot.lane.b32.xlu0 %v2525, 32
  %v2769 = vpop.permute.xlu0 %2768
  %2770 = vrot.lane.b32.xlu0 %v2537, 32
  %v2771 = vpop.permute.xlu0 %2770
  %2772 = vrot.lane.b32.xlu0 %v2549, 32
  %v2773 = vpop.permute.xlu0 %2772
  %2774 = vrot.lane.b32.xlu0 %v2561, 32
  %v2775 = vpop.permute.xlu0 %2774
  %2776 = vrot.lane.b32.xlu0 %v2573, 32
  %v2777 = vpop.permute.xlu0 %2776
  %2778 = vrot.lane.b32.xlu0 %v2585, 32
  %v2779 = vpop.permute.xlu0 %2778
  %2780 = vrot.lane.b32.xlu0 %v2597, 32
  %v2781 = vpop.permute.xlu0 %2780
  %2782 = vrot.lane.b32.xlu0 %v2609, 32
  %v2783 = vpop.permute.xlu0 %2782
  %2784 = vrot.lane.b32.xlu0 %v2621, 32
  %v2785 = vpop.permute.xlu0 %2784
  %2786 = vrot.lane.b32.xlu0 %v2633, 32
  %v2787 = vpop.permute.xlu0 %2786
  %2788 = vrot.lane.b32.xlu0 %v2645, 32
  %v2789 = vpop.permute.xlu0 %2788
  %2790 = vrot.lane.b32.xlu0 %v2657, 32
  %v2791 = vpop.permute.xlu0 %2790
  %2792 = vrot.lane.b32.xlu0 %v2669, 32
  %v2793 = vpop.permute.xlu0 %2792
  %2794 = vrot.lane.b32.xlu0 %v2681, 32
  %v2795 = vpop.permute.xlu0 %2794
  %2796 = vrot.lane.b32.xlu0 %v2693, 32
  %v2797 = vpop.permute.xlu0 %2796
  %2798 = vrot.lane.b32.xlu0 %v2705, 32
  %v2799 = vpop.permute.xlu0 %2798
  %2800 = vrot.lane.b32.xlu0 %v2717, 32
  %v2801 = vpop.permute.xlu0 %2800
  %2802 = vrot.lane.b32.xlu0 %v2729, 32
  %v2803 = vpop.permute.xlu0 %2802
  %2804 = vrot.lane.b32.xlu0 %v2741, 32
  %v2805 = vpop.permute.xlu0 %2804
  %v2806 = vrot.slane %v2230, 1
  %v2807 = vrot.slane %v2326, 1
  %v2808 = vsel %vm945, %v2806, %v2807
  %v2809 = vrot.slane %v2231, 1
  %v2810 = vrot.slane %v2327, 1
  %v2811 = vsel %vm945, %v2809, %v2810
  %v2812 = vrot.slane %v2232, 1
  %v2813 = vrot.slane %v2328, 1
  %v2814 = vsel %vm945, %v2812, %v2813
  %v2815 = vrot.slane %v2233, 1
  %v2816 = vrot.slane %v2329, 1
  %v2817 = vsel %vm945, %v2815, %v2816
  %v2818 = vrot.slane %v2234, 1
  %v2819 = vrot.slane %v2330, 1
  %v2820 = vsel %vm945, %v2818, %v2819
  %v2821 = vrot.slane %v2235, 1
  %v2822 = vrot.slane %v2331, 1
  %v2823 = vsel %vm945, %v2821, %v2822
  %v2824 = vrot.slane %v2236, 1
  %v2825 = vrot.slane %v2332, 1
  %v2826 = vsel %vm945, %v2824, %v2825
  %v2827 = vrot.slane %v2237, 1
  %v2828 = vrot.slane %v2333, 1
  %v2829 = vsel %vm945, %v2827, %v2828
  %v2830 = vrot.slane %v2238, 1
  %v2831 = vrot.slane %v2334, 1
  %v2832 = vsel %vm945, %v2830, %v2831
  %v2833 = vrot.slane %v2239, 1
  %v2834 = vrot.slane %v2335, 1
  %v2835 = vsel %vm945, %v2833, %v2834
  %v2836 = vrot.slane %v2240, 1
  %v2837 = vrot.slane %v2336, 1
  %v2838 = vsel %vm945, %v2836, %v2837
  %v2839 = vrot.slane %v2241, 1
  %v2840 = vrot.slane %v2337, 1
  %v2841 = vsel %vm945, %v2839, %v2840
  %v2842 = vrot.slane %v2242, 1
  %v2843 = vrot.slane %v2338, 1
  %v2844 = vsel %vm945, %v2842, %v2843
  %v2845 = vrot.slane %v2243, 1
  %v2846 = vrot.slane %v2339, 1
  %v2847 = vsel %vm945, %v2845, %v2846
  %v2848 = vrot.slane %v2244, 1
  %v2849 = vrot.slane %v2340, 1
  %v2850 = vsel %vm945, %v2848, %v2849
  %v2851 = vrot.slane %v2245, 1
  %v2852 = vrot.slane %v2341, 1
  %v2853 = vsel %vm945, %v2851, %v2852
  %v2854 = vrot.slane %v2246, 1
  %v2855 = vrot.slane %v2342, 1
  %v2856 = vsel %vm945, %v2854, %v2855
  %v2857 = vrot.slane %v2247, 1
  %v2858 = vrot.slane %v2343, 1
  %v2859 = vsel %vm945, %v2857, %v2858
  %v2860 = vrot.slane %v2248, 1
  %v2861 = vrot.slane %v2344, 1
  %v2862 = vsel %vm945, %v2860, %v2861
  %v2863 = vrot.slane %v2249, 1
  %v2864 = vrot.slane %v2345, 1
  %v2865 = vsel %vm945, %v2863, %v2864
  %v2866 = vrot.slane %v2250, 1
  %v2867 = vrot.slane %v2346, 1
  %v2868 = vsel %vm945, %v2866, %v2867
  %v2869 = vrot.slane %v2251, 1
  %v2870 = vrot.slane %v2347, 1
  %v2871 = vsel %vm945, %v2869, %v2870
  %v2872 = vrot.slane %v2252, 1
  %v2873 = vrot.slane %v2348, 1
  %v2874 = vsel %vm945, %v2872, %v2873
  %v2875 = vrot.slane %v2253, 1
  %v2876 = vrot.slane %v2349, 1
  %v2877 = vsel %vm945, %v2875, %v2876
  %v2878 = vrot.slane %v2254, 1
  %v2879 = vrot.slane %v2350, 1
  %v2880 = vsel %vm945, %v2878, %v2879
  %v2881 = vrot.slane %v2255, 1
  %v2882 = vrot.slane %v2351, 1
  %v2883 = vsel %vm945, %v2881, %v2882
  %v2884 = vrot.slane %v2256, 1
  %v2885 = vrot.slane %v2352, 1
  %v2886 = vsel %vm945, %v2884, %v2885
  %v2887 = vrot.slane %v2257, 1
  %v2888 = vrot.slane %v2353, 1
  %v2889 = vsel %vm945, %v2887, %v2888
  %v2890 = vrot.slane %v2258, 1
  %v2891 = vrot.slane %v2354, 1
  %v2892 = vsel %vm945, %v2890, %v2891
  %v2893 = vrot.slane %v2259, 1
  %v2894 = vrot.slane %v2355, 1
  %v2895 = vsel %vm945, %v2893, %v2894
  %v2896 = vrot.slane %v2260, 1
  %v2897 = vrot.slane %v2356, 1
  %v2898 = vsel %vm945, %v2896, %v2897
  %v2899 = vrot.slane %v2261, 1
  %v2900 = vrot.slane %v2357, 1
  %v2901 = vsel %vm945, %v2899, %v2900
  %2902 = vrot.lane.b32.xlu0 %v2808, 64
  %v2903 = vpop.permute.xlu0 %2902
  %2904 = vrot.lane.b32.xlu0 %v2811, 64
  %v2905 = vpop.permute.xlu0 %2904
  %2906 = vrot.lane.b32.xlu0 %v2814, 64
  %v2907 = vpop.permute.xlu0 %2906
  %2908 = vrot.lane.b32.xlu0 %v2817, 64
  %v2909 = vpop.permute.xlu0 %2908
  %2910 = vrot.lane.b32.xlu0 %v2820, 64
  %v2911 = vpop.permute.xlu0 %2910
  %2912 = vrot.lane.b32.xlu0 %v2823, 64
  %v2913 = vpop.permute.xlu0 %2912
  %2914 = vrot.lane.b32.xlu0 %v2826, 64
  %v2915 = vpop.permute.xlu0 %2914
  %2916 = vrot.lane.b32.xlu0 %v2829, 64
  %v2917 = vpop.permute.xlu0 %2916
  %2918 = vrot.lane.b32.xlu0 %v2832, 64
  %v2919 = vpop.permute.xlu0 %2918
  %2920 = vrot.lane.b32.xlu0 %v2835, 64
  %v2921 = vpop.permute.xlu0 %2920
  %2922 = vrot.lane.b32.xlu0 %v2838, 64
  %v2923 = vpop.permute.xlu0 %2922
  %2924 = vrot.lane.b32.xlu0 %v2841, 64
  %v2925 = vpop.permute.xlu0 %2924
  %2926 = vrot.lane.b32.xlu0 %v2844, 64
  %v2927 = vpop.permute.xlu0 %2926
  %2928 = vrot.lane.b32.xlu0 %v2847, 64
  %v2929 = vpop.permute.xlu0 %2928
  %2930 = vrot.lane.b32.xlu0 %v2850, 64
  %v2931 = vpop.permute.xlu0 %2930
  %2932 = vrot.lane.b32.xlu0 %v2853, 64
  %v2933 = vpop.permute.xlu0 %2932
  %2934 = vrot.lane.b32.xlu0 %v2856, 64
  %v2935 = vpop.permute.xlu0 %2934
  %2936 = vrot.lane.b32.xlu0 %v2859, 64
  %v2937 = vpop.permute.xlu0 %2936
  %2938 = vrot.lane.b32.xlu0 %v2862, 64
  %v2939 = vpop.permute.xlu0 %2938
  %2940 = vrot.lane.b32.xlu0 %v2865, 64
  %v2941 = vpop.permute.xlu0 %2940
  %2942 = vrot.lane.b32.xlu0 %v2868, 64
  %v2943 = vpop.permute.xlu0 %2942
  %2944 = vrot.lane.b32.xlu0 %v2871, 64
  %v2945 = vpop.permute.xlu0 %2944
  %2946 = vrot.lane.b32.xlu0 %v2874, 64
  %v2947 = vpop.permute.xlu0 %2946
  %2948 = vrot.lane.b32.xlu0 %v2877, 64
  %v2949 = vpop.permute.xlu0 %2948
  %2950 = vrot.lane.b32.xlu0 %v2880, 64
  %v2951 = vpop.permute.xlu0 %2950
  %2952 = vrot.lane.b32.xlu0 %v2883, 64
  %v2953 = vpop.permute.xlu0 %2952
  %2954 = vrot.lane.b32.xlu0 %v2886, 64
  %v2955 = vpop.permute.xlu0 %2954
  %2956 = vrot.lane.b32.xlu0 %v2889, 64
  %v2957 = vpop.permute.xlu0 %2956
  %2958 = vrot.lane.b32.xlu0 %v2892, 64
  %v2959 = vpop.permute.xlu0 %2958
  %2960 = vrot.lane.b32.xlu0 %v2895, 64
  %v2961 = vpop.permute.xlu0 %2960
  %2962 = vrot.lane.b32.xlu0 %v2898, 64
  %v2963 = vpop.permute.xlu0 %2962
  %2964 = vrot.lane.b32.xlu0 %v2901, 64
  %v2965 = vpop.permute.xlu0 %2964
  %v2970 = vunpack.c.l.b16 %v180
  %v2971 = vunpack.c.l.b16 %v181
  %v2972 = vunpack.c.l.b16 %v234
  %v2973 = vunpack.c.l.b16 %v235
  %v2974 = vpack.c.b16 %v2971, %v2970
  %v2975 = vpack.c.b16 %v2973, %v2972
  %2976 = vrot.lane.b32.xlu0 %v2231, 96
  %v2977 = vpop.permute.xlu0 %2976
  %2978 = vrot.lane.b32.xlu0 %v2232, 96
  %v2979 = vpop.permute.xlu0 %2978
  %2980 = vrot.lane.b32.xlu0 %v2233, 96
  %v2981 = vpop.permute.xlu0 %2980
  %2982 = vrot.lane.b32.xlu0 %v2234, 96
  %v2983 = vpop.permute.xlu0 %2982
  %2984 = vrot.lane.b32.xlu0 %v2235, 96
  %v2985 = vpop.permute.xlu0 %2984
  %2986 = vrot.lane.b32.xlu0 %v2236, 96
  %v2987 = vpop.permute.xlu0 %2986
  %2988 = vrot.lane.b32.xlu0 %v2237, 96
  %v2989 = vpop.permute.xlu0 %2988
  %2990 = vrot.lane.b32.xlu0 %v2238, 96
  %v2991 = vpop.permute.xlu0 %2990
  %2992 = vrot.lane.b32.xlu0 %v2239, 96
  %v2993 = vpop.permute.xlu0 %2992
  %2994 = vrot.lane.b32.xlu0 %v2240, 96
  %v2995 = vpop.permute.xlu0 %2994
  %2996 = vrot.lane.b32.xlu0 %v2241, 96
  %v2997 = vpop.permute.xlu0 %2996
  %2998 = vrot.lane.b32.xlu0 %v2242, 96
  %v2999 = vpop.permute.xlu0 %2998
  %3000 = vrot.lane.b32.xlu0 %v2243, 96
  %v3001 = vpop.permute.xlu0 %3000
  %3002 = vrot.lane.b32.xlu0 %v2244, 96
  %v3003 = vpop.permute.xlu0 %3002
  %3004 = vrot.lane.b32.xlu0 %v2245, 96
  %v3005 = vpop.permute.xlu0 %3004
  %3006 = vrot.lane.b32.xlu0 %v2974, 96
  %v3007 = vpop.permute.xlu0 %3006
  %3008 = vrot.lane.b32.xlu0 %v2247, 96
  %v3009 = vpop.permute.xlu0 %3008
  %3010 = vrot.lane.b32.xlu0 %v2248, 96
  %v3011 = vpop.permute.xlu0 %3010
  %3012 = vrot.lane.b32.xlu0 %v2249, 96
  %v3013 = vpop.permute.xlu0 %3012
  %3014 = vrot.lane.b32.xlu0 %v2250, 96
  %v3015 = vpop.permute.xlu0 %3014
  %3016 = vrot.lane.b32.xlu0 %v2251, 96
  %v3017 = vpop.permute.xlu0 %3016
  %3018 = vrot.lane.b32.xlu0 %v2252, 96
  %v3019 = vpop.permute.xlu0 %3018
  %3020 = vrot.lane.b32.xlu0 %v2253, 96
  %v3021 = vpop.permute.xlu0 %3020
  %3022 = vrot.lane.b32.xlu0 %v2254, 96
  %v3023 = vpop.permute.xlu0 %3022
  %3024 = vrot.lane.b32.xlu0 %v2255, 96
  %v3025 = vpop.permute.xlu0 %3024
  %3026 = vrot.lane.b32.xlu0 %v2256, 96
  %v3027 = vpop.permute.xlu0 %3026
  %3028 = vrot.lane.b32.xlu0 %v2257, 96
  %v3029 = vpop.permute.xlu0 %3028
  %3030 = vrot.lane.b32.xlu0 %v2258, 96
  %v3031 = vpop.permute.xlu0 %3030
  %3032 = vrot.lane.b32.xlu0 %v2259, 96
  %v3033 = vpop.permute.xlu0 %3032
  %3034 = vrot.lane.b32.xlu0 %v2260, 96
  %v3035 = vpop.permute.xlu0 %3034
  %3036 = vrot.lane.b32.xlu0 %v2261, 96
  %v3037 = vpop.permute.xlu0 %3036
  %3038 = vrot.lane.b32.xlu0 %v2975, 96
  %v3039 = vpop.permute.xlu0 %3038
  %v3042 = vunpack.c.l.b16 %v182
  %v3043 = vunpack.c.l.b16 %v236
  %v3044 = vpack.c.b16 %v3042, %v3042
  %v3045 = vpack.c.b16 %v3043, %v3043
  %v3047 = vshrl.u32 %v2974, 16
  %v3049 = vshll.u32 %v2974, 16
  %v3051 = vrot.slane %v3049, 1
  %v3052 = vor.u32 %v3047, %v3051
  %v3054 = vshll.u32 %v3044, 16
  %v3056 = vrot.slane %v3054, 1
  %v3057 = vsel %vm496, %v3052, %v3056
  %v3059 = vshrl.u32 %v2975, 16
  %v3061 = vshll.u32 %v2975, 16
  %v3063 = vrot.slane %v3061, 1
  %v3064 = vor.u32 %v3059, %v3063
  %v3066 = vshll.u32 %v3045, 16
  %v3068 = vrot.slane %v3066, 1
  %v3069 = vsel %vm496, %v3064, %v3068
  %v3070 = vrot.slane %v2974, 1
  %v3071 = vrot.slane %v3044, 1
  %v3072 = vsel %vm945, %v3070, %v3071
  %v3073 = vrot.slane %v2975, 1
  %v3074 = vrot.slane %v3045, 1
  %v3075 = vsel %vm945, %v3073, %v3074
  %3076 = vrot.lane.b32.xlu0 %v2811, 32
  %v3077 = vpop.permute.xlu0 %3076
  %3078 = vrot.lane.b32.xlu0 %v2814, 32
  %v3079 = vpop.permute.xlu0 %3078
  %3080 = vrot.lane.b32.xlu0 %v2817, 32
  %v3081 = vpop.permute.xlu0 %3080
  %3082 = vrot.lane.b32.xlu0 %v2820, 32
  %v3083 = vpop.permute.xlu0 %3082
  %3084 = vrot.lane.b32.xlu0 %v2823, 32
  %v3085 = vpop.permute.xlu0 %3084
  %3086 = vrot.lane.b32.xlu0 %v2826, 32
  %v3087 = vpop.permute.xlu0 %3086
  %3088 = vrot.lane.b32.xlu0 %v2829, 32
  %v3089 = vpop.permute.xlu0 %3088
  %3090 = vrot.lane.b32.xlu0 %v2832, 32
  %v3091 = vpop.permute.xlu0 %3090
  %3092 = vrot.lane.b32.xlu0 %v2835, 32
  %v3093 = vpop.permute.xlu0 %3092
  %3094 = vrot.lane.b32.xlu0 %v2838, 32
  %v3095 = vpop.permute.xlu0 %3094
  %3096 = vrot.lane.b32.xlu0 %v2841, 32
  %v3097 = vpop.permute.xlu0 %3096
  %3098 = vrot.lane.b32.xlu0 %v2844, 32
  %v3099 = vpop.permute.xlu0 %3098
  %3100 = vrot.lane.b32.xlu0 %v2847, 32
  %v3101 = vpop.permute.xlu0 %3100
  %3102 = vrot.lane.b32.xlu0 %v2850, 32
  %v3103 = vpop.permute.xlu0 %3102
  %3104 = vrot.lane.b32.xlu0 %v2853, 32
  %v3105 = vpop.permute.xlu0 %3104
  %3106 = vrot.lane.b32.xlu0 %v3072, 32
  %v3107 = vpop.permute.xlu0 %3106
  %3108 = vrot.lane.b32.xlu0 %v2859, 32
  %v3109 = vpop.permute.xlu0 %3108
  %3110 = vrot.lane.b32.xlu0 %v2862, 32
  %v3111 = vpop.permute.xlu0 %3110
  %3112 = vrot.lane.b32.xlu0 %v2865, 32
  %v3113 = vpop.permute.xlu0 %3112
  %3114 = vrot.lane.b32.xlu0 %v2868, 32
  %v3115 = vpop.permute.xlu0 %3114
  %3116 = vrot.lane.b32.xlu0 %v2871, 32
  %v3117 = vpop.permute.xlu0 %3116
  %3118 = vrot.lane.b32.xlu0 %v2874, 32
  %v3119 = vpop.permute.xlu0 %3118
  %3120 = vrot.lane.b32.xlu0 %v2877, 32
  %v3121 = vpop.permute.xlu0 %3120
  %3122 = vrot.lane.b32.xlu0 %v2880, 32
  %v3123 = vpop.permute.xlu0 %3122
  %3124 = vrot.lane.b32.xlu0 %v2883, 32
  %v3125 = vpop.permute.xlu0 %3124
  %3126 = vrot.lane.b32.xlu0 %v2886, 32
  %v3127 = vpop.permute.xlu0 %3126
  %3128 = vrot.lane.b32.xlu0 %v2889, 32
  %v3129 = vpop.permute.xlu0 %3128
  %3130 = vrot.lane.b32.xlu0 %v2892, 32
  %v3131 = vpop.permute.xlu0 %3130
  %3132 = vrot.lane.b32.xlu0 %v2895, 32
  %v3133 = vpop.permute.xlu0 %3132
  %3134 = vrot.lane.b32.xlu0 %v2898, 32
  %v3135 = vpop.permute.xlu0 %3134
  %3136 = vrot.lane.b32.xlu0 %v2901, 32
  %v3137 = vpop.permute.xlu0 %3136
  %3138 = vrot.lane.b32.xlu0 %v3075, 32
  %v3139 = vpop.permute.xlu0 %3138
  %v3144 = vunpack.c.l.b16 %v183
  %v3145 = vunpack.c.l.b16 %v184
  %v3146 = vunpack.c.l.b16 %v237
  %v3147 = vunpack.c.l.b16 %v238
  %v3148 = vpack.c.b16 %v3145, %v3144
  %v3149 = vpack.c.b16 %v3147, %v3146
  %3150 = vrot.lane.b32.xlu0 %v2232, 64
  %v3151 = vpop.permute.xlu0 %3150
  %3152 = vrot.lane.b32.xlu0 %v2233, 64
  %v3153 = vpop.permute.xlu0 %3152
  %3154 = vrot.lane.b32.xlu0 %v2234, 64
  %v3155 = vpop.permute.xlu0 %3154
  %3156 = vrot.lane.b32.xlu0 %v2235, 64
  %v3157 = vpop.permute.xlu0 %3156
  %3158 = vrot.lane.b32.xlu0 %v2236, 64
  %v3159 = vpop.permute.xlu0 %3158
  %3160 = vrot.lane.b32.xlu0 %v2237, 64
  %v3161 = vpop.permute.xlu0 %3160
  %3162 = vrot.lane.b32.xlu0 %v2238, 64
  %v3163 = vpop.permute.xlu0 %3162
  %3164 = vrot.lane.b32.xlu0 %v2239, 64
  %v3165 = vpop.permute.xlu0 %3164
  %3166 = vrot.lane.b32.xlu0 %v2240, 64
  %v3167 = vpop.permute.xlu0 %3166
  %3168 = vrot.lane.b32.xlu0 %v2241, 64
  %v3169 = vpop.permute.xlu0 %3168
  %3170 = vrot.lane.b32.xlu0 %v2242, 64
  %v3171 = vpop.permute.xlu0 %3170
  %3172 = vrot.lane.b32.xlu0 %v2243, 64
  %v3173 = vpop.permute.xlu0 %3172
  %3174 = vrot.lane.b32.xlu0 %v2244, 64
  %v3175 = vpop.permute.xlu0 %3174
  %3176 = vrot.lane.b32.xlu0 %v2245, 64
  %v3177 = vpop.permute.xlu0 %3176
  %3178 = vrot.lane.b32.xlu0 %v2974, 64
  %v3179 = vpop.permute.xlu0 %3178
  %3180 = vrot.lane.b32.xlu0 %v3148, 64
  %v3181 = vpop.permute.xlu0 %3180
  %3182 = vrot.lane.b32.xlu0 %v2248, 64
  %v3183 = vpop.permute.xlu0 %3182
  %3184 = vrot.lane.b32.xlu0 %v2249, 64
  %v3185 = vpop.permute.xlu0 %3184
  %3186 = vrot.lane.b32.xlu0 %v2250, 64
  %v3187 = vpop.permute.xlu0 %3186
  %3188 = vrot.lane.b32.xlu0 %v2251, 64
  %v3189 = vpop.permute.xlu0 %3188
  %3190 = vrot.lane.b32.xlu0 %v2252, 64
  %v3191 = vpop.permute.xlu0 %3190
  %3192 = vrot.lane.b32.xlu0 %v2253, 64
  %v3193 = vpop.permute.xlu0 %3192
  %3194 = vrot.lane.b32.xlu0 %v2254, 64
  %v3195 = vpop.permute.xlu0 %3194
  %3196 = vrot.lane.b32.xlu0 %v2255, 64
  %v3197 = vpop.permute.xlu0 %3196
  %3198 = vrot.lane.b32.xlu0 %v2256, 64
  %v3199 = vpop.permute.xlu0 %3198
  %3200 = vrot.lane.b32.xlu0 %v2257, 64
  %v3201 = vpop.permute.xlu0 %3200
  %3202 = vrot.lane.b32.xlu0 %v2258, 64
  %v3203 = vpop.permute.xlu0 %3202
  %3204 = vrot.lane.b32.xlu0 %v2259, 64
  %v3205 = vpop.permute.xlu0 %3204
  %3206 = vrot.lane.b32.xlu0 %v2260, 64
  %v3207 = vpop.permute.xlu0 %3206
  %3208 = vrot.lane.b32.xlu0 %v2261, 64
  %v3209 = vpop.permute.xlu0 %3208
  %3210 = vrot.lane.b32.xlu0 %v2975, 64
  %v3211 = vpop.permute.xlu0 %3210
  %3212 = vrot.lane.b32.xlu0 %v3149, 64
  %v3213 = vpop.permute.xlu0 %3212
  %v3216 = vunpack.c.l.b16 %v185
  %v3217 = vunpack.c.l.b16 %v239
  %v3218 = vpack.c.b16 %v3216, %v3216
  %v3219 = vpack.c.b16 %v3217, %v3217
  %v3221 = vshrl.u32 %v3148, 16
  %v3223 = vshll.u32 %v3148, 16
  %v3225 = vrot.slane %v3223, 1
  %v3226 = vor.u32 %v3221, %v3225
  %v3228 = vshll.u32 %v3218, 16
  %v3230 = vrot.slane %v3228, 1
  %v3231 = vsel %vm496, %v3226, %v3230
  %v3233 = vshrl.u32 %v3149, 16
  %v3235 = vshll.u32 %v3149, 16
  %v3237 = vrot.slane %v3235, 1
  %v3238 = vor.u32 %v3233, %v3237
  %v3240 = vshll.u32 %v3219, 16
  %v3242 = vrot.slane %v3240, 1
  %v3243 = vsel %vm496, %v3238, %v3242
  %3244 = vrot.lane.b32.xlu0 %v2393, 96
  %v3245 = vpop.permute.xlu0 %3244
  %3246 = vrot.lane.b32.xlu0 %v2405, 96
  %v3247 = vpop.permute.xlu0 %3246
  %3248 = vrot.lane.b32.xlu0 %v2417, 96
  %v3249 = vpop.permute.xlu0 %3248
  %3250 = vrot.lane.b32.xlu0 %v2429, 96
  %v3251 = vpop.permute.xlu0 %3250
  %3252 = vrot.lane.b32.xlu0 %v2441, 96
  %v3253 = vpop.permute.xlu0 %3252
  %3254 = vrot.lane.b32.xlu0 %v2453, 96
  %v3255 = vpop.permute.xlu0 %3254
  %3256 = vrot.lane.b32.xlu0 %v2465, 96
  %v3257 = vpop.permute.xlu0 %3256
  %3258 = vrot.lane.b32.xlu0 %v2477, 96
  %v3259 = vpop.permute.xlu0 %3258
  %3260 = vrot.lane.b32.xlu0 %v2489, 96
  %v3261 = vpop.permute.xlu0 %3260
  %3262 = vrot.lane.b32.xlu0 %v2501, 96
  %v3263 = vpop.permute.xlu0 %3262
  %3264 = vrot.lane.b32.xlu0 %v2513, 96
  %v3265 = vpop.permute.xlu0 %3264
  %3266 = vrot.lane.b32.xlu0 %v2525, 96
  %v3267 = vpop.permute.xlu0 %3266
  %3268 = vrot.lane.b32.xlu0 %v2537, 96
  %v3269 = vpop.permute.xlu0 %3268
  %3270 = vrot.lane.b32.xlu0 %v2549, 96
  %v3271 = vpop.permute.xlu0 %3270
  %3272 = vrot.lane.b32.xlu0 %v3057, 96
  %v3273 = vpop.permute.xlu0 %3272
  %3274 = vrot.lane.b32.xlu0 %v3231, 96
  %v3275 = vpop.permute.xlu0 %3274
  %3276 = vrot.lane.b32.xlu0 %v2585, 96
  %v3277 = vpop.permute.xlu0 %3276
  %3278 = vrot.lane.b32.xlu0 %v2597, 96
  %v3279 = vpop.permute.xlu0 %3278
  %3280 = vrot.lane.b32.xlu0 %v2609, 96
  %v3281 = vpop.permute.xlu0 %3280
  %3282 = vrot.lane.b32.xlu0 %v2621, 96
  %v3283 = vpop.permute.xlu0 %3282
  %3284 = vrot.lane.b32.xlu0 %v2633, 96
  %v3285 = vpop.permute.xlu0 %3284
  %3286 = vrot.lane.b32.xlu0 %v2645, 96
  %v3287 = vpop.permute.xlu0 %3286
  %3288 = vrot.lane.b32.xlu0 %v2657, 96
  %v3289 = vpop.permute.xlu0 %3288
  %3290 = vrot.lane.b32.xlu0 %v2669, 96
  %v3291 = vpop.permute.xlu0 %3290
  %3292 = vrot.lane.b32.xlu0 %v2681, 96
  %v3293 = vpop.permute.xlu0 %3292
  %3294 = vrot.lane.b32.xlu0 %v2693, 96
  %v3295 = vpop.permute.xlu0 %3294
  %3296 = vrot.lane.b32.xlu0 %v2705, 96
  %v3297 = vpop.permute.xlu0 %3296
  %3298 = vrot.lane.b32.xlu0 %v2717, 96
  %v3299 = vpop.permute.xlu0 %3298
  %3300 = vrot.lane.b32.xlu0 %v2729, 96
  %v3301 = vpop.permute.xlu0 %3300
  %3302 = vrot.lane.b32.xlu0 %v2741, 96
  %v3303 = vpop.permute.xlu0 %3302
  %3304 = vrot.lane.b32.xlu0 %v3069, 96
  %v3305 = vpop.permute.xlu0 %3304
  %3306 = vrot.lane.b32.xlu0 %v3243, 96
  %v3307 = vpop.permute.xlu0 %3306
  %v3308 = vrot.slane %v3148, 1
  %v3309 = vrot.slane %v3218, 1
  %v3310 = vsel %vm945, %v3308, %v3309
  %v3311 = vrot.slane %v3149, 1
  %v3312 = vrot.slane %v3219, 1
  %v3313 = vsel %vm945, %v3311, %v3312
  %v3315 = vsel %vm2037, %v2230, %v2743
  %v3317 = vsel %vm2037, %v2231, %v2745
  %v3319 = vsel %vm2037, %v2232, %v2747
  %v3321 = vsel %vm2037, %v2233, %v2749
  %v3323 = vsel %vm2037, %v2234, %v2751
  %v3325 = vsel %vm2037, %v2235, %v2753
  %v3327 = vsel %vm2037, %v2236, %v2755
  %v3329 = vsel %vm2037, %v2237, %v2757
  %v3331 = vsel %vm2037, %v2238, %v2759
  %v3333 = vsel %vm2037, %v2239, %v2761
  %v3335 = vsel %vm2037, %v2240, %v2763
  %v3337 = vsel %vm2037, %v2241, %v2765
  %v3339 = vsel %vm2037, %v2242, %v2767
  %v3341 = vsel %vm2037, %v2243, %v2769
  %v3343 = vsel %vm2037, %v2244, %v2771
  %v3345 = vsel %vm2037, %v2245, %v2773
  %v3347 = vsel %vm2037, %v2246, %v2775
  %v3349 = vsel %vm2037, %v2247, %v2777
  %v3351 = vsel %vm2037, %v2248, %v2779
  %v3353 = vsel %vm2037, %v2249, %v2781
  %v3355 = vsel %vm2037, %v2250, %v2783
  %v3357 = vsel %vm2037, %v2251, %v2785
  %v3359 = vsel %vm2037, %v2252, %v2787
  %v3361 = vsel %vm2037, %v2253, %v2789
  %v3363 = vsel %vm2037, %v2254, %v2791
  %v3365 = vsel %vm2037, %v2255, %v2793
  %v3367 = vsel %vm2037, %v2256, %v2795
  %v3369 = vsel %vm2037, %v2257, %v2797
  %v3371 = vsel %vm2037, %v2258, %v2799
  %v3373 = vsel %vm2037, %v2259, %v2801
  %v3375 = vsel %vm2037, %v2260, %v2803
  %v3377 = vsel %vm2037, %v2261, %v2805
  %vm3378 = vcmask 523264
  %v3380 = vsel %vm3378, %v3315, %v2903
  %v3382 = vsel %vm3378, %v3317, %v2905
  %v3384 = vsel %vm3378, %v3319, %v2907
  %v3386 = vsel %vm3378, %v3321, %v2909
  %v3388 = vsel %vm3378, %v3323, %v2911
  %v3390 = vsel %vm3378, %v3325, %v2913
  %v3392 = vsel %vm3378, %v3327, %v2915
  %v3394 = vsel %vm3378, %v3329, %v2917
  %v3396 = vsel %vm3378, %v3331, %v2919
  %v3398 = vsel %vm3378, %v3333, %v2921
  %v3400 = vsel %vm3378, %v3335, %v2923
  %v3402 = vsel %vm3378, %v3337, %v2925
  %v3404 = vsel %vm3378, %v3339, %v2927
  %v3406 = vsel %vm3378, %v3341, %v2929
  %v3408 = vsel %vm3378, %v3343, %v2931
  %v3410 = vsel %vm3378, %v3345, %v2933
  %v3412 = vsel %vm3378, %v3347, %v2935
  %v3414 = vsel %vm3378, %v3349, %v2937
  %v3416 = vsel %vm3378, %v3351, %v2939
  %v3418 = vsel %vm3378, %v3353, %v2941
  %v3420 = vsel %vm3378, %v3355, %v2943
  %v3422 = vsel %vm3378, %v3357, %v2945
  %v3424 = vsel %vm3378, %v3359, %v2947
  %v3426 = vsel %vm3378, %v3361, %v2949
  %v3428 = vsel %vm3378, %v3363, %v2951
  %v3430 = vsel %vm3378, %v3365, %v2953
  %v3432 = vsel %vm3378, %v3367, %v2955
  %v3434 = vsel %vm3378, %v3369, %v2957
  %v3436 = vsel %vm3378, %v3371, %v2959
  %v3438 = vsel %vm3378, %v3373, %v2961
  %v3440 = vsel %vm3378, %v3375, %v2963
  %v3442 = vsel %vm3378, %v3377, %v2965
  %vm3443 = vcmask 785408
  %v3445 = vsel %vm3443, %v3380, %v2977
  %v3448 = vsel %vm3443, %v3382, %v2979
  %v3451 = vsel %vm3443, %v3384, %v2981
  %v3454 = vsel %vm3443, %v3386, %v2983
  %v3457 = vsel %vm3443, %v3388, %v2985
  %v3460 = vsel %vm3443, %v3390, %v2987
  %v3463 = vsel %vm3443, %v3392, %v2989
  %v3466 = vsel %vm3443, %v3394, %v2991
  %v3469 = vsel %vm3443, %v3396, %v2993
  %v3472 = vsel %vm3443, %v3398, %v2995
  %v3475 = vsel %vm3443, %v3400, %v2997
  %v3478 = vsel %vm3443, %v3402, %v2999
  %v3481 = vsel %vm3443, %v3404, %v3001
  %v3484 = vsel %vm3443, %v3406, %v3003
  %v3487 = vsel %vm3443, %v3408, %v3005
  %v3490 = vsel %vm3443, %v3410, %v3007
  %v3493 = vsel %vm3443, %v3412, %v3009
  %v3496 = vsel %vm3443, %v3414, %v3011
  %v3499 = vsel %vm3443, %v3416, %v3013
  %v3502 = vsel %vm3443, %v3418, %v3015
  %v3505 = vsel %vm3443, %v3420, %v3017
  %v3508 = vsel %vm3443, %v3422, %v3019
  %v3511 = vsel %vm3443, %v3424, %v3021
  %v3514 = vsel %vm3443, %v3426, %v3023
  %v3517 = vsel %vm3443, %v3428, %v3025
  %v3520 = vsel %vm3443, %v3430, %v3027
  %v3523 = vsel %vm3443, %v3432, %v3029
  %v3526 = vsel %vm3443, %v3434, %v3031
  %v3529 = vsel %vm3443, %v3436, %v3033
  %v3532 = vsel %vm3443, %v3438, %v3035
  %v3535 = vsel %vm3443, %v3440, %v3037
  %v3538 = vsel %vm3443, %v3442, %v3039
  %v3542 = vsel %vm2037, %v2381, %v3077
  %v3545 = vsel %vm2037, %v2393, %v3079
  %v3548 = vsel %vm2037, %v2405, %v3081
  %v3551 = vsel %vm2037, %v2417, %v3083
  %v3554 = vsel %vm2037, %v2429, %v3085
  %v3557 = vsel %vm2037, %v2441, %v3087
  %v3560 = vsel %vm2037, %v2453, %v3089
  %v3563 = vsel %vm2037, %v2465, %v3091
  %v3566 = vsel %vm2037, %v2477, %v3093
  %v3569 = vsel %vm2037, %v2489, %v3095
  %v3572 = vsel %vm2037, %v2501, %v3097
  %v3575 = vsel %vm2037, %v2513, %v3099
  %v3578 = vsel %vm2037, %v2525, %v3101
  %v3581 = vsel %vm2037, %v2537, %v3103
  %v3584 = vsel %vm2037, %v2549, %v3105
  %v3587 = vsel %vm2037, %v3057, %v3107
  %v3590 = vsel %vm2037, %v2573, %v3109
  %v3593 = vsel %vm2037, %v2585, %v3111
  %v3596 = vsel %vm2037, %v2597, %v3113
  %v3599 = vsel %vm2037, %v2609, %v3115
  %v3602 = vsel %vm2037, %v2621, %v3117
  %v3605 = vsel %vm2037, %v2633, %v3119
  %v3608 = vsel %vm2037, %v2645, %v3121
  %v3611 = vsel %vm2037, %v2657, %v3123
  %v3614 = vsel %vm2037, %v2669, %v3125
  %v3617 = vsel %vm2037, %v2681, %v3127
  %v3620 = vsel %vm2037, %v2693, %v3129
  %v3623 = vsel %vm2037, %v2705, %v3131
  %v3626 = vsel %vm2037, %v2717, %v3133
  %v3629 = vsel %vm2037, %v2729, %v3135
  %v3632 = vsel %vm2037, %v2741, %v3137
  %v3635 = vsel %vm2037, %v3069, %v3139
  %v3637 = vsel %vm3378, %v3542, %v3151
  %v3639 = vsel %vm3378, %v3545, %v3153
  %v3641 = vsel %vm3378, %v3548, %v3155
  %v3643 = vsel %vm3378, %v3551, %v3157
  %v3645 = vsel %vm3378, %v3554, %v3159
  %v3647 = vsel %vm3378, %v3557, %v3161
  %v3649 = vsel %vm3378, %v3560, %v3163
  %v3651 = vsel %vm3378, %v3563, %v3165
  %v3653 = vsel %vm3378, %v3566, %v3167
  %v3655 = vsel %vm3378, %v3569, %v3169
  %v3657 = vsel %vm3378, %v3572, %v3171
  %v3659 = vsel %vm3378, %v3575, %v3173
  %v3661 = vsel %vm3378, %v3578, %v3175
  %v3663 = vsel %vm3378, %v3581, %v3177
  %v3665 = vsel %vm3378, %v3584, %v3179
  %v3667 = vsel %vm3378, %v3587, %v3181
  %v3669 = vsel %vm3378, %v3590, %v3183
  %v3671 = vsel %vm3378, %v3593, %v3185
  %v3673 = vsel %vm3378, %v3596, %v3187
  %v3675 = vsel %vm3378, %v3599, %v3189
  %v3677 = vsel %vm3378, %v3602, %v3191
  %v3679 = vsel %vm3378, %v3605, %v3193
  %v3681 = vsel %vm3378, %v3608, %v3195
  %v3683 = vsel %vm3378, %v3611, %v3197
  %v3685 = vsel %vm3378, %v3614, %v3199
  %v3687 = vsel %vm3378, %v3617, %v3201
  %v3689 = vsel %vm3378, %v3620, %v3203
  %v3691 = vsel %vm3378, %v3623, %v3205
  %v3693 = vsel %vm3378, %v3626, %v3207
  %v3695 = vsel %vm3378, %v3629, %v3209
  %v3697 = vsel %vm3378, %v3632, %v3211
  %v3699 = vsel %vm3378, %v3635, %v3213
  %v3701 = vsel %vm3443, %v3637, %v3245
  %v3704 = vsel %vm3443, %v3639, %v3247
  %v3707 = vsel %vm3443, %v3641, %v3249
  %v3710 = vsel %vm3443, %v3643, %v3251
  %v3713 = vsel %vm3443, %v3645, %v3253
  %v3716 = vsel %vm3443, %v3647, %v3255
  %v3719 = vsel %vm3443, %v3649, %v3257
  %v3722 = vsel %vm3443, %v3651, %v3259
  %v3725 = vsel %vm3443, %v3653, %v3261
  %v3728 = vsel %vm3443, %v3655, %v3263
  %v3731 = vsel %vm3443, %v3657, %v3265
  %v3734 = vsel %vm3443, %v3659, %v3267
  %v3737 = vsel %vm3443, %v3661, %v3269
  %v3740 = vsel %vm3443, %v3663, %v3271
  %v3743 = vsel %vm3443, %v3665, %v3273
  %v3746 = vsel %vm3443, %v3667, %v3275
  %v3749 = vsel %vm3443, %v3669, %v3277
  %v3752 = vsel %vm3443, %v3671, %v3279
  %v3755 = vsel %vm3443, %v3673, %v3281
  %v3758 = vsel %vm3443, %v3675, %v3283
  %v3761 = vsel %vm3443, %v3677, %v3285
  %v3764 = vsel %vm3443, %v3679, %v3287
  %v3767 = vsel %vm3443, %v3681, %v3289
  %v3770 = vsel %vm3443, %v3683, %v3291
  %v3773 = vsel %vm3443, %v3685, %v3293
  %v3776 = vsel %vm3443, %v3687, %v3295
  %v3779 = vsel %vm3443, %v3689, %v3297
  %v3782 = vsel %vm3443, %v3691, %v3299
  %v3785 = vsel %vm3443, %v3693, %v3301
  %v3788 = vsel %vm3443, %v3695, %v3303
  %v3791 = vsel %vm3443, %v3697, %v3305
  %v3794 = vsel %vm3443, %v3699, %v3307
  %v3796 = vld [vmem:[%s3] sm:$0xf]
  %v3797 = vld [vmem:[%s3 + $0x4] sm:$0xf]
  %v3798 = vld [vmem:[%s3 + $0x8] sm:$0xf]
  %v3799 = vld [vmem:[%s3 + $0xc] sm:$0xf]
  %v3800 = vld [vmem:[%s3 + $0x10] sm:$0x3]
  %v3801 = vld [vmem:[%s4] sm:$0x1]
  %v3803 = vperm.slane %v3801, 0
  %v3810 = vunpack.c.l.b16 %v3796
  %v3811 = vunpack.c.l.b16 %v3797
  %v3812 = vunpack.c.l.b16 %v3798
  %v3813 = vunpack.c.l.b16 %v3799
  %v3814 = vunpack.c.l.b16 %v3800
  %v3815 = vpack.c.b16 %v3811, %v3810
  %v3816 = vpack.c.b16 %v3813, %v3812
  %v3817 = vpack.c.b16 %v3814, %v3814
  %vm3820 = vcmask 293888
  %v3821 = vsel %vm3820, %v2039, 0
  %v3823 = vsel %vm3820, %v2041, 0
  %v3825 = vsel %vm3820, %v2043, 0
  %v3827 = vsel %vm3820, %v2045, 0
  %v3829 = vsel %vm3820, %v2047, 0
  %v3831 = vsel %vm3820, %v2049, 0
  %v3833 = vsel %vm3820, %v2051, 0
  %v3835 = vsel %vm3820, %v2053, 0
  %v3837 = vsel %vm3820, %v2055, 0
  %v3839 = vsel %vm3820, %v2057, 0
  %v3841 = vsel %vm3820, %v2059, 0
  %v3843 = vsel %vm3820, %v2061, 0
  %v3845 = vsel %vm3820, %v2063, 0
  %v3847 = vsel %vm3820, %v2065, 0
  %v3849 = vsel %vm3820, %v2067, 0
  %v3851 = vsel %vm3820, %v2069, 0
  %v3853 = vsel %vm3820, %v2071, 0
  %v3855 = vsel %vm3820, %v2073, 0
  %v3857 = vsel %vm3820, %v2075, 0
  %v3859 = vsel %vm3820, %v2077, 0
  %v3861 = vsel %vm3820, %v2079, 0
  %v3863 = vsel %vm3820, %v2081, 0
  %v3865 = vsel %vm3820, %v2083, 0
  %v3867 = vsel %vm3820, %v2085, 0
  %v3869 = vsel %vm3820, %v2087, 0
  %v3871 = vsel %vm3820, %v2089, 0
  %v3873 = vsel %vm3820, %v2091, 0
  %v3875 = vsel %vm3820, %v2093, 0
  %v3877 = vsel %vm3820, %v2095, 0
  %v3879 = vsel %vm3820, %v2097, 0
  %v3881 = vsel %vm3820, %v2099, 0
  %v3883 = vsel %vm3820, %v2101, 0
  %vm3885 = vcmask 1041408
  %v3887 = vsel %vm3885, %v3817, 0
  %3889 = vmatpush.bf16.msra.mxu0 0
  %3890 = vmatpush.bf16.msra.mxu0 0
  %3891 = vmatpush.bf16.msra.mxu0 0
  %3892 = vmatpush.bf16.msra.mxu0 0
  %3893 = vmatpush.bf16.msra.mxu0 0
  %3894 = vmatpush.bf16.msra.mxu0 %v3887
  %3895 = vmatpush.bf16.msra.mxu0 %v3816
  %3896 = vmatpush.bf16.msra.mxu0 %v3815
  %3897 = vmatmul.bf16.gmra.mxu0 %v3821
  %v3898 = vpop.f32.mrf.mxu0
  %v3899 = vadd.f32 %v3803, %v3898
  %v3900 = vpop.f32.mrf.mxu0
  %v3901 = vadd.f32 %v3803, %v3900
  %3902 = vmatmul.bf16.gmra.mxu0 %v3823
  %v3903 = vpop.f32.mrf.mxu0
  %v3904 = vadd.f32 %v3803, %v3903
  %v3905 = vpop.f32.mrf.mxu0
  %v3906 = vadd.f32 %v3803, %v3905
  %3907 = vmatmul.bf16.gmra.mxu0 %v3825
  %v3908 = vpop.f32.mrf.mxu0
  %v3909 = vadd.f32 %v3803, %v3908
  %v3910 = vpop.f32.mrf.mxu0
  %v3911 = vadd.f32 %v3803, %v3910
  %3912 = vmatmul.bf16.gmra.mxu0 %v3827
  %v3913 = vpop.f32.mrf.mxu0
  %v3914 = vadd.f32 %v3803, %v3913
  %v3915 = vpop.f32.mrf.mxu0
  %v3916 = vadd.f32 %v3803, %v3915
  %3917 = vmatmul.bf16.gmra.mxu0 %v3829
  %v3918 = vpop.f32.mrf.mxu0
  %v3919 = vadd.f32 %v3803, %v3918
  %v3920 = vpop.f32.mrf.mxu0
  %v3921 = vadd.f32 %v3803, %v3920
  %3922 = vmatmul.bf16.gmra.mxu0 %v3831
  %v3923 = vpop.f32.mrf.mxu0
  %v3924 = vadd.f32 %v3803, %v3923
  %v3925 = vpop.f32.mrf.mxu0
  %v3926 = vadd.f32 %v3803, %v3925
  %3927 = vmatmul.bf16.gmra.mxu0 %v3833
  %v3928 = vpop.f32.mrf.mxu0
  %v3929 = vadd.f32 %v3803, %v3928
  %v3930 = vpop.f32.mrf.mxu0
  %v3931 = vadd.f32 %v3803, %v3930
  %3932 = vmatmul.bf16.gmra.mxu0 %v3835
  %v3933 = vpop.f32.mrf.mxu0
  %v3934 = vadd.f32 %v3803, %v3933
  %v3935 = vpop.f32.mrf.mxu0
  %v3936 = vadd.f32 %v3803, %v3935
  %3937 = vmatmul.bf16.gmra.mxu0 %v3837
  %v3938 = vpop.f32.mrf.mxu0
  %v3939 = vadd.f32 %v3803, %v3938
  %v3940 = vpop.f32.mrf.mxu0
  %v3941 = vadd.f32 %v3803, %v3940
  %3942 = vmatmul.bf16.gmra.mxu0 %v3839
  %v3943 = vpop.f32.mrf.mxu0
  %v3944 = vadd.f32 %v3803, %v3943
  %v3945 = vpop.f32.mrf.mxu0
  %v3946 = vadd.f32 %v3803, %v3945
  %3947 = vmatmul.bf16.gmra.mxu0 %v3841
  %v3948 = vpop.f32.mrf.mxu0
  %v3949 = vadd.f32 %v3803, %v3948
  %v3950 = vpop.f32.mrf.mxu0
  %v3951 = vadd.f32 %v3803, %v3950
  %3952 = vmatmul.bf16.gmra.mxu0 %v3843
  %v3953 = vpop.f32.mrf.mxu0
  %v3954 = vadd.f32 %v3803, %v3953
  %v3955 = vpop.f32.mrf.mxu0
  %v3956 = vadd.f32 %v3803, %v3955
  %3957 = vmatmul.bf16.gmra.mxu0 %v3845
  %v3958 = vpop.f32.mrf.mxu0
  %v3959 = vadd.f32 %v3803, %v3958
  %v3960 = vpop.f32.mrf.mxu0
  %v3961 = vadd.f32 %v3803, %v3960
  %3962 = vmatmul.bf16.gmra.mxu0 %v3847
  %v3963 = vpop.f32.mrf.mxu0
  %v3964 = vadd.f32 %v3803, %v3963
  %v3965 = vpop.f32.mrf.mxu0
  %v3966 = vadd.f32 %v3803, %v3965
  %3967 = vmatmul.bf16.gmra.mxu0 %v3849
  %v3968 = vpop.f32.mrf.mxu0
  %v3969 = vadd.f32 %v3803, %v3968
  %v3970 = vpop.f32.mrf.mxu0
  %v3971 = vadd.f32 %v3803, %v3970
  %3972 = vmatmul.bf16.gmra.mxu0 %v3851
  %v3973 = vpop.f32.mrf.mxu0
  %v3974 = vadd.f32 %v3803, %v3973
  %v3975 = vpop.f32.mrf.mxu0
  %v3976 = vadd.f32 %v3803, %v3975
  %3977 = vmatmul.bf16.gmra.mxu0 %v3853
  %v3978 = vpop.f32.mrf.mxu0
  %v3979 = vadd.f32 %v3803, %v3978
  %v3980 = vpop.f32.mrf.mxu0
  %v3981 = vadd.f32 %v3803, %v3980
  %3982 = vmatmul.bf16.gmra.mxu0 %v3855
  %v3983 = vpop.f32.mrf.mxu0
  %v3984 = vadd.f32 %v3803, %v3983
  %v3985 = vpop.f32.mrf.mxu0
  %v3986 = vadd.f32 %v3803, %v3985
  %3987 = vmatmul.bf16.gmra.mxu0 %v3857
  %v3988 = vpop.f32.mrf.mxu0
  %v3989 = vadd.f32 %v3803, %v3988
  %v3990 = vpop.f32.mrf.mxu0
  %v3991 = vadd.f32 %v3803, %v3990
  %3992 = vmatmul.bf16.gmra.mxu0 %v3859
  %v3993 = vpop.f32.mrf.mxu0
  %v3994 = vadd.f32 %v3803, %v3993
  %v3995 = vpop.f32.mrf.mxu0
  %v3996 = vadd.f32 %v3803, %v3995
  %3997 = vmatmul.bf16.gmra.mxu0 %v3861
  %v3998 = vpop.f32.mrf.mxu0
  %v3999 = vadd.f32 %v3803, %v3998
  %v4000 = vpop.f32.mrf.mxu0
  %v4001 = vadd.f32 %v3803, %v4000
  %4002 = vmatmul.bf16.gmra.mxu0 %v3863
  %v4003 = vpop.f32.mrf.mxu0
  %v4004 = vadd.f32 %v3803, %v4003
  %v4005 = vpop.f32.mrf.mxu0
  %v4006 = vadd.f32 %v3803, %v4005
  %4007 = vmatmul.bf16.gmra.mxu0 %v3865
  %v4008 = vpop.f32.mrf.mxu0
  %v4009 = vadd.f32 %v3803, %v4008
  %v4010 = vpop.f32.mrf.mxu0
  %v4011 = vadd.f32 %v3803, %v4010
  %4012 = vmatmul.bf16.gmra.mxu0 %v3867
  %v4013 = vpop.f32.mrf.mxu0
  %v4014 = vadd.f32 %v3803, %v4013
  %v4015 = vpop.f32.mrf.mxu0
  %v4016 = vadd.f32 %v3803, %v4015
  %4017 = vmatmul.bf16.gmra.mxu0 %v3869
  %v4018 = vpop.f32.mrf.mxu0
  %v4019 = vadd.f32 %v3803, %v4018
  %v4020 = vpop.f32.mrf.mxu0
  %v4021 = vadd.f32 %v3803, %v4020
  %4022 = vmatmul.bf16.gmra.mxu0 %v3871
  %v4023 = vpop.f32.mrf.mxu0
  %v4024 = vadd.f32 %v3803, %v4023
  %v4025 = vpop.f32.mrf.mxu0
  %v4026 = vadd.f32 %v3803, %v4025
  %4027 = vmatmul.bf16.gmra.mxu0 %v3873
  %v4028 = vpop.f32.mrf.mxu0
  %v4029 = vadd.f32 %v3803, %v4028
  %v4030 = vpop.f32.mrf.mxu0
  %v4031 = vadd.f32 %v3803, %v4030
  %4032 = vmatmul.bf16.gmra.mxu0 %v3875
  %v4033 = vpop.f32.mrf.mxu0
  %v4034 = vadd.f32 %v3803, %v4033
  %v4035 = vpop.f32.mrf.mxu0
  %v4036 = vadd.f32 %v3803, %v4035
  %4037 = vmatmul.bf16.gmra.mxu0 %v3877
  %v4038 = vpop.f32.mrf.mxu0
  %v4039 = vadd.f32 %v3803, %v4038
  %v4040 = vpop.f32.mrf.mxu0
  %v4041 = vadd.f32 %v3803, %v4040
  %4042 = vmatmul.bf16.gmra.mxu0 %v3879
  %v4043 = vpop.f32.mrf.mxu0
  %v4044 = vadd.f32 %v3803, %v4043
  %v4045 = vpop.f32.mrf.mxu0
  %v4046 = vadd.f32 %v3803, %v4045
  %4047 = vmatmul.bf16.gmra.mxu0 %v3881
  %v4048 = vpop.f32.mrf.mxu0
  %v4049 = vadd.f32 %v3803, %v4048
  %v4050 = vpop.f32.mrf.mxu0
  %v4051 = vadd.f32 %v3803, %v4050
  %4052 = vmatmul.bf16.gmra.mxu0 %v3883
  %v4053 = vpop.f32.mrf.mxu0
  %v4054 = vadd.f32 %v3803, %v4053
  %v4055 = vpop.f32.mrf.mxu0
  %v4056 = vadd.f32 %v3803, %v4055
  %4057 = vdwg.mxu0
  %v4058 = vld [vmem:[%s5] sm:$0xf]
  %v4059 = vld [vmem:[%s5 + $0x4] sm:$0xf]
  %v4060 = vld [vmem:[%s5 + $0x8] sm:$0xf]
  %v4061 = vld [vmem:[%s5 + $0xc] sm:$0xf]
  %v4062 = vld [vmem:[%s5 + $0x10] sm:$0xf]
  %v4063 = vld [vmem:[%s5 + $0x14] sm:$0xf]
  %v4064 = vld [vmem:[%s5 + $0x18] sm:$0xf]
  %v4065 = vld [vmem:[%s5 + $0x1c] sm:$0xf]
  %v4066 = vld [vmem:[%s5 + $0x20] sm:$0xf]
  %v4067 = vld [vmem:[%s5 + $0x24] sm:$0xf]
  %v4068 = vld [vmem:[%s5 + $0x28] sm:$0xf]
  %v4069 = vld [vmem:[%s5 + $0x2c] sm:$0xf]
  %v4070 = vld [vmem:[%s5 + $0x30] sm:$0xf]
  %v4071 = vld [vmem:[%s5 + $0x34] sm:$0xf]
  %v4072 = vld [vmem:[%s5 + $0x38] sm:$0xf]
  %v4073 = vld [vmem:[%s5 + $0x3c] sm:$0xf]
  %v4074 = vld [vmem:[%s5 + $0x40] sm:$0xf]
  %v4075 = vld [vmem:[%s5 + $0x44] sm:$0xf]
  %v4076 = vld [vmem:[%s5 + $0x48] sm:$0xf]
  %v4077 = vld [vmem:[%s5 + $0x4c] sm:$0xf]
  %v4078 = vld [vmem:[%s5 + $0x50] sm:$0xf]
  %v4079 = vld [vmem:[%s5 + $0x54] sm:$0xf]
  %v4080 = vld [vmem:[%s5 + $0x58] sm:$0xf]
  %v4081 = vld [vmem:[%s5 + $0x5c] sm:$0xf]
  %v4082 = vld [vmem:[%s5 + $0x60] sm:$0xf]
  %v4083 = vld [vmem:[%s5 + $0x64] sm:$0xf]
  %v4084 = vld [vmem:[%s5 + $0x68] sm:$0xf]
  %v4085 = vld [vmem:[%s5 + $0x6c] sm:$0xf]
  %v4086 = vld [vmem:[%s5 + $0x70] sm:$0xf]
  %v4087 = vld [vmem:[%s5 + $0x74] sm:$0xf]
  %v4088 = vld [vmem:[%s5 + $0x78] sm:$0xf]
  %v4089 = vld [vmem:[%s5 + $0x7c] sm:$0xf]
  %v4090 = vld [vmem:[%s5 + $0x80] sm:$0xf]
  %v4091 = vld [vmem:[%s5 + $0x84] sm:$0xf]
  %v4092 = vld [vmem:[%s5 + $0x88] sm:$0xf]
  %v4093 = vld [vmem:[%s5 + $0x8c] sm:$0xf]
  %v4130 = vunpack.c.l.b16 %v4058
  %v4131 = vunpack.c.l.b16 %v4059
  %v4132 = vunpack.c.l.b16 %v4060
  %v4133 = vunpack.c.l.b16 %v4061
  %v4134 = vunpack.c.l.b16 %v4062
  %v4135 = vunpack.c.l.b16 %v4063
  %v4136 = vunpack.c.l.b16 %v4064
  %v4137 = vunpack.c.l.b16 %v4065
  %v4138 = vunpack.c.l.b16 %v4066
  %v4139 = vunpack.c.l.b16 %v4067
  %v4140 = vunpack.c.l.b16 %v4068
  %v4141 = vunpack.c.l.b16 %v4069
  %v4142 = vunpack.c.l.b16 %v4070
  %v4143 = vunpack.c.l.b16 %v4071
  %v4144 = vunpack.c.l.b16 %v4072
  %v4145 = vunpack.c.l.b16 %v4073
  %v4146 = vunpack.c.l.b16 %v4074
  %v4147 = vunpack.c.l.b16 %v4075
  %v4148 = vunpack.c.l.b16 %v4076
  %v4149 = vunpack.c.l.b16 %v4077
  %v4150 = vunpack.c.l.b16 %v4078
  %v4151 = vunpack.c.l.b16 %v4079
  %v4152 = vunpack.c.l.b16 %v4080
  %v4153 = vunpack.c.l.b16 %v4081
  %v4154 = vunpack.c.l.b16 %v4082
  %v4155 = vunpack.c.l.b16 %v4083
  %v4156 = vunpack.c.l.b16 %v4084
  %v4157 = vunpack.c.l.b16 %v4085
  %v4158 = vunpack.c.l.b16 %v4086
  %v4159 = vunpack.c.l.b16 %v4087
  %v4160 = vunpack.c.l.b16 %v4088
  %v4161 = vunpack.c.l.b16 %v4089
  %v4162 = vunpack.c.l.b16 %v4090
  %v4163 = vunpack.c.l.b16 %v4091
  %v4164 = vunpack.c.l.b16 %v4092
  %v4165 = vunpack.c.l.b16 %v4093
  %v4166 = vpack.c.b16 %v4131, %v4130
  %v4167 = vpack.c.b16 %v4133, %v4132
  %v4168 = vpack.c.b16 %v4135, %v4134
  %v4169 = vpack.c.b16 %v4137, %v4136
  %v4170 = vpack.c.b16 %v4139, %v4138
  %v4171 = vpack.c.b16 %v4141, %v4140
  %v4172 = vpack.c.b16 %v4143, %v4142
  %v4173 = vpack.c.b16 %v4145, %v4144
  %v4174 = vpack.c.b16 %v4147, %v4146
  %v4175 = vpack.c.b16 %v4149, %v4148
  %v4176 = vpack.c.b16 %v4151, %v4150
  %v4177 = vpack.c.b16 %v4153, %v4152
  %v4178 = vpack.c.b16 %v4155, %v4154
  %v4179 = vpack.c.b16 %v4157, %v4156
  %v4180 = vpack.c.b16 %v4159, %v4158
  %v4181 = vpack.c.b16 %v4161, %v4160
  %v4182 = vpack.c.b16 %v4163, %v4162
  %v4183 = vpack.c.b16 %v4165, %v4164
  %v4203 = vsel %vm2037, %v2814, 0
  %v4206 = vsel %vm2037, %v2817, 0
  %v4209 = vsel %vm2037, %v2820, 0
  %v4212 = vsel %vm2037, %v2823, 0
  %v4215 = vsel %vm2037, %v2826, 0
  %v4218 = vsel %vm2037, %v2829, 0
  %v4221 = vsel %vm2037, %v2832, 0
  %v4224 = vsel %vm2037, %v2835, 0
  %v4227 = vsel %vm2037, %v2838, 0
  %v4230 = vsel %vm2037, %v2841, 0
  %v4233 = vsel %vm2037, %v2844, 0
  %v4236 = vsel %vm2037, %v2847, 0
  %v4239 = vsel %vm2037, %v2850, 0
  %v4242 = vsel %vm2037, %v2853, 0
  %v4245 = vsel %vm2037, %v3072, 0
  %v4248 = vsel %vm2037, %v3310, 0
  %v4251 = vsel %vm2037, %v2862, 0
  %v4254 = vsel %vm2037, %v2865, 0
  %v4257 = vsel %vm2037, %v2868, 0
  %v4260 = vsel %vm2037, %v2871, 0
  %v4263 = vsel %vm2037, %v2874, 0
  %v4266 = vsel %vm2037, %v2877, 0
  %v4269 = vsel %vm2037, %v2880, 0
  %v4272 = vsel %vm2037, %v2883, 0
  %v4275 = vsel %vm2037, %v2886, 0
  %v4278 = vsel %vm2037, %v2889, 0
  %v4281 = vsel %vm2037, %v2892, 0
  %v4284 = vsel %vm2037, %v2895, 0
  %v4287 = vsel %vm2037, %v2898, 0
  %v4290 = vsel %vm2037, %v2901, 0
  %v4293 = vsel %vm2037, %v3075, 0
  %v4296 = vsel %vm2037, %v3313, 0
  %4298 = vmatpush.bf16.msra.mxu0 %v4173
  %4299 = vmatpush.bf16.msra.mxu0 %v4172
  %4300 = vmatpush.bf16.msra.mxu0 %v4171
  %4301 = vmatpush.bf16.msra.mxu0 %v4170
  %4302 = vmatpush.bf16.msra.mxu0 %v4169
  %4303 = vmatpush.bf16.msra.mxu0 %v4168
  %4304 = vmatpush.bf16.msra.mxu0 %v4167
  %4305 = vmatpush.bf16.msra.mxu0 %v4166
  %4306 = vmatmul.bf16.gmra.mxu0 %v3445
  %v4307 = vpop.f32.mrf.mxu0
  %v4308 = vadd.f32 0.0, %v4307
  %v4309 = vpop.f32.mrf.mxu0
  %v4310 = vadd.f32 0.0, %v4309
  %4311 = vmatmul.bf16.gmra.mxu0 %v3448
  %v4312 = vpop.f32.mrf.mxu0
  %v4313 = vadd.f32 0.0, %v4312
  %v4314 = vpop.f32.mrf.mxu0
  %v4315 = vadd.f32 0.0, %v4314
  %4316 = vmatmul.bf16.gmra.mxu0 %v3451
  %v4317 = vpop.f32.mrf.mxu0
  %v4318 = vadd.f32 0.0, %v4317
  %v4319 = vpop.f32.mrf.mxu0
  %v4320 = vadd.f32 0.0, %v4319
  %4321 = vmatmul.bf16.gmra.mxu0 %v3454
  %v4322 = vpop.f32.mrf.mxu0
  %v4323 = vadd.f32 0.0, %v4322
  %v4324 = vpop.f32.mrf.mxu0
  %v4325 = vadd.f32 0.0, %v4324
  %4326 = vmatmul.bf16.gmra.mxu0 %v3457
  %v4327 = vpop.f32.mrf.mxu0
  %v4328 = vadd.f32 0.0, %v4327
  %v4329 = vpop.f32.mrf.mxu0
  %v4330 = vadd.f32 0.0, %v4329
  %4331 = vmatmul.bf16.gmra.mxu0 %v3460
  %v4332 = vpop.f32.mrf.mxu0
  %v4333 = vadd.f32 0.0, %v4332
  %v4334 = vpop.f32.mrf.mxu0
  %v4335 = vadd.f32 0.0, %v4334
  %4336 = vmatmul.bf16.gmra.mxu0 %v3463
  %v4337 = vpop.f32.mrf.mxu0
  %v4338 = vadd.f32 0.0, %v4337
  %v4339 = vpop.f32.mrf.mxu0
  %v4340 = vadd.f32 0.0, %v4339
  %4341 = vmatmul.bf16.gmra.mxu0 %v3466
  %v4342 = vpop.f32.mrf.mxu0
  %v4343 = vadd.f32 0.0, %v4342
  %v4344 = vpop.f32.mrf.mxu0
  %v4345 = vadd.f32 0.0, %v4344
  %4346 = vmatmul.bf16.gmra.mxu0 %v3469
  %v4347 = vpop.f32.mrf.mxu0
  %v4348 = vadd.f32 0.0, %v4347
  %v4349 = vpop.f32.mrf.mxu0
  %v4350 = vadd.f32 0.0, %v4349
  %4351 = vmatmul.bf16.gmra.mxu0 %v3472
  %v4352 = vpop.f32.mrf.mxu0
  %v4353 = vadd.f32 0.0, %v4352
  %v4354 = vpop.f32.mrf.mxu0
  %v4355 = vadd.f32 0.0, %v4354
  %4356 = vmatmul.bf16.gmra.mxu0 %v3475
  %v4357 = vpop.f32.mrf.mxu0
  %v4358 = vadd.f32 0.0, %v4357
  %v4359 = vpop.f32.mrf.mxu0
  %v4360 = vadd.f32 0.0, %v4359
  %4361 = vmatmul.bf16.gmra.mxu0 %v3478
  %v4362 = vpop.f32.mrf.mxu0
  %v4363 = vadd.f32 0.0, %v4362
  %v4364 = vpop.f32.mrf.mxu0
  %v4365 = vadd.f32 0.0, %v4364
  %4366 = vmatmul.bf16.gmra.mxu0 %v3481
  %v4367 = vpop.f32.mrf.mxu0
  %v4368 = vadd.f32 0.0, %v4367
  %v4369 = vpop.f32.mrf.mxu0
  %v4370 = vadd.f32 0.0, %v4369
  %4371 = vmatmul.bf16.gmra.mxu0 %v3484
  %v4372 = vpop.f32.mrf.mxu0
  %v4373 = vadd.f32 0.0, %v4372
  %v4374 = vpop.f32.mrf.mxu0
  %v4375 = vadd.f32 0.0, %v4374
  %4376 = vmatmul.bf16.gmra.mxu0 %v3487
  %v4377 = vpop.f32.mrf.mxu0
  %v4378 = vadd.f32 0.0, %v4377
  %v4379 = vpop.f32.mrf.mxu0
  %v4380 = vadd.f32 0.0, %v4379
  %4381 = vmatmul.bf16.gmra.mxu0 %v3490
  %v4382 = vpop.f32.mrf.mxu0
  %v4383 = vadd.f32 0.0, %v4382
  %v4384 = vpop.f32.mrf.mxu0
  %v4385 = vadd.f32 0.0, %v4384
  %4386 = vmatmul.bf16.gmra.mxu0 %v3493
  %v4387 = vpop.f32.mrf.mxu0
  %v4388 = vadd.f32 0.0, %v4387
  %v4389 = vpop.f32.mrf.mxu0
  %v4390 = vadd.f32 0.0, %v4389
  %4391 = vmatmul.bf16.gmra.mxu0 %v3496
  %v4392 = vpop.f32.mrf.mxu0
  %v4393 = vadd.f32 0.0, %v4392
  %v4394 = vpop.f32.mrf.mxu0
  %v4395 = vadd.f32 0.0, %v4394
  %4396 = vmatmul.bf16.gmra.mxu0 %v3499
  %v4397 = vpop.f32.mrf.mxu0
  %v4398 = vadd.f32 0.0, %v4397
  %v4399 = vpop.f32.mrf.mxu0
  %v4400 = vadd.f32 0.0, %v4399
  %4401 = vmatmul.bf16.gmra.mxu0 %v3502
  %v4402 = vpop.f32.mrf.mxu0
  %v4403 = vadd.f32 0.0, %v4402
  %v4404 = vpop.f32.mrf.mxu0
  %v4405 = vadd.f32 0.0, %v4404
  %4406 = vmatmul.bf16.gmra.mxu0 %v3505
  %v4407 = vpop.f32.mrf.mxu0
  %v4408 = vadd.f32 0.0, %v4407
  %v4409 = vpop.f32.mrf.mxu0
  %v4410 = vadd.f32 0.0, %v4409
  %4411 = vmatmul.bf16.gmra.mxu0 %v3508
  %v4412 = vpop.f32.mrf.mxu0
  %v4413 = vadd.f32 0.0, %v4412
  %v4414 = vpop.f32.mrf.mxu0
  %v4415 = vadd.f32 0.0, %v4414
  %4416 = vmatmul.bf16.gmra.mxu0 %v3511
  %v4417 = vpop.f32.mrf.mxu0
  %v4418 = vadd.f32 0.0, %v4417
  %v4419 = vpop.f32.mrf.mxu0
  %v4420 = vadd.f32 0.0, %v4419
  %4421 = vmatmul.bf16.gmra.mxu0 %v3514
  %v4422 = vpop.f32.mrf.mxu0
  %v4423 = vadd.f32 0.0, %v4422
  %v4424 = vpop.f32.mrf.mxu0
  %v4425 = vadd.f32 0.0, %v4424
  %4426 = vmatmul.bf16.gmra.mxu0 %v3517
  %v4427 = vpop.f32.mrf.mxu0
  %v4428 = vadd.f32 0.0, %v4427
  %v4429 = vpop.f32.mrf.mxu0
  %v4430 = vadd.f32 0.0, %v4429
  %4431 = vmatmul.bf16.gmra.mxu0 %v3520
  %v4432 = vpop.f32.mrf.mxu0
  %v4433 = vadd.f32 0.0, %v4432
  %v4434 = vpop.f32.mrf.mxu0
  %v4435 = vadd.f32 0.0, %v4434
  %4436 = vmatmul.bf16.gmra.mxu0 %v3523
  %v4437 = vpop.f32.mrf.mxu0
  %v4438 = vadd.f32 0.0, %v4437
  %v4439 = vpop.f32.mrf.mxu0
  %v4440 = vadd.f32 0.0, %v4439
  %4441 = vmatmul.bf16.gmra.mxu0 %v3526
  %v4442 = vpop.f32.mrf.mxu0
  %v4443 = vadd.f32 0.0, %v4442
  %v4444 = vpop.f32.mrf.mxu0
  %v4445 = vadd.f32 0.0, %v4444
  %4446 = vmatmul.bf16.gmra.mxu0 %v3529
  %v4447 = vpop.f32.mrf.mxu0
  %v4448 = vadd.f32 0.0, %v4447
  %v4449 = vpop.f32.mrf.mxu0
  %v4450 = vadd.f32 0.0, %v4449
  %4451 = vmatmul.bf16.gmra.mxu0 %v3532
  %v4452 = vpop.f32.mrf.mxu0
  %v4453 = vadd.f32 0.0, %v4452
  %v4454 = vpop.f32.mrf.mxu0
  %v4455 = vadd.f32 0.0, %v4454
  %4456 = vmatmul.bf16.gmra.mxu0 %v3535
  %v4457 = vpop.f32.mrf.mxu0
  %v4458 = vadd.f32 0.0, %v4457
  %v4459 = vpop.f32.mrf.mxu0
  %v4460 = vadd.f32 0.0, %v4459
  %4461 = vmatmul.bf16.gmra.mxu0 %v3538
  %v4462 = vpop.f32.mrf.mxu0
  %v4463 = vadd.f32 0.0, %v4462
  %v4464 = vpop.f32.mrf.mxu0
  %v4465 = vadd.f32 0.0, %v4464
  %4466 = vdwg.mxu0
  %4467 = vmatpush.bf16.msra.mxu0 %v4181
  %4468 = vmatpush.bf16.msra.mxu0 %v4180
  %4469 = vmatpush.bf16.msra.mxu0 %v4179
  %4470 = vmatpush.bf16.msra.mxu0 %v4178
  %4471 = vmatpush.bf16.msra.mxu0 %v4177
  %4472 = vmatpush.bf16.msra.mxu0 %v4176
  %4473 = vmatpush.bf16.msra.mxu0 %v4175
  %4474 = vmatpush.bf16.msra.mxu0 %v4174
  %4475 = vmatmul.bf16.gmra.mxu0 %v3701
  %v4476 = vpop.f32.mrf.mxu0
  %v4477 = vadd.f32 %v4308, %v4476
  %v4478 = vpop.f32.mrf.mxu0
  %v4479 = vadd.f32 %v4310, %v4478
  %4480 = vmatmul.bf16.gmra.mxu0 %v3704
  %v4481 = vpop.f32.mrf.mxu0
  %v4482 = vadd.f32 %v4313, %v4481
  %v4483 = vpop.f32.mrf.mxu0
  %v4484 = vadd.f32 %v4315, %v4483
  %4485 = vmatmul.bf16.gmra.mxu0 %v3707
  %v4486 = vpop.f32.mrf.mxu0
  %v4487 = vadd.f32 %v4318, %v4486
  %v4488 = vpop.f32.mrf.mxu0
  %v4489 = vadd.f32 %v4320, %v4488
  %4490 = vmatmul.bf16.gmra.mxu0 %v3710
  %v4491 = vpop.f32.mrf.mxu0
  %v4492 = vadd.f32 %v4323, %v4491
  %v4493 = vpop.f32.mrf.mxu0
  %v4494 = vadd.f32 %v4325, %v4493
  %4495 = vmatmul.bf16.gmra.mxu0 %v3713
  %v4496 = vpop.f32.mrf.mxu0
  %v4497 = vadd.f32 %v4328, %v4496
  %v4498 = vpop.f32.mrf.mxu0
  %v4499 = vadd.f32 %v4330, %v4498
  %4500 = vmatmul.bf16.gmra.mxu0 %v3716
  %v4501 = vpop.f32.mrf.mxu0
  %v4502 = vadd.f32 %v4333, %v4501
  %v4503 = vpop.f32.mrf.mxu0
  %v4504 = vadd.f32 %v4335, %v4503
  %4505 = vmatmul.bf16.gmra.mxu0 %v3719
  %v4506 = vpop.f32.mrf.mxu0
  %v4507 = vadd.f32 %v4338, %v4506
  %v4508 = vpop.f32.mrf.mxu0
  %v4509 = vadd.f32 %v4340, %v4508
  %4510 = vmatmul.bf16.gmra.mxu0 %v3722
  %v4511 = vpop.f32.mrf.mxu0
  %v4512 = vadd.f32 %v4343, %v4511
  %v4513 = vpop.f32.mrf.mxu0
  %v4514 = vadd.f32 %v4345, %v4513
  %4515 = vmatmul.bf16.gmra.mxu0 %v3725
  %v4516 = vpop.f32.mrf.mxu0
  %v4517 = vadd.f32 %v4348, %v4516
  %v4518 = vpop.f32.mrf.mxu0
  %v4519 = vadd.f32 %v4350, %v4518
  %4520 = vmatmul.bf16.gmra.mxu0 %v3728
  %v4521 = vpop.f32.mrf.mxu0
  %v4522 = vadd.f32 %v4353, %v4521
  %v4523 = vpop.f32.mrf.mxu0
  %v4524 = vadd.f32 %v4355, %v4523
  %4525 = vmatmul.bf16.gmra.mxu0 %v3731
  %v4526 = vpop.f32.mrf.mxu0
  %v4527 = vadd.f32 %v4358, %v4526
  %v4528 = vpop.f32.mrf.mxu0
  %v4529 = vadd.f32 %v4360, %v4528
  %4530 = vmatmul.bf16.gmra.mxu0 %v3734
  %v4531 = vpop.f32.mrf.mxu0
  %v4532 = vadd.f32 %v4363, %v4531
  %v4533 = vpop.f32.mrf.mxu0
  %v4534 = vadd.f32 %v4365, %v4533
  %4535 = vmatmul.bf16.gmra.mxu0 %v3737
  %v4536 = vpop.f32.mrf.mxu0
  %v4537 = vadd.f32 %v4368, %v4536
  %v4538 = vpop.f32.mrf.mxu0
  %v4539 = vadd.f32 %v4370, %v4538
  %4540 = vmatmul.bf16.gmra.mxu0 %v3740
  %v4541 = vpop.f32.mrf.mxu0
  %v4542 = vadd.f32 %v4373, %v4541
  %v4543 = vpop.f32.mrf.mxu0
  %v4544 = vadd.f32 %v4375, %v4543
  %4545 = vmatmul.bf16.gmra.mxu0 %v3743
  %v4546 = vpop.f32.mrf.mxu0
  %v4547 = vadd.f32 %v4378, %v4546
  %v4548 = vpop.f32.mrf.mxu0
  %v4549 = vadd.f32 %v4380, %v4548
  %4550 = vmatmul.bf16.gmra.mxu0 %v3746
  %v4551 = vpop.f32.mrf.mxu0
  %v4552 = vadd.f32 %v4383, %v4551
  %v4553 = vpop.f32.mrf.mxu0
  %v4554 = vadd.f32 %v4385, %v4553
  %4555 = vmatmul.bf16.gmra.mxu0 %v3749
  %v4556 = vpop.f32.mrf.mxu0
  %v4557 = vadd.f32 %v4388, %v4556
  %v4558 = vpop.f32.mrf.mxu0
  %v4559 = vadd.f32 %v4390, %v4558
  %4560 = vmatmul.bf16.gmra.mxu0 %v3752
  %v4561 = vpop.f32.mrf.mxu0
  %v4562 = vadd.f32 %v4393, %v4561
  %v4563 = vpop.f32.mrf.mxu0
  %v4564 = vadd.f32 %v4395, %v4563
  %4565 = vmatmul.bf16.gmra.mxu0 %v3755
  %v4566 = vpop.f32.mrf.mxu0
  %v4567 = vadd.f32 %v4398, %v4566
  %v4568 = vpop.f32.mrf.mxu0
  %v4569 = vadd.f32 %v4400, %v4568
  %4570 = vmatmul.bf16.gmra.mxu0 %v3758
  %v4571 = vpop.f32.mrf.mxu0
  %v4572 = vadd.f32 %v4403, %v4571
  %v4573 = vpop.f32.mrf.mxu0
  %v4574 = vadd.f32 %v4405, %v4573
  %4575 = vmatmul.bf16.gmra.mxu0 %v3761
  %v4576 = vpop.f32.mrf.mxu0
  %v4577 = vadd.f32 %v4408, %v4576
  %v4578 = vpop.f32.mrf.mxu0
  %v4579 = vadd.f32 %v4410, %v4578
  %4580 = vmatmul.bf16.gmra.mxu0 %v3764
  %v4581 = vpop.f32.mrf.mxu0
  %v4582 = vadd.f32 %v4413, %v4581
  %v4583 = vpop.f32.mrf.mxu0
  %v4584 = vadd.f32 %v4415, %v4583
  %4585 = vmatmul.bf16.gmra.mxu0 %v3767
  %v4586 = vpop.f32.mrf.mxu0
  %v4587 = vadd.f32 %v4418, %v4586
  %v4588 = vpop.f32.mrf.mxu0
  %v4589 = vadd.f32 %v4420, %v4588
  %4590 = vmatmul.bf16.gmra.mxu0 %v3770
  %v4591 = vpop.f32.mrf.mxu0
  %v4592 = vadd.f32 %v4423, %v4591
  %v4593 = vpop.f32.mrf.mxu0
  %v4594 = vadd.f32 %v4425, %v4593
  %4595 = vmatmul.bf16.gmra.mxu0 %v3773
  %v4596 = vpop.f32.mrf.mxu0
  %v4597 = vadd.f32 %v4428, %v4596
  %v4598 = vpop.f32.mrf.mxu0
  %v4599 = vadd.f32 %v4430, %v4598
  %4600 = vmatmul.bf16.gmra.mxu0 %v3776
  %v4601 = vpop.f32.mrf.mxu0
  %v4602 = vadd.f32 %v4433, %v4601
  %v4603 = vpop.f32.mrf.mxu0
  %v4604 = vadd.f32 %v4435, %v4603
  %4605 = vmatmul.bf16.gmra.mxu0 %v3779
  %v4606 = vpop.f32.mrf.mxu0
  %v4607 = vadd.f32 %v4438, %v4606
  %v4608 = vpop.f32.mrf.mxu0
  %v4609 = vadd.f32 %v4440, %v4608
  %4610 = vmatmul.bf16.gmra.mxu0 %v3782
  %v4611 = vpop.f32.mrf.mxu0
  %v4612 = vadd.f32 %v4443, %v4611
  %v4613 = vpop.f32.mrf.mxu0
  %v4614 = vadd.f32 %v4445, %v4613
  %4615 = vmatmul.bf16.gmra.mxu0 %v3785
  %v4616 = vpop.f32.mrf.mxu0
  %v4617 = vadd.f32 %v4448, %v4616
  %v4618 = vpop.f32.mrf.mxu0
  %v4619 = vadd.f32 %v4450, %v4618
  %4620 = vmatmul.bf16.gmra.mxu0 %v3788
  %v4621 = vpop.f32.mrf.mxu0
  %v4622 = vadd.f32 %v4453, %v4621
  %v4623 = vpop.f32.mrf.mxu0
  %v4624 = vadd.f32 %v4455, %v4623
  %4625 = vmatmul.bf16.gmra.mxu0 %v3791
  %v4626 = vpop.f32.mrf.mxu0
  %v4627 = vadd.f32 %v4458, %v4626
  %v4628 = vpop.f32.mrf.mxu0
  %v4629 = vadd.f32 %v4460, %v4628
  %4630 = vmatmul.bf16.gmra.mxu0 %v3794
  %v4631 = vpop.f32.mrf.mxu0
  %v4632 = vadd.f32 %v4463, %v4631
  %v4633 = vpop.f32.mrf.mxu0
  %v4634 = vadd.f32 %v4465, %v4633
  %4635 = vdwg.mxu0
  %4636 = vmatpush.bf16.msra.mxu0 0
  %4637 = vmatpush.bf16.msra.mxu0 0
  %4638 = vmatpush.bf16.msra.mxu0 0
  %4639 = vmatpush.bf16.msra.mxu0 0
  %4640 = vmatpush.bf16.msra.mxu0 0
  %4641 = vmatpush.bf16.msra.mxu0 0
  %4642 = vmatpush.bf16.msra.mxu0 %v4183
  %4643 = vmatpush.bf16.msra.mxu0 %v4182
  %4644 = vmatmul.bf16.gmra.mxu0 %v4203
  %v4645 = vpop.f32.mrf.mxu0
  %v4646 = vadd.f32 %v4477, %v4645
  %v4647 = vpop.f32.mrf.mxu0
  %v4648 = vadd.f32 %v4479, %v4647
  %4649 = vmatmul.bf16.gmra.mxu0 %v4206
  %v4650 = vpop.f32.mrf.mxu0
  %v4651 = vadd.f32 %v4482, %v4650
  %v4652 = vpop.f32.mrf.mxu0
  %v4653 = vadd.f32 %v4484, %v4652
  %4654 = vmatmul.bf16.gmra.mxu0 %v4209
  %v4655 = vpop.f32.mrf.mxu0
  %v4656 = vadd.f32 %v4487, %v4655
  %v4657 = vpop.f32.mrf.mxu0
  %v4658 = vadd.f32 %v4489, %v4657
  %4659 = vmatmul.bf16.gmra.mxu0 %v4212
  %v4660 = vpop.f32.mrf.mxu0
  %v4661 = vadd.f32 %v4492, %v4660
  %v4662 = vpop.f32.mrf.mxu0
  %v4663 = vadd.f32 %v4494, %v4662
  %4664 = vmatmul.bf16.gmra.mxu0 %v4215
  %v4665 = vpop.f32.mrf.mxu0
  %v4666 = vadd.f32 %v4497, %v4665
  %v4667 = vpop.f32.mrf.mxu0
  %v4668 = vadd.f32 %v4499, %v4667
  %4669 = vmatmul.bf16.gmra.mxu0 %v4218
  %v4670 = vpop.f32.mrf.mxu0
  %v4671 = vadd.f32 %v4502, %v4670
  %v4672 = vpop.f32.mrf.mxu0
  %v4673 = vadd.f32 %v4504, %v4672
  %4674 = vmatmul.bf16.gmra.mxu0 %v4221
  %v4675 = vpop.f32.mrf.mxu0
  %v4676 = vadd.f32 %v4507, %v4675
  %v4677 = vpop.f32.mrf.mxu0
  %v4678 = vadd.f32 %v4509, %v4677
  %4679 = vmatmul.bf16.gmra.mxu0 %v4224
  %v4680 = vpop.f32.mrf.mxu0
  %v4681 = vadd.f32 %v4512, %v4680
  %v4682 = vpop.f32.mrf.mxu0
  %v4683 = vadd.f32 %v4514, %v4682
  %4684 = vmatmul.bf16.gmra.mxu0 %v4227
  %v4685 = vpop.f32.mrf.mxu0
  %v4686 = vadd.f32 %v4517, %v4685
  %v4687 = vpop.f32.mrf.mxu0
  %v4688 = vadd.f32 %v4519, %v4687
  %4689 = vmatmul.bf16.gmra.mxu0 %v4230
  %v4690 = vpop.f32.mrf.mxu0
  %v4691 = vadd.f32 %v4522, %v4690
  %v4692 = vpop.f32.mrf.mxu0
  %v4693 = vadd.f32 %v4524, %v4692
  %4694 = vmatmul.bf16.gmra.mxu0 %v4233
  %v4695 = vpop.f32.mrf.mxu0
  %v4696 = vadd.f32 %v4527, %v4695
  %v4697 = vpop.f32.mrf.mxu0
  %v4698 = vadd.f32 %v4529, %v4697
  %4699 = vmatmul.bf16.gmra.mxu0 %v4236
  %v4700 = vpop.f32.mrf.mxu0
  %v4701 = vadd.f32 %v4532, %v4700
  %v4702 = vpop.f32.mrf.mxu0
  %v4703 = vadd.f32 %v4534, %v4702
  %4704 = vmatmul.bf16.gmra.mxu0 %v4239
  %v4705 = vpop.f32.mrf.mxu0
  %v4706 = vadd.f32 %v4537, %v4705
  %v4707 = vpop.f32.mrf.mxu0
  %v4708 = vadd.f32 %v4539, %v4707
  %4709 = vmatmul.bf16.gmra.mxu0 %v4242
  %v4710 = vpop.f32.mrf.mxu0
  %v4711 = vadd.f32 %v4542, %v4710
  %v4712 = vpop.f32.mrf.mxu0
  %v4713 = vadd.f32 %v4544, %v4712
  %4714 = vmatmul.bf16.gmra.mxu0 %v4245
  %v4715 = vpop.f32.mrf.mxu0
  %v4716 = vadd.f32 %v4547, %v4715
  %v4717 = vpop.f32.mrf.mxu0
  %v4718 = vadd.f32 %v4549, %v4717
  %4719 = vmatmul.bf16.gmra.mxu0 %v4248
  %v4720 = vpop.f32.mrf.mxu0
  %v4721 = vadd.f32 %v4552, %v4720
  %v4722 = vpop.f32.mrf.mxu0
  %v4723 = vadd.f32 %v4554, %v4722
  %4724 = vmatmul.bf16.gmra.mxu0 %v4251
  %v4725 = vpop.f32.mrf.mxu0
  %v4726 = vadd.f32 %v4557, %v4725
  %v4727 = vpop.f32.mrf.mxu0
  %v4728 = vadd.f32 %v4559, %v4727
  %4729 = vmatmul.bf16.gmra.mxu0 %v4254
  %v4730 = vpop.f32.mrf.mxu0
  %v4731 = vadd.f32 %v4562, %v4730
  %v4732 = vpop.f32.mrf.mxu0
  %v4733 = vadd.f32 %v4564, %v4732
  %4734 = vmatmul.bf16.gmra.mxu0 %v4257
  %v4735 = vpop.f32.mrf.mxu0
  %v4736 = vadd.f32 %v4567, %v4735
  %v4737 = vpop.f32.mrf.mxu0
  %v4738 = vadd.f32 %v4569, %v4737
  %4739 = vmatmul.bf16.gmra.mxu0 %v4260
  %v4740 = vpop.f32.mrf.mxu0
  %v4741 = vadd.f32 %v4572, %v4740
  %v4742 = vpop.f32.mrf.mxu0
  %v4743 = vadd.f32 %v4574, %v4742
  %4744 = vmatmul.bf16.gmra.mxu0 %v4263
  %v4745 = vpop.f32.mrf.mxu0
  %v4746 = vadd.f32 %v4577, %v4745
  %v4747 = vpop.f32.mrf.mxu0
  %v4748 = vadd.f32 %v4579, %v4747
  %4749 = vmatmul.bf16.gmra.mxu0 %v4266
  %v4750 = vpop.f32.mrf.mxu0
  %v4751 = vadd.f32 %v4582, %v4750
  %v4752 = vpop.f32.mrf.mxu0
  %v4753 = vadd.f32 %v4584, %v4752
  %4754 = vmatmul.bf16.gmra.mxu0 %v4269
  %v4755 = vpop.f32.mrf.mxu0
  %v4756 = vadd.f32 %v4587, %v4755
  %v4757 = vpop.f32.mrf.mxu0
  %v4758 = vadd.f32 %v4589, %v4757
  %4759 = vmatmul.bf16.gmra.mxu0 %v4272
  %v4760 = vpop.f32.mrf.mxu0
  %v4761 = vadd.f32 %v4592, %v4760
  %v4762 = vpop.f32.mrf.mxu0
  %v4763 = vadd.f32 %v4594, %v4762
  %4764 = vmatmul.bf16.gmra.mxu0 %v4275
  %v4765 = vpop.f32.mrf.mxu0
  %v4766 = vadd.f32 %v4597, %v4765
  %v4767 = vpop.f32.mrf.mxu0
  %v4768 = vadd.f32 %v4599, %v4767
  %4769 = vmatmul.bf16.gmra.mxu0 %v4278
  %v4770 = vpop.f32.mrf.mxu0
  %v4771 = vadd.f32 %v4602, %v4770
  %v4772 = vpop.f32.mrf.mxu0
  %v4773 = vadd.f32 %v4604, %v4772
  %4774 = vmatmul.bf16.gmra.mxu0 %v4281
  %v4775 = vpop.f32.mrf.mxu0
  %v4776 = vadd.f32 %v4607, %v4775
  %v4777 = vpop.f32.mrf.mxu0
  %v4778 = vadd.f32 %v4609, %v4777
  %4779 = vmatmul.bf16.gmra.mxu0 %v4284
  %v4780 = vpop.f32.mrf.mxu0
  %v4781 = vadd.f32 %v4612, %v4780
  %v4782 = vpop.f32.mrf.mxu0
  %v4783 = vadd.f32 %v4614, %v4782
  %4784 = vmatmul.bf16.gmra.mxu0 %v4287
  %v4785 = vpop.f32.mrf.mxu0
  %v4786 = vadd.f32 %v4617, %v4785
  %v4787 = vpop.f32.mrf.mxu0
  %v4788 = vadd.f32 %v4619, %v4787
  %4789 = vmatmul.bf16.gmra.mxu0 %v4290
  %v4790 = vpop.f32.mrf.mxu0
  %v4791 = vadd.f32 %v4622, %v4790
  %v4792 = vpop.f32.mrf.mxu0
  %v4793 = vadd.f32 %v4624, %v4792
  %4794 = vmatmul.bf16.gmra.mxu0 %v4293
  %v4795 = vpop.f32.mrf.mxu0
  %v4796 = vadd.f32 %v4627, %v4795
  %v4797 = vpop.f32.mrf.mxu0
  %v4798 = vadd.f32 %v4629, %v4797
  %4799 = vmatmul.bf16.gmra.mxu0 %v4296
  %v4800 = vpop.f32.mrf.mxu0
  %v4801 = vadd.f32 %v4632, %v4800
  %v4802 = vpop.f32.mrf.mxu0
  %v4803 = vadd.f32 %v4634, %v4802
  %4804 = vdwg.mxu0
  %v4805 = vadd.f32 %v3899, %v4646
  %v4806 = vadd.f32 %v3901, %v4648
  %v4807 = vadd.f32 %v3904, %v4651
  %v4808 = vadd.f32 %v3906, %v4653
  %v4809 = vadd.f32 %v3909, %v4656
  %v4810 = vadd.f32 %v3911, %v4658
  %v4811 = vadd.f32 %v3914, %v4661
  %v4812 = vadd.f32 %v3916, %v4663
  %v4813 = vadd.f32 %v3919, %v4666
  %v4814 = vadd.f32 %v3921, %v4668
  %v4815 = vadd.f32 %v3924, %v4671
  %v4816 = vadd.f32 %v3926, %v4673
  %v4817 = vadd.f32 %v3929, %v4676
  %v4818 = vadd.f32 %v3931, %v4678
  %v4819 = vadd.f32 %v3934, %v4681
  %v4820 = vadd.f32 %v3936, %v4683
  %v4821 = vadd.f32 %v3939, %v4686
  %v4822 = vadd.f32 %v3941, %v4688
  %v4823 = vadd.f32 %v3944, %v4691
  %v4824 = vadd.f32 %v3946, %v4693
  %v4825 = vadd.f32 %v3949, %v4696
  %v4826 = vadd.f32 %v3951, %v4698
  %v4827 = vadd.f32 %v3954, %v4701
  %v4828 = vadd.f32 %v3956, %v4703
  %v4829 = vadd.f32 %v3959, %v4706
  %v4830 = vadd.f32 %v3961, %v4708
  %v4831 = vadd.f32 %v3964, %v4711
  %v4832 = vadd.f32 %v3966, %v4713
  %v4833 = vadd.f32 %v3969, %v4716
  %v4834 = vadd.f32 %v3971, %v4718
  %v4835 = vadd.f32 %v3974, %v4721
  %v4836 = vadd.f32 %v3976, %v4723
  %v4837 = vadd.f32 %v3979, %v4726
  %v4838 = vadd.f32 %v3981, %v4728
  %v4839 = vadd.f32 %v3984, %v4731
  %v4840 = vadd.f32 %v3986, %v4733
  %v4841 = vadd.f32 %v3989, %v4736
  %v4842 = vadd.f32 %v3991, %v4738
  %v4843 = vadd.f32 %v3994, %v4741
  %v4844 = vadd.f32 %v3996, %v4743
  %v4845 = vadd.f32 %v3999, %v4746
  %v4846 = vadd.f32 %v4001, %v4748
  %v4847 = vadd.f32 %v4004, %v4751
  %v4848 = vadd.f32 %v4006, %v4753
  %v4849 = vadd.f32 %v4009, %v4756
  %v4850 = vadd.f32 %v4011, %v4758
  %v4851 = vadd.f32 %v4014, %v4761
  %v4852 = vadd.f32 %v4016, %v4763
  %v4853 = vadd.f32 %v4019, %v4766
  %v4854 = vadd.f32 %v4021, %v4768
  %v4855 = vadd.f32 %v4024, %v4771
  %v4856 = vadd.f32 %v4026, %v4773
  %v4857 = vadd.f32 %v4029, %v4776
  %v4858 = vadd.f32 %v4031, %v4778
  %v4859 = vadd.f32 %v4034, %v4781
  %v4860 = vadd.f32 %v4036, %v4783
  %v4861 = vadd.f32 %v4039, %v4786
  %v4862 = vadd.f32 %v4041, %v4788
  %v4863 = vadd.f32 %v4044, %v4791
  %v4864 = vadd.f32 %v4046, %v4793
  %v4865 = vadd.f32 %v4049, %v4796
  %v4866 = vadd.f32 %v4051, %v4798
  %v4867 = vadd.f32 %v4054, %v4801
  %v4868 = vadd.f32 %v4056, %v4803
  %v4869 = vmul.f32 %v4805, 0.5
  %v4870 = vmul.f32 %v4806, 0.5
  %v4871 = vmul.f32 %v4807, 0.5
  %v4872 = vmul.f32 %v4808, 0.5
  %v4873 = vmul.f32 %v4809, 0.5
  %v4874 = vmul.f32 %v4810, 0.5
  %v4875 = vmul.f32 %v4811, 0.5
  %v4876 = vmul.f32 %v4812, 0.5
  %v4877 = vmul.f32 %v4813, 0.5
  %v4878 = vmul.f32 %v4814, 0.5
  %v4879 = vmul.f32 %v4815, 0.5
  %v4880 = vmul.f32 %v4816, 0.5
  %v4881 = vmul.f32 %v4817, 0.5
  %v4882 = vmul.f32 %v4818, 0.5
  %v4883 = vmul.f32 %v4819, 0.5
  %v4884 = vmul.f32 %v4820, 0.5
  %v4885 = vmul.f32 %v4821, 0.5
  %v4886 = vmul.f32 %v4822, 0.5
  %v4887 = vmul.f32 %v4823, 0.5
  %v4888 = vmul.f32 %v4824, 0.5
  %v4889 = vmul.f32 %v4825, 0.5
  %v4890 = vmul.f32 %v4826, 0.5
  %v4891 = vmul.f32 %v4827, 0.5
  %v4892 = vmul.f32 %v4828, 0.5
  %v4893 = vmul.f32 %v4829, 0.5
  %v4894 = vmul.f32 %v4830, 0.5
  %v4895 = vmul.f32 %v4831, 0.5
  %v4896 = vmul.f32 %v4832, 0.5
  %v4897 = vmul.f32 %v4833, 0.5
  %v4898 = vmul.f32 %v4834, 0.5
  %v4899 = vmul.f32 %v4835, 0.5
  %v4900 = vmul.f32 %v4836, 0.5
  %v4901 = vmul.f32 %v4837, 0.5
  %v4902 = vmul.f32 %v4838, 0.5
  %v4903 = vmul.f32 %v4839, 0.5
  %v4904 = vmul.f32 %v4840, 0.5
  %v4905 = vmul.f32 %v4841, 0.5
  %v4906 = vmul.f32 %v4842, 0.5
  %v4907 = vmul.f32 %v4843, 0.5
  %v4908 = vmul.f32 %v4844, 0.5
  %v4909 = vmul.f32 %v4845, 0.5
  %v4910 = vmul.f32 %v4846, 0.5
  %v4911 = vmul.f32 %v4847, 0.5
  %v4912 = vmul.f32 %v4848, 0.5
  %v4913 = vmul.f32 %v4849, 0.5
  %v4914 = vmul.f32 %v4850, 0.5
  %v4915 = vmul.f32 %v4851, 0.5
  %v4916 = vmul.f32 %v4852, 0.5
  %v4917 = vmul.f32 %v4853, 0.5
  %v4918 = vmul.f32 %v4854, 0.5
  %v4919 = vmul.f32 %v4855, 0.5
  %v4920 = vmul.f32 %v4856, 0.5
  %v4921 = vmul.f32 %v4857, 0.5
  %v4922 = vmul.f32 %v4858, 0.5
  %v4923 = vmul.f32 %v4859, 0.5
  %v4924 = vmul.f32 %v4860, 0.5
  %v4925 = vmul.f32 %v4861, 0.5
  %v4926 = vmul.f32 %v4862, 0.5
  %v4927 = vmul.f32 %v4863, 0.5
  %v4928 = vmul.f32 %v4864, 0.5
  %v4929 = vmul.f32 %v4865, 0.5
  %v4930 = vmul.f32 %v4866, 0.5
  %v4931 = vmul.f32 %v4867, 0.5
  %v4932 = vmul.f32 %v4868, 0.5
  %v4933 = vtanh.pop %v4869
  %v4934 = vtanh.pop %v4870
  %v4935 = vtanh.pop %v4871
  %v4936 = vtanh.pop %v4872
  %v4937 = vtanh.pop %v4873
  %v4938 = vtanh.pop %v4874
  %v4939 = vtanh.pop %v4875
  %v4940 = vtanh.pop %v4876
  %v4941 = vtanh.pop %v4877
  %v4942 = vtanh.pop %v4878
  %v4943 = vtanh.pop %v4879
  %v4944 = vtanh.pop %v4880
  %v4945 = vtanh.pop %v4881
  %v4946 = vtanh.pop %v4882
  %v4947 = vtanh.pop %v4883
  %v4948 = vtanh.pop %v4884
  %v4949 = vtanh.pop %v4885
  %v4950 = vtanh.pop %v4886
  %v4951 = vtanh.pop %v4887
  %v4952 = vtanh.pop %v4888
  %v4953 = vtanh.pop %v4889
  %v4954 = vtanh.pop %v4890
  %v4955 = vtanh.pop %v4891
  %v4956 = vtanh.pop %v4892
  %v4957 = vtanh.pop %v4893
  %v4958 = vtanh.pop %v4894
  %v4959 = vtanh.pop %v4895
  %v4960 = vtanh.pop %v4896
  %v4961 = vtanh.pop %v4897
  %v4962 = vtanh.pop %v4898
  %v4963 = vtanh.pop %v4899
  %v4964 = vtanh.pop %v4900
  %v4965 = vtanh.pop %v4901
  %v4966 = vtanh.pop %v4902
  %v4967 = vtanh.pop %v4903
  %v4968 = vtanh.pop %v4904
  %v4969 = vtanh.pop %v4905
  %v4970 = vtanh.pop %v4906
  %v4971 = vtanh.pop %v4907
  %v4972 = vtanh.pop %v4908
  %v4973 = vtanh.pop %v4909
  %v4974 = vtanh.pop %v4910
  %v4975 = vtanh.pop %v4911
  %v4976 = vtanh.pop %v4912
  %v4977 = vtanh.pop %v4913
  %v4978 = vtanh.pop %v4914
  %v4979 = vtanh.pop %v4915
  %v4980 = vtanh.pop %v4916
  %v4981 = vtanh.pop %v4917
  %v4982 = vtanh.pop %v4918
  %v4983 = vtanh.pop %v4919
  %v4984 = vtanh.pop %v4920
  %v4985 = vtanh.pop %v4921
  %v4986 = vtanh.pop %v4922
  %v4987 = vtanh.pop %v4923
  %v4988 = vtanh.pop %v4924
  %v4989 = vtanh.pop %v4925
  %v4990 = vtanh.pop %v4926
  %v4991 = vtanh.pop %v4927
  %v4992 = vtanh.pop %v4928
  %v4993 = vtanh.pop %v4929
  %v4994 = vtanh.pop %v4930
  %v4995 = vtanh.pop %v4931
  %v4996 = vtanh.pop %v4932
  %v4997 = vadd.f32 %v4933, 1.0
  %v4998 = vadd.f32 %v4934, 1.0
  %v4999 = vadd.f32 %v4935, 1.0
  %v5000 = vadd.f32 %v4936, 1.0
  %v5001 = vadd.f32 %v4937, 1.0
  %v5002 = vadd.f32 %v4938, 1.0
  %v5003 = vadd.f32 %v4939, 1.0
  %v5004 = vadd.f32 %v4940, 1.0
  %v5005 = vadd.f32 %v4941, 1.0
  %v5006 = vadd.f32 %v4942, 1.0
  %v5007 = vadd.f32 %v4943, 1.0
  %v5008 = vadd.f32 %v4944, 1.0
  %v5009 = vadd.f32 %v4945, 1.0
  %v5010 = vadd.f32 %v4946, 1.0
  %v5011 = vadd.f32 %v4947, 1.0
  %v5012 = vadd.f32 %v4948, 1.0
  %v5013 = vadd.f32 %v4949, 1.0
  %v5014 = vadd.f32 %v4950, 1.0
  %v5015 = vadd.f32 %v4951, 1.0
  %v5016 = vadd.f32 %v4952, 1.0
  %v5017 = vadd.f32 %v4953, 1.0
  %v5018 = vadd.f32 %v4954, 1.0
  %v5019 = vadd.f32 %v4955, 1.0
  %v5020 = vadd.f32 %v4956, 1.0
  %v5021 = vadd.f32 %v4957, 1.0
  %v5022 = vadd.f32 %v4958, 1.0
  %v5023 = vadd.f32 %v4959, 1.0
  %v5024 = vadd.f32 %v4960, 1.0
  %v5025 = vadd.f32 %v4961, 1.0
  %v5026 = vadd.f32 %v4962, 1.0
  %v5027 = vadd.f32 %v4963, 1.0
  %v5028 = vadd.f32 %v4964, 1.0
  %v5029 = vadd.f32 %v4965, 1.0
  %v5030 = vadd.f32 %v4966, 1.0
  %v5031 = vadd.f32 %v4967, 1.0
  %v5032 = vadd.f32 %v4968, 1.0
  %v5033 = vadd.f32 %v4969, 1.0
  %v5034 = vadd.f32 %v4970, 1.0
  %v5035 = vadd.f32 %v4971, 1.0
  %v5036 = vadd.f32 %v4972, 1.0
  %v5037 = vadd.f32 %v4973, 1.0
  %v5038 = vadd.f32 %v4974, 1.0
  %v5039 = vadd.f32 %v4975, 1.0
  %v5040 = vadd.f32 %v4976, 1.0
  %v5041 = vadd.f32 %v4977, 1.0
  %v5042 = vadd.f32 %v4978, 1.0
  %v5043 = vadd.f32 %v4979, 1.0
  %v5044 = vadd.f32 %v4980, 1.0
  %v5045 = vadd.f32 %v4981, 1.0
  %v5046 = vadd.f32 %v4982, 1.0
  %v5047 = vadd.f32 %v4983, 1.0
  %v5048 = vadd.f32 %v4984, 1.0
  %v5049 = vadd.f32 %v4985, 1.0
  %v5050 = vadd.f32 %v4986, 1.0
  %v5051 = vadd.f32 %v4987, 1.0
  %v5052 = vadd.f32 %v4988, 1.0
  %v5053 = vadd.f32 %v4989, 1.0
  %v5054 = vadd.f32 %v4990, 1.0
  %v5055 = vadd.f32 %v4991, 1.0
  %v5056 = vadd.f32 %v4992, 1.0
  %v5057 = vadd.f32 %v4993, 1.0
  %v5058 = vadd.f32 %v4994, 1.0
  %v5059 = vadd.f32 %v4995, 1.0
  %v5060 = vadd.f32 %v4996, 1.0
  %v5061 = vmul.f32 %v4997, 0.5
  %v5062 = vmul.f32 %v4998, 0.5
  %v5063 = vmul.f32 %v4999, 0.5
  %v5064 = vmul.f32 %v5000, 0.5
  %v5065 = vmul.f32 %v5001, 0.5
  %v5066 = vmul.f32 %v5002, 0.5
  %v5067 = vmul.f32 %v5003, 0.5
  %v5068 = vmul.f32 %v5004, 0.5
  %v5069 = vmul.f32 %v5005, 0.5
  %v5070 = vmul.f32 %v5006, 0.5
  %v5071 = vmul.f32 %v5007, 0.5
  %v5072 = vmul.f32 %v5008, 0.5
  %v5073 = vmul.f32 %v5009, 0.5
  %v5074 = vmul.f32 %v5010, 0.5
  %v5075 = vmul.f32 %v5011, 0.5
  %v5076 = vmul.f32 %v5012, 0.5
  %v5077 = vmul.f32 %v5013, 0.5
  %v5078 = vmul.f32 %v5014, 0.5
  %v5079 = vmul.f32 %v5015, 0.5
  %v5080 = vmul.f32 %v5016, 0.5
  %v5081 = vmul.f32 %v5017, 0.5
  %v5082 = vmul.f32 %v5018, 0.5
  %v5083 = vmul.f32 %v5019, 0.5
  %v5084 = vmul.f32 %v5020, 0.5
  %v5085 = vmul.f32 %v5021, 0.5
  %v5086 = vmul.f32 %v5022, 0.5
  %v5087 = vmul.f32 %v5023, 0.5
  %v5088 = vmul.f32 %v5024, 0.5
  %v5089 = vmul.f32 %v5025, 0.5
  %v5090 = vmul.f32 %v5026, 0.5
  %v5091 = vmul.f32 %v5027, 0.5
  %v5092 = vmul.f32 %v5028, 0.5
  %v5093 = vmul.f32 %v5029, 0.5
  %v5094 = vmul.f32 %v5030, 0.5
  %v5095 = vmul.f32 %v5031, 0.5
  %v5096 = vmul.f32 %v5032, 0.5
  %v5097 = vmul.f32 %v5033, 0.5
  %v5098 = vmul.f32 %v5034, 0.5
  %v5099 = vmul.f32 %v5035, 0.5
  %v5100 = vmul.f32 %v5036, 0.5
  %v5101 = vmul.f32 %v5037, 0.5
  %v5102 = vmul.f32 %v5038, 0.5
  %v5103 = vmul.f32 %v5039, 0.5
  %v5104 = vmul.f32 %v5040, 0.5
  %v5105 = vmul.f32 %v5041, 0.5
  %v5106 = vmul.f32 %v5042, 0.5
  %v5107 = vmul.f32 %v5043, 0.5
  %v5108 = vmul.f32 %v5044, 0.5
  %v5109 = vmul.f32 %v5045, 0.5
  %v5110 = vmul.f32 %v5046, 0.5
  %v5111 = vmul.f32 %v5047, 0.5
  %v5112 = vmul.f32 %v5048, 0.5
  %v5113 = vmul.f32 %v5049, 0.5
  %v5114 = vmul.f32 %v5050, 0.5
  %v5115 = vmul.f32 %v5051, 0.5
  %v5116 = vmul.f32 %v5052, 0.5
  %v5117 = vmul.f32 %v5053, 0.5
  %v5118 = vmul.f32 %v5054, 0.5
  %v5119 = vmul.f32 %v5055, 0.5
  %v5120 = vmul.f32 %v5056, 0.5
  %v5121 = vmul.f32 %v5057, 0.5
  %v5122 = vmul.f32 %v5058, 0.5
  %v5123 = vmul.f32 %v5059, 0.5
  %v5124 = vmul.f32 %v5060, 0.5
  %5189 = vrot.lane.b32.xlu0 %v4646, 64
  %v5190 = vpop.permute.xlu0 %5189
  %5191 = vrot.lane.b32.xlu0 %v4648, 64
  %v5192 = vpop.permute.xlu0 %5191
  %5193 = vrot.lane.b32.xlu0 %v4651, 64
  %v5194 = vpop.permute.xlu0 %5193
  %5195 = vrot.lane.b32.xlu0 %v4653, 64
  %v5196 = vpop.permute.xlu0 %5195
  %5197 = vrot.lane.b32.xlu0 %v4656, 64
  %v5198 = vpop.permute.xlu0 %5197
  %5199 = vrot.lane.b32.xlu0 %v4658, 64
  %v5200 = vpop.permute.xlu0 %5199
  %5201 = vrot.lane.b32.xlu0 %v4661, 64
  %v5202 = vpop.permute.xlu0 %5201
  %5203 = vrot.lane.b32.xlu0 %v4663, 64
  %v5204 = vpop.permute.xlu0 %5203
  %5205 = vrot.lane.b32.xlu0 %v4666, 64
  %v5206 = vpop.permute.xlu0 %5205
  %5207 = vrot.lane.b32.xlu0 %v4668, 64
  %v5208 = vpop.permute.xlu0 %5207
  %5209 = vrot.lane.b32.xlu0 %v4671, 64
  %v5210 = vpop.permute.xlu0 %5209
  %5211 = vrot.lane.b32.xlu0 %v4673, 64
  %v5212 = vpop.permute.xlu0 %5211
  %5213 = vrot.lane.b32.xlu0 %v4676, 64
  %v5214 = vpop.permute.xlu0 %5213
  %5215 = vrot.lane.b32.xlu0 %v4678, 64
  %v5216 = vpop.permute.xlu0 %5215
  %5217 = vrot.lane.b32.xlu0 %v4681, 64
  %v5218 = vpop.permute.xlu0 %5217
  %5219 = vrot.lane.b32.xlu0 %v4683, 64
  %v5220 = vpop.permute.xlu0 %5219
  %5221 = vrot.lane.b32.xlu0 %v4686, 64
  %v5222 = vpop.permute.xlu0 %5221
  %5223 = vrot.lane.b32.xlu0 %v4688, 64
  %v5224 = vpop.permute.xlu0 %5223
  %5225 = vrot.lane.b32.xlu0 %v4691, 64
  %v5226 = vpop.permute.xlu0 %5225
  %5227 = vrot.lane.b32.xlu0 %v4693, 64
  %v5228 = vpop.permute.xlu0 %5227
  %5229 = vrot.lane.b32.xlu0 %v4696, 64
  %v5230 = vpop.permute.xlu0 %5229
  %5231 = vrot.lane.b32.xlu0 %v4698, 64
  %v5232 = vpop.permute.xlu0 %5231
  %5233 = vrot.lane.b32.xlu0 %v4701, 64
  %v5234 = vpop.permute.xlu0 %5233
  %5235 = vrot.lane.b32.xlu0 %v4703, 64
  %v5236 = vpop.permute.xlu0 %5235
  %5237 = vrot.lane.b32.xlu0 %v4706, 64
  %v5238 = vpop.permute.xlu0 %5237
  %5239 = vrot.lane.b32.xlu0 %v4708, 64
  %v5240 = vpop.permute.xlu0 %5239
  %5241 = vrot.lane.b32.xlu0 %v4711, 64
  %v5242 = vpop.permute.xlu0 %5241
  %5243 = vrot.lane.b32.xlu0 %v4713, 64
  %v5244 = vpop.permute.xlu0 %5243
  %5245 = vrot.lane.b32.xlu0 %v4716, 64
  %v5246 = vpop.permute.xlu0 %5245
  %5247 = vrot.lane.b32.xlu0 %v4718, 64
  %v5248 = vpop.permute.xlu0 %5247
  %5249 = vrot.lane.b32.xlu0 %v4721, 64
  %v5250 = vpop.permute.xlu0 %5249
  %5251 = vrot.lane.b32.xlu0 %v4723, 64
  %v5252 = vpop.permute.xlu0 %5251
  %5253 = vrot.lane.b32.xlu0 %v4726, 64
  %v5254 = vpop.permute.xlu0 %5253
  %5255 = vrot.lane.b32.xlu0 %v4728, 64
  %v5256 = vpop.permute.xlu0 %5255
  %5257 = vrot.lane.b32.xlu0 %v4731, 64
  %v5258 = vpop.permute.xlu0 %5257
  %5259 = vrot.lane.b32.xlu0 %v4733, 64
  %v5260 = vpop.permute.xlu0 %5259
  %5261 = vrot.lane.b32.xlu0 %v4736, 64
  %v5262 = vpop.permute.xlu0 %5261
  %5263 = vrot.lane.b32.xlu0 %v4738, 64
  %v5264 = vpop.permute.xlu0 %5263
  %5265 = vrot.lane.b32.xlu0 %v4741, 64
  %v5266 = vpop.permute.xlu0 %5265
  %5267 = vrot.lane.b32.xlu0 %v4743, 64
  %v5268 = vpop.permute.xlu0 %5267
  %5269 = vrot.lane.b32.xlu0 %v4746, 64
  %v5270 = vpop.permute.xlu0 %5269
  %5271 = vrot.lane.b32.xlu0 %v4748, 64
  %v5272 = vpop.permute.xlu0 %5271
  %5273 = vrot.lane.b32.xlu0 %v4751, 64
  %v5274 = vpop.permute.xlu0 %5273
  %5275 = vrot.lane.b32.xlu0 %v4753, 64
  %v5276 = vpop.permute.xlu0 %5275
  %5277 = vrot.lane.b32.xlu0 %v4756, 64
  %v5278 = vpop.permute.xlu0 %5277
  %5279 = vrot.lane.b32.xlu0 %v4758, 64
  %v5280 = vpop.permute.xlu0 %5279
  %5281 = vrot.lane.b32.xlu0 %v4761, 64
  %v5282 = vpop.permute.xlu0 %5281
  %5283 = vrot.lane.b32.xlu0 %v4763, 64
  %v5284 = vpop.permute.xlu0 %5283
  %5285 = vrot.lane.b32.xlu0 %v4766, 64
  %v5286 = vpop.permute.xlu0 %5285
  %5287 = vrot.lane.b32.xlu0 %v4768, 64
  %v5288 = vpop.permute.xlu0 %5287
  %5289 = vrot.lane.b32.xlu0 %v4771, 64
  %v5290 = vpop.permute.xlu0 %5289
  %5291 = vrot.lane.b32.xlu0 %v4773, 64
  %v5292 = vpop.permute.xlu0 %5291
  %5293 = vrot.lane.b32.xlu0 %v4776, 64
  %v5294 = vpop.permute.xlu0 %5293
  %5295 = vrot.lane.b32.xlu0 %v4778, 64
  %v5296 = vpop.permute.xlu0 %5295
  %5297 = vrot.lane.b32.xlu0 %v4781, 64
  %v5298 = vpop.permute.xlu0 %5297
  %5299 = vrot.lane.b32.xlu0 %v4783, 64
  %v5300 = vpop.permute.xlu0 %5299
  %5301 = vrot.lane.b32.xlu0 %v4786, 64
  %v5302 = vpop.permute.xlu0 %5301
  %5303 = vrot.lane.b32.xlu0 %v4788, 64
  %v5304 = vpop.permute.xlu0 %5303
  %5305 = vrot.lane.b32.xlu0 %v4791, 64
  %v5306 = vpop.permute.xlu0 %5305
  %5307 = vrot.lane.b32.xlu0 %v4793, 64
  %v5308 = vpop.permute.xlu0 %5307
  %5309 = vrot.lane.b32.xlu0 %v4796, 64
  %v5310 = vpop.permute.xlu0 %5309
  %5311 = vrot.lane.b32.xlu0 %v4798, 64
  %v5312 = vpop.permute.xlu0 %5311
  %5313 = vrot.lane.b32.xlu0 %v4801, 64
  %v5314 = vpop.permute.xlu0 %5313
  %5315 = vrot.lane.b32.xlu0 %v4803, 64
  %v5316 = vpop.permute.xlu0 %5315
  %v5381 = vmul.f32 %v5061, %v5190
  %v5382 = vmul.f32 %v5062, %v5192
  %v5383 = vmul.f32 %v5063, %v5194
  %v5384 = vmul.f32 %v5064, %v5196
  %v5385 = vmul.f32 %v5065, %v5198
  %v5386 = vmul.f32 %v5066, %v5200
  %v5387 = vmul.f32 %v5067, %v5202
  %v5388 = vmul.f32 %v5068, %v5204
  %v5389 = vmul.f32 %v5069, %v5206
  %v5390 = vmul.f32 %v5070, %v5208
  %v5391 = vmul.f32 %v5071, %v5210
  %v5392 = vmul.f32 %v5072, %v5212
  %v5393 = vmul.f32 %v5073, %v5214
  %v5394 = vmul.f32 %v5074, %v5216
  %v5395 = vmul.f32 %v5075, %v5218
  %v5396 = vmul.f32 %v5076, %v5220
  %v5397 = vmul.f32 %v5077, %v5222
  %v5398 = vmul.f32 %v5078, %v5224
  %v5399 = vmul.f32 %v5079, %v5226
  %v5400 = vmul.f32 %v5080, %v5228
  %v5401 = vmul.f32 %v5081, %v5230
  %v5402 = vmul.f32 %v5082, %v5232
  %v5403 = vmul.f32 %v5083, %v5234
  %v5404 = vmul.f32 %v5084, %v5236
  %v5405 = vmul.f32 %v5085, %v5238
  %v5406 = vmul.f32 %v5086, %v5240
  %v5407 = vmul.f32 %v5087, %v5242
  %v5408 = vmul.f32 %v5088, %v5244
  %v5409 = vmul.f32 %v5089, %v5246
  %v5410 = vmul.f32 %v5090, %v5248
  %v5411 = vmul.f32 %v5091, %v5250
  %v5412 = vmul.f32 %v5092, %v5252
  %v5413 = vmul.f32 %v5093, %v5254
  %v5414 = vmul.f32 %v5094, %v5256
  %v5415 = vmul.f32 %v5095, %v5258
  %v5416 = vmul.f32 %v5096, %v5260
  %v5417 = vmul.f32 %v5097, %v5262
  %v5418 = vmul.f32 %v5098, %v5264
  %v5419 = vmul.f32 %v5099, %v5266
  %v5420 = vmul.f32 %v5100, %v5268
  %v5421 = vmul.f32 %v5101, %v5270
  %v5422 = vmul.f32 %v5102, %v5272
  %v5423 = vmul.f32 %v5103, %v5274
  %v5424 = vmul.f32 %v5104, %v5276
  %v5425 = vmul.f32 %v5105, %v5278
  %v5426 = vmul.f32 %v5106, %v5280
  %v5427 = vmul.f32 %v5107, %v5282
  %v5428 = vmul.f32 %v5108, %v5284
  %v5429 = vmul.f32 %v5109, %v5286
  %v5430 = vmul.f32 %v5110, %v5288
  %v5431 = vmul.f32 %v5111, %v5290
  %v5432 = vmul.f32 %v5112, %v5292
  %v5433 = vmul.f32 %v5113, %v5294
  %v5434 = vmul.f32 %v5114, %v5296
  %v5435 = vmul.f32 %v5115, %v5298
  %v5436 = vmul.f32 %v5116, %v5300
  %v5437 = vmul.f32 %v5117, %v5302
  %v5438 = vmul.f32 %v5118, %v5304
  %v5439 = vmul.f32 %v5119, %v5306
  %v5440 = vmul.f32 %v5120, %v5308
  %v5441 = vmul.f32 %v5121, %v5310
  %v5442 = vmul.f32 %v5122, %v5312
  %v5443 = vmul.f32 %v5123, %v5314
  %v5444 = vmul.f32 %v5124, %v5316
  %5509 = vrot.lane.b32.xlu0 %v5381, 64
  %v5510 = vpop.permute.xlu0 %5509
  %5511 = vrot.lane.b32.xlu0 %v5382, 64
  %v5512 = vpop.permute.xlu0 %5511
  %5513 = vrot.lane.b32.xlu0 %v5383, 64
  %v5514 = vpop.permute.xlu0 %5513
  %5515 = vrot.lane.b32.xlu0 %v5384, 64
  %v5516 = vpop.permute.xlu0 %5515
  %5517 = vrot.lane.b32.xlu0 %v5385, 64
  %v5518 = vpop.permute.xlu0 %5517
  %5519 = vrot.lane.b32.xlu0 %v5386, 64
  %v5520 = vpop.permute.xlu0 %5519
  %5521 = vrot.lane.b32.xlu0 %v5387, 64
  %v5522 = vpop.permute.xlu0 %5521
  %5523 = vrot.lane.b32.xlu0 %v5388, 64
  %v5524 = vpop.permute.xlu0 %5523
  %5525 = vrot.lane.b32.xlu0 %v5389, 64
  %v5526 = vpop.permute.xlu0 %5525
  %5527 = vrot.lane.b32.xlu0 %v5390, 64
  %v5528 = vpop.permute.xlu0 %5527
  %5529 = vrot.lane.b32.xlu0 %v5391, 64
  %v5530 = vpop.permute.xlu0 %5529
  %5531 = vrot.lane.b32.xlu0 %v5392, 64
  %v5532 = vpop.permute.xlu0 %5531
  %5533 = vrot.lane.b32.xlu0 %v5393, 64
  %v5534 = vpop.permute.xlu0 %5533
  %5535 = vrot.lane.b32.xlu0 %v5394, 64
  %v5536 = vpop.permute.xlu0 %5535
  %5537 = vrot.lane.b32.xlu0 %v5395, 64
  %v5538 = vpop.permute.xlu0 %5537
  %5539 = vrot.lane.b32.xlu0 %v5396, 64
  %v5540 = vpop.permute.xlu0 %5539
  %5541 = vrot.lane.b32.xlu0 %v5397, 64
  %v5542 = vpop.permute.xlu0 %5541
  %5543 = vrot.lane.b32.xlu0 %v5398, 64
  %v5544 = vpop.permute.xlu0 %5543
  %5545 = vrot.lane.b32.xlu0 %v5399, 64
  %v5546 = vpop.permute.xlu0 %5545
  %5547 = vrot.lane.b32.xlu0 %v5400, 64
  %v5548 = vpop.permute.xlu0 %5547
  %5549 = vrot.lane.b32.xlu0 %v5401, 64
  %v5550 = vpop.permute.xlu0 %5549
  %5551 = vrot.lane.b32.xlu0 %v5402, 64
  %v5552 = vpop.permute.xlu0 %5551
  %5553 = vrot.lane.b32.xlu0 %v5403, 64
  %v5554 = vpop.permute.xlu0 %5553
  %5555 = vrot.lane.b32.xlu0 %v5404, 64
  %v5556 = vpop.permute.xlu0 %5555
  %5557 = vrot.lane.b32.xlu0 %v5405, 64
  %v5558 = vpop.permute.xlu0 %5557
  %5559 = vrot.lane.b32.xlu0 %v5406, 64
  %v5560 = vpop.permute.xlu0 %5559
  %5561 = vrot.lane.b32.xlu0 %v5407, 64
  %v5562 = vpop.permute.xlu0 %5561
  %5563 = vrot.lane.b32.xlu0 %v5408, 64
  %v5564 = vpop.permute.xlu0 %5563
  %5565 = vrot.lane.b32.xlu0 %v5409, 64
  %v5566 = vpop.permute.xlu0 %5565
  %5567 = vrot.lane.b32.xlu0 %v5410, 64
  %v5568 = vpop.permute.xlu0 %5567
  %5569 = vrot.lane.b32.xlu0 %v5411, 64
  %v5570 = vpop.permute.xlu0 %5569
  %5571 = vrot.lane.b32.xlu0 %v5412, 64
  %v5572 = vpop.permute.xlu0 %5571
  %5573 = vrot.lane.b32.xlu0 %v5413, 64
  %v5574 = vpop.permute.xlu0 %5573
  %5575 = vrot.lane.b32.xlu0 %v5414, 64
  %v5576 = vpop.permute.xlu0 %5575
  %5577 = vrot.lane.b32.xlu0 %v5415, 64
  %v5578 = vpop.permute.xlu0 %5577
  %5579 = vrot.lane.b32.xlu0 %v5416, 64
  %v5580 = vpop.permute.xlu0 %5579
  %5581 = vrot.lane.b32.xlu0 %v5417, 64
  %v5582 = vpop.permute.xlu0 %5581
  %5583 = vrot.lane.b32.xlu0 %v5418, 64
  %v5584 = vpop.permute.xlu0 %5583
  %5585 = vrot.lane.b32.xlu0 %v5419, 64
  %v5586 = vpop.permute.xlu0 %5585
  %5587 = vrot.lane.b32.xlu0 %v5420, 64
  %v5588 = vpop.permute.xlu0 %5587
  %5589 = vrot.lane.b32.xlu0 %v5421, 64
  %v5590 = vpop.permute.xlu0 %5589
  %5591 = vrot.lane.b32.xlu0 %v5422, 64
  %v5592 = vpop.permute.xlu0 %5591
  %5593 = vrot.lane.b32.xlu0 %v5423, 64
  %v5594 = vpop.permute.xlu0 %5593
  %5595 = vrot.lane.b32.xlu0 %v5424, 64
  %v5596 = vpop.permute.xlu0 %5595
  %5597 = vrot.lane.b32.xlu0 %v5425, 64
  %v5598 = vpop.permute.xlu0 %5597
  %5599 = vrot.lane.b32.xlu0 %v5426, 64
  %v5600 = vpop.permute.xlu0 %5599
  %5601 = vrot.lane.b32.xlu0 %v5427, 64
  %v5602 = vpop.permute.xlu0 %5601
  %5603 = vrot.lane.b32.xlu0 %v5428, 64
  %v5604 = vpop.permute.xlu0 %5603
  %5605 = vrot.lane.b32.xlu0 %v5429, 64
  %v5606 = vpop.permute.xlu0 %5605
  %5607 = vrot.lane.b32.xlu0 %v5430, 64
  %v5608 = vpop.permute.xlu0 %5607
  %5609 = vrot.lane.b32.xlu0 %v5431, 64
  %v5610 = vpop.permute.xlu0 %5609
  %5611 = vrot.lane.b32.xlu0 %v5432, 64
  %v5612 = vpop.permute.xlu0 %5611
  %5613 = vrot.lane.b32.xlu0 %v5433, 64
  %v5614 = vpop.permute.xlu0 %5613
  %5615 = vrot.lane.b32.xlu0 %v5434, 64
  %v5616 = vpop.permute.xlu0 %5615
  %5617 = vrot.lane.b32.xlu0 %v5435, 64
  %v5618 = vpop.permute.xlu0 %5617
  %5619 = vrot.lane.b32.xlu0 %v5436, 64
  %v5620 = vpop.permute.xlu0 %5619
  %5621 = vrot.lane.b32.xlu0 %v5437, 64
  %v5622 = vpop.permute.xlu0 %5621
  %5623 = vrot.lane.b32.xlu0 %v5438, 64
  %v5624 = vpop.permute.xlu0 %5623
  %5625 = vrot.lane.b32.xlu0 %v5439, 64
  %v5626 = vpop.permute.xlu0 %5625
  %5627 = vrot.lane.b32.xlu0 %v5440, 64
  %v5628 = vpop.permute.xlu0 %5627
  %5629 = vrot.lane.b32.xlu0 %v5441, 64
  %v5630 = vpop.permute.xlu0 %5629
  %5631 = vrot.lane.b32.xlu0 %v5442, 64
  %v5632 = vpop.permute.xlu0 %5631
  %5633 = vrot.lane.b32.xlu0 %v5443, 64
  %v5634 = vpop.permute.xlu0 %5633
  %5635 = vrot.lane.b32.xlu0 %v5444, 64
  %v5636 = vpop.permute.xlu0 %5635
  %v5701 = vadd.f32 %v3899, %v5510
  %v5702 = vadd.f32 %v3901, %v5512
  %v5703 = vadd.f32 %v3904, %v5514
  %v5704 = vadd.f32 %v3906, %v5516
  %v5705 = vadd.f32 %v3909, %v5518
  %v5706 = vadd.f32 %v3911, %v5520
  %v5707 = vadd.f32 %v3914, %v5522
  %v5708 = vadd.f32 %v3916, %v5524
  %v5709 = vadd.f32 %v3919, %v5526
  %v5710 = vadd.f32 %v3921, %v5528
  %v5711 = vadd.f32 %v3924, %v5530
  %v5712 = vadd.f32 %v3926, %v5532
  %v5713 = vadd.f32 %v3929, %v5534
  %v5714 = vadd.f32 %v3931, %v5536
  %v5715 = vadd.f32 %v3934, %v5538
  %v5716 = vadd.f32 %v3936, %v5540
  %v5717 = vadd.f32 %v3939, %v5542
  %v5718 = vadd.f32 %v3941, %v5544
  %v5719 = vadd.f32 %v3944, %v5546
  %v5720 = vadd.f32 %v3946, %v5548
  %v5721 = vadd.f32 %v3949, %v5550
  %v5722 = vadd.f32 %v3951, %v5552
  %v5723 = vadd.f32 %v3954, %v5554
  %v5724 = vadd.f32 %v3956, %v5556
  %v5725 = vadd.f32 %v3959, %v5558
  %v5726 = vadd.f32 %v3961, %v5560
  %v5727 = vadd.f32 %v3964, %v5562
  %v5728 = vadd.f32 %v3966, %v5564
  %v5729 = vadd.f32 %v3969, %v5566
  %v5730 = vadd.f32 %v3971, %v5568
  %v5731 = vadd.f32 %v3974, %v5570
  %v5732 = vadd.f32 %v3976, %v5572
  %v5733 = vadd.f32 %v3979, %v5574
  %v5734 = vadd.f32 %v3981, %v5576
  %v5735 = vadd.f32 %v3984, %v5578
  %v5736 = vadd.f32 %v3986, %v5580
  %v5737 = vadd.f32 %v3989, %v5582
  %v5738 = vadd.f32 %v3991, %v5584
  %v5739 = vadd.f32 %v3994, %v5586
  %v5740 = vadd.f32 %v3996, %v5588
  %v5741 = vadd.f32 %v3999, %v5590
  %v5742 = vadd.f32 %v4001, %v5592
  %v5743 = vadd.f32 %v4004, %v5594
  %v5744 = vadd.f32 %v4006, %v5596
  %v5745 = vadd.f32 %v4009, %v5598
  %v5746 = vadd.f32 %v4011, %v5600
  %v5747 = vadd.f32 %v4014, %v5602
  %v5748 = vadd.f32 %v4016, %v5604
  %v5749 = vadd.f32 %v4019, %v5606
  %v5750 = vadd.f32 %v4021, %v5608
  %v5751 = vadd.f32 %v4024, %v5610
  %v5752 = vadd.f32 %v4026, %v5612
  %v5753 = vadd.f32 %v4029, %v5614
  %v5754 = vadd.f32 %v4031, %v5616
  %v5755 = vadd.f32 %v4034, %v5618
  %v5756 = vadd.f32 %v4036, %v5620
  %v5757 = vadd.f32 %v4039, %v5622
  %v5758 = vadd.f32 %v4041, %v5624
  %v5759 = vadd.f32 %v4044, %v5626
  %v5760 = vadd.f32 %v4046, %v5628
  %v5761 = vadd.f32 %v4049, %v5630
  %v5762 = vadd.f32 %v4051, %v5632
  %v5763 = vadd.f32 %v4054, %v5634
  %v5764 = vadd.f32 %v4056, %v5636
  %v5765 = vtanh.pop %v5701
  %v5766 = vtanh.pop %v5702
  %v5767 = vtanh.pop %v5703
  %v5768 = vtanh.pop %v5704
  %v5769 = vtanh.pop %v5705
  %v5770 = vtanh.pop %v5706
  %v5771 = vtanh.pop %v5707
  %v5772 = vtanh.pop %v5708
  %v5773 = vtanh.pop %v5709
  %v5774 = vtanh.pop %v5710
  %v5775 = vtanh.pop %v5711
  %v5776 = vtanh.pop %v5712
  %v5777 = vtanh.pop %v5713
  %v5778 = vtanh.pop %v5714
  %v5779 = vtanh.pop %v5715
  %v5780 = vtanh.pop %v5716
  %v5781 = vtanh.pop %v5717
  %v5782 = vtanh.pop %v5718
  %v5783 = vtanh.pop %v5719
  %v5784 = vtanh.pop %v5720
  %v5785 = vtanh.pop %v5721
  %v5786 = vtanh.pop %v5722
  %v5787 = vtanh.pop %v5723
  %v5788 = vtanh.pop %v5724
  %v5789 = vtanh.pop %v5725
  %v5790 = vtanh.pop %v5726
  %v5791 = vtanh.pop %v5727
  %v5792 = vtanh.pop %v5728
  %v5793 = vtanh.pop %v5729
  %v5794 = vtanh.pop %v5730
  %v5795 = vtanh.pop %v5731
  %v5796 = vtanh.pop %v5732
  %v5797 = vtanh.pop %v5733
  %v5798 = vtanh.pop %v5734
  %v5799 = vtanh.pop %v5735
  %v5800 = vtanh.pop %v5736
  %v5801 = vtanh.pop %v5737
  %v5802 = vtanh.pop %v5738
  %v5803 = vtanh.pop %v5739
  %v5804 = vtanh.pop %v5740
  %v5805 = vtanh.pop %v5741
  %v5806 = vtanh.pop %v5742
  %v5807 = vtanh.pop %v5743
  %v5808 = vtanh.pop %v5744
  %v5809 = vtanh.pop %v5745
  %v5810 = vtanh.pop %v5746
  %v5811 = vtanh.pop %v5747
  %v5812 = vtanh.pop %v5748
  %v5813 = vtanh.pop %v5749
  %v5814 = vtanh.pop %v5750
  %v5815 = vtanh.pop %v5751
  %v5816 = vtanh.pop %v5752
  %v5817 = vtanh.pop %v5753
  %v5818 = vtanh.pop %v5754
  %v5819 = vtanh.pop %v5755
  %v5820 = vtanh.pop %v5756
  %v5821 = vtanh.pop %v5757
  %v5822 = vtanh.pop %v5758
  %v5823 = vtanh.pop %v5759
  %v5824 = vtanh.pop %v5760
  %v5825 = vtanh.pop %v5761
  %v5826 = vtanh.pop %v5762
  %v5827 = vtanh.pop %v5763
  %v5828 = vtanh.pop %v5764
  %v5829 = vld [vmem:[%s2] sm:$0xff]
  %v5830 = vld [vmem:[%s2 + $0x8] sm:$0xff]
  %v5831 = vld [vmem:[%s2 + $0x10] sm:$0xff]
  %v5832 = vld [vmem:[%s2 + $0x18] sm:$0xff]
  %v5833 = vld [vmem:[%s2 + $0x20] sm:$0xff]
  %v5834 = vld [vmem:[%s2 + $0x28] sm:$0xff]
  %v5835 = vld [vmem:[%s2 + $0x30] sm:$0xff]
  %v5836 = vld [vmem:[%s2 + $0x38] sm:$0xff]
  %v5837 = vld [vmem:[%s2 + $0x40] sm:$0xff]
  %v5838 = vld [vmem:[%s2 + $0x48] sm:$0xff]
  %v5839 = vld [vmem:[%s2 + $0x50] sm:$0xff]
  %v5840 = vld [vmem:[%s2 + $0x58] sm:$0xff]
  %v5841 = vld [vmem:[%s2 + $0x60] sm:$0xff]
  %v5842 = vld [vmem:[%s2 + $0x68] sm:$0xff]
  %v5843 = vld [vmem:[%s2 + $0x70] sm:$0xff]
  %v5844 = vld [vmem:[%s2 + $0x78] sm:$0xff]
  %v5845 = vld [vmem:[%s2 + $0x80] sm:$0xff]
  %v5846 = vld [vmem:[%s2 + $0x88] sm:$0xff]
  %v5847 = vld [vmem:[%s2 + $0x90] sm:$0xff]
  %v5848 = vld [vmem:[%s2 + $0x98] sm:$0xff]
  %v5849 = vld [vmem:[%s2 + $0xa0] sm:$0xff]
  %v5850 = vld [vmem:[%s2 + $0xa8] sm:$0xff]
  %v5851 = vld [vmem:[%s2 + $0xb0] sm:$0xff]
  %v5852 = vld [vmem:[%s2 + $0xb8] sm:$0xff]
  %v5853 = vld [vmem:[%s2 + $0xc0] sm:$0xff]
  %v5854 = vld [vmem:[%s2 + $0xc8] sm:$0xff]
  %v5855 = vld [vmem:[%s2 + $0xd0] sm:$0xff]
  %v5856 = vld [vmem:[%s2 + $0xd8] sm:$0xff]
  %v5857 = vld [vmem:[%s2 + $0xe0] sm:$0xff]
  %v5858 = vld [vmem:[%s2 + $0xe8] sm:$0xff]
  %v5859 = vld [vmem:[%s2 + $0xf0] sm:$0xff]
  %v5860 = vld [vmem:[%s2 + $0xf8] sm:$0xff]
  %v5861 = vld [vmem:[%s2 + $0x100] sm:$0xff]
  %v5862 = vld [vmem:[%s2 + $0x108] sm:$0xff]
  %v5863 = vld [vmem:[%s2 + $0x110] sm:$0xff]
  %v5864 = vld [vmem:[%s2 + $0x118] sm:$0xff]
  %v5865 = vld [vmem:[%s2 + $0x120] sm:$0xff]
  %v5866 = vld [vmem:[%s2 + $0x128] sm:$0xff]
  %v5867 = vld [vmem:[%s2 + $0x130] sm:$0xff]
  %v5868 = vld [vmem:[%s2 + $0x138] sm:$0xff]
  %v5869 = vld [vmem:[%s2 + $0x140] sm:$0xff]
  %v5870 = vld [vmem:[%s2 + $0x148] sm:$0xff]
  %v5871 = vld [vmem:[%s2 + $0x150] sm:$0xff]
  %v5872 = vld [vmem:[%s2 + $0x158] sm:$0xff]
  %v5873 = vld [vmem:[%s2 + $0x160] sm:$0xff]
  %v5874 = vld [vmem:[%s2 + $0x168] sm:$0xff]
  %v5875 = vld [vmem:[%s2 + $0x170] sm:$0xff]
  %v5876 = vld [vmem:[%s2 + $0x178] sm:$0xff]
  %v5877 = vld [vmem:[%s2 + $0x180] sm:$0xff]
  %v5878 = vld [vmem:[%s2 + $0x188] sm:$0xff]
  %v5879 = vld [vmem:[%s2 + $0x190] sm:$0xff]
  %v5880 = vld [vmem:[%s2 + $0x198] sm:$0xff]
  %v5881 = vld [vmem:[%s2 + $0x1a0] sm:$0xff]
  %v5882 = vld [vmem:[%s2 + $0x1a8] sm:$0xff]
  %v5883 = vld [vmem:[%s2 + $0x1b0] sm:$0xff]
  %v5884 = vld [vmem:[%s2 + $0x1b8] sm:$0xff]
  %v5885 = vld [vmem:[%s2 + $0x1c0] sm:$0xff]
  %v5886 = vld [vmem:[%s2 + $0x1c8] sm:$0xff]
  %v5887 = vld [vmem:[%s2 + $0x1d0] sm:$0xff]
  %v5888 = vld [vmem:[%s2 + $0x1d8] sm:$0xff]
  %v5889 = vld [vmem:[%s2 + $0x1e0] sm:$0xff]
  %v5890 = vld [vmem:[%s2 + $0x1e8] sm:$0xff]
  %v5891 = vld [vmem:[%s2 + $0x1f0] sm:$0xff]
  %v5892 = vld [vmem:[%s2 + $0x1f8] sm:$0xff]
  %5957 = vrot.lane.b32.xlu0 %v5829, 64
  %v5958 = vpop.permute.xlu0 %5957
  %5959 = vrot.lane.b32.xlu0 %v5830, 64
  %v5960 = vpop.permute.xlu0 %5959
  %5961 = vrot.lane.b32.xlu0 %v5831, 64
  %v5962 = vpop.permute.xlu0 %5961
  %5963 = vrot.lane.b32.xlu0 %v5832, 64
  %v5964 = vpop.permute.xlu0 %5963
  %5965 = vrot.lane.b32.xlu0 %v5833, 64
  %v5966 = vpop.permute.xlu0 %5965
  %5967 = vrot.lane.b32.xlu0 %v5834, 64
  %v5968 = vpop.permute.xlu0 %5967
  %5969 = vrot.lane.b32.xlu0 %v5835, 64
  %v5970 = vpop.permute.xlu0 %5969
  %5971 = vrot.lane.b32.xlu0 %v5836, 64
  %v5972 = vpop.permute.xlu0 %5971
  %5973 = vrot.lane.b32.xlu0 %v5837, 64
  %v5974 = vpop.permute.xlu0 %5973
  %5975 = vrot.lane.b32.xlu0 %v5838, 64
  %v5976 = vpop.permute.xlu0 %5975
  %5977 = vrot.lane.b32.xlu0 %v5839, 64
  %v5978 = vpop.permute.xlu0 %5977
  %5979 = vrot.lane.b32.xlu0 %v5840, 64
  %v5980 = vpop.permute.xlu0 %5979
  %5981 = vrot.lane.b32.xlu0 %v5841, 64
  %v5982 = vpop.permute.xlu0 %5981
  %5983 = vrot.lane.b32.xlu0 %v5842, 64
  %v5984 = vpop.permute.xlu0 %5983
  %5985 = vrot.lane.b32.xlu0 %v5843, 64
  %v5986 = vpop.permute.xlu0 %5985
  %5987 = vrot.lane.b32.xlu0 %v5844, 64
  %v5988 = vpop.permute.xlu0 %5987
  %5989 = vrot.lane.b32.xlu0 %v5845, 64
  %v5990 = vpop.permute.xlu0 %5989
  %5991 = vrot.lane.b32.xlu0 %v5846, 64
  %v5992 = vpop.permute.xlu0 %5991
  %5993 = vrot.lane.b32.xlu0 %v5847, 64
  %v5994 = vpop.permute.xlu0 %5993
  %5995 = vrot.lane.b32.xlu0 %v5848, 64
  %v5996 = vpop.permute.xlu0 %5995
  %5997 = vrot.lane.b32.xlu0 %v5849, 64
  %v5998 = vpop.permute.xlu0 %5997
  %5999 = vrot.lane.b32.xlu0 %v5850, 64
  %v6000 = vpop.permute.xlu0 %5999
  %6001 = vrot.lane.b32.xlu0 %v5851, 64
  %v6002 = vpop.permute.xlu0 %6001
  %6003 = vrot.lane.b32.xlu0 %v5852, 64
  %v6004 = vpop.permute.xlu0 %6003
  %6005 = vrot.lane.b32.xlu0 %v5853, 64
  %v6006 = vpop.permute.xlu0 %6005
  %6007 = vrot.lane.b32.xlu0 %v5854, 64
  %v6008 = vpop.permute.xlu0 %6007
  %6009 = vrot.lane.b32.xlu0 %v5855, 64
  %v6010 = vpop.permute.xlu0 %6009
  %6011 = vrot.lane.b32.xlu0 %v5856, 64
  %v6012 = vpop.permute.xlu0 %6011
  %6013 = vrot.lane.b32.xlu0 %v5857, 64
  %v6014 = vpop.permute.xlu0 %6013
  %6015 = vrot.lane.b32.xlu0 %v5858, 64
  %v6016 = vpop.permute.xlu0 %6015
  %6017 = vrot.lane.b32.xlu0 %v5859, 64
  %v6018 = vpop.permute.xlu0 %6017
  %6019 = vrot.lane.b32.xlu0 %v5860, 64
  %v6020 = vpop.permute.xlu0 %6019
  %6021 = vrot.lane.b32.xlu0 %v5861, 64
  %v6022 = vpop.permute.xlu0 %6021
  %6023 = vrot.lane.b32.xlu0 %v5862, 64
  %v6024 = vpop.permute.xlu0 %6023
  %6025 = vrot.lane.b32.xlu0 %v5863, 64
  %v6026 = vpop.permute.xlu0 %6025
  %6027 = vrot.lane.b32.xlu0 %v5864, 64
  %v6028 = vpop.permute.xlu0 %6027
  %6029 = vrot.lane.b32.xlu0 %v5865, 64
  %v6030 = vpop.permute.xlu0 %6029
  %6031 = vrot.lane.b32.xlu0 %v5866, 64
  %v6032 = vpop.permute.xlu0 %6031
  %6033 = vrot.lane.b32.xlu0 %v5867, 64
  %v6034 = vpop.permute.xlu0 %6033
  %6035 = vrot.lane.b32.xlu0 %v5868, 64
  %v6036 = vpop.permute.xlu0 %6035
  %6037 = vrot.lane.b32.xlu0 %v5869, 64
  %v6038 = vpop.permute.xlu0 %6037
  %6039 = vrot.lane.b32.xlu0 %v5870, 64
  %v6040 = vpop.permute.xlu0 %6039
  %6041 = vrot.lane.b32.xlu0 %v5871, 64
  %v6042 = vpop.permute.xlu0 %6041
  %6043 = vrot.lane.b32.xlu0 %v5872, 64
  %v6044 = vpop.permute.xlu0 %6043
  %6045 = vrot.lane.b32.xlu0 %v5873, 64
  %v6046 = vpop.permute.xlu0 %6045
  %6047 = vrot.lane.b32.xlu0 %v5874, 64
  %v6048 = vpop.permute.xlu0 %6047
  %6049 = vrot.lane.b32.xlu0 %v5875, 64
  %v6050 = vpop.permute.xlu0 %6049
  %6051 = vrot.lane.b32.xlu0 %v5876, 64
  %v6052 = vpop.permute.xlu0 %6051
  %6053 = vrot.lane.b32.xlu0 %v5877, 64
  %v6054 = vpop.permute.xlu0 %6053
  %6055 = vrot.lane.b32.xlu0 %v5878, 64
  %v6056 = vpop.permute.xlu0 %6055
  %6057 = vrot.lane.b32.xlu0 %v5879, 64
  %v6058 = vpop.permute.xlu0 %6057
  %6059 = vrot.lane.b32.xlu0 %v5880, 64
  %v6060 = vpop.permute.xlu0 %6059
  %6061 = vrot.lane.b32.xlu0 %v5881, 64
  %v6062 = vpop.permute.xlu0 %6061
  %6063 = vrot.lane.b32.xlu0 %v5882, 64
  %v6064 = vpop.permute.xlu0 %6063
  %6065 = vrot.lane.b32.xlu0 %v5883, 64
  %v6066 = vpop.permute.xlu0 %6065
  %6067 = vrot.lane.b32.xlu0 %v5884, 64
  %v6068 = vpop.permute.xlu0 %6067
  %6069 = vrot.lane.b32.xlu0 %v5885, 64
  %v6070 = vpop.permute.xlu0 %6069
  %6071 = vrot.lane.b32.xlu0 %v5886, 64
  %v6072 = vpop.permute.xlu0 %6071
  %6073 = vrot.lane.b32.xlu0 %v5887, 64
  %v6074 = vpop.permute.xlu0 %6073
  %6075 = vrot.lane.b32.xlu0 %v5888, 64
  %v6076 = vpop.permute.xlu0 %6075
  %6077 = vrot.lane.b32.xlu0 %v5889, 64
  %v6078 = vpop.permute.xlu0 %6077
  %6079 = vrot.lane.b32.xlu0 %v5890, 64
  %v6080 = vpop.permute.xlu0 %6079
  %6081 = vrot.lane.b32.xlu0 %v5891, 64
  %v6082 = vpop.permute.xlu0 %6081
  %6083 = vrot.lane.b32.xlu0 %v5892, 64
  %v6084 = vpop.permute.xlu0 %6083
  %v6149 = vsub.f32 %v5765, %v5958
  %v6150 = vsub.f32 %v5766, %v5960
  %v6151 = vsub.f32 %v5767, %v5962
  %v6152 = vsub.f32 %v5768, %v5964
  %v6153 = vsub.f32 %v5769, %v5966
  %v6154 = vsub.f32 %v5770, %v5968
  %v6155 = vsub.f32 %v5771, %v5970
  %v6156 = vsub.f32 %v5772, %v5972
  %v6157 = vsub.f32 %v5773, %v5974
  %v6158 = vsub.f32 %v5774, %v5976
  %v6159 = vsub.f32 %v5775, %v5978
  %v6160 = vsub.f32 %v5776, %v5980
  %v6161 = vsub.f32 %v5777, %v5982
  %v6162 = vsub.f32 %v5778, %v5984
  %v6163 = vsub.f32 %v5779, %v5986
  %v6164 = vsub.f32 %v5780, %v5988
  %v6165 = vsub.f32 %v5781, %v5990
  %v6166 = vsub.f32 %v5782, %v5992
  %v6167 = vsub.f32 %v5783, %v5994
  %v6168 = vsub.f32 %v5784, %v5996
  %v6169 = vsub.f32 %v5785, %v5998
  %v6170 = vsub.f32 %v5786, %v6000
  %v6171 = vsub.f32 %v5787, %v6002
  %v6172 = vsub.f32 %v5788, %v6004
  %v6173 = vsub.f32 %v5789, %v6006
  %v6174 = vsub.f32 %v5790, %v6008
  %v6175 = vsub.f32 %v5791, %v6010
  %v6176 = vsub.f32 %v5792, %v6012
  %v6177 = vsub.f32 %v5793, %v6014
  %v6178 = vsub.f32 %v5794, %v6016
  %v6179 = vsub.f32 %v5795, %v6018
  %v6180 = vsub.f32 %v5796, %v6020
  %v6181 = vsub.f32 %v5797, %v6022
  %v6182 = vsub.f32 %v5798, %v6024
  %v6183 = vsub.f32 %v5799, %v6026
  %v6184 = vsub.f32 %v5800, %v6028
  %v6185 = vsub.f32 %v5801, %v6030
  %v6186 = vsub.f32 %v5802, %v6032
  %v6187 = vsub.f32 %v5803, %v6034
  %v6188 = vsub.f32 %v5804, %v6036
  %v6189 = vsub.f32 %v5805, %v6038
  %v6190 = vsub.f32 %v5806, %v6040
  %v6191 = vsub.f32 %v5807, %v6042
  %v6192 = vsub.f32 %v5808, %v6044
  %v6193 = vsub.f32 %v5809, %v6046
  %v6194 = vsub.f32 %v5810, %v6048
  %v6195 = vsub.f32 %v5811, %v6050
  %v6196 = vsub.f32 %v5812, %v6052
  %v6197 = vsub.f32 %v5813, %v6054
  %v6198 = vsub.f32 %v5814, %v6056
  %v6199 = vsub.f32 %v5815, %v6058
  %v6200 = vsub.f32 %v5816, %v6060
  %v6201 = vsub.f32 %v5817, %v6062
  %v6202 = vsub.f32 %v5818, %v6064
  %v6203 = vsub.f32 %v5819, %v6066
  %v6204 = vsub.f32 %v5820, %v6068
  %v6205 = vsub.f32 %v5821, %v6070
  %v6206 = vsub.f32 %v5822, %v6072
  %v6207 = vsub.f32 %v5823, %v6074
  %v6208 = vsub.f32 %v5824, %v6076
  %v6209 = vsub.f32 %v5825, %v6078
  %v6210 = vsub.f32 %v5826, %v6080
  %v6211 = vsub.f32 %v5827, %v6082
  %v6212 = vsub.f32 %v5828, %v6084
  %6277 = vrot.lane.b32.xlu0 %v6149, 96
  %v6278 = vpop.permute.xlu0 %6277
  %6279 = vrot.lane.b32.xlu0 %v6150, 96
  %v6280 = vpop.permute.xlu0 %6279
  %6281 = vrot.lane.b32.xlu0 %v6151, 96
  %v6282 = vpop.permute.xlu0 %6281
  %6283 = vrot.lane.b32.xlu0 %v6152, 96
  %v6284 = vpop.permute.xlu0 %6283
  %6285 = vrot.lane.b32.xlu0 %v6153, 96
  %v6286 = vpop.permute.xlu0 %6285
  %6287 = vrot.lane.b32.xlu0 %v6154, 96
  %v6288 = vpop.permute.xlu0 %6287
  %6289 = vrot.lane.b32.xlu0 %v6155, 96
  %v6290 = vpop.permute.xlu0 %6289
  %6291 = vrot.lane.b32.xlu0 %v6156, 96
  %v6292 = vpop.permute.xlu0 %6291
  %6293 = vrot.lane.b32.xlu0 %v6157, 96
  %v6294 = vpop.permute.xlu0 %6293
  %6295 = vrot.lane.b32.xlu0 %v6158, 96
  %v6296 = vpop.permute.xlu0 %6295
  %6297 = vrot.lane.b32.xlu0 %v6159, 96
  %v6298 = vpop.permute.xlu0 %6297
  %6299 = vrot.lane.b32.xlu0 %v6160, 96
  %v6300 = vpop.permute.xlu0 %6299
  %6301 = vrot.lane.b32.xlu0 %v6161, 96
  %v6302 = vpop.permute.xlu0 %6301
  %6303 = vrot.lane.b32.xlu0 %v6162, 96
  %v6304 = vpop.permute.xlu0 %6303
  %6305 = vrot.lane.b32.xlu0 %v6163, 96
  %v6306 = vpop.permute.xlu0 %6305
  %6307 = vrot.lane.b32.xlu0 %v6164, 96
  %v6308 = vpop.permute.xlu0 %6307
  %6309 = vrot.lane.b32.xlu0 %v6165, 96
  %v6310 = vpop.permute.xlu0 %6309
  %6311 = vrot.lane.b32.xlu0 %v6166, 96
  %v6312 = vpop.permute.xlu0 %6311
  %6313 = vrot.lane.b32.xlu0 %v6167, 96
  %v6314 = vpop.permute.xlu0 %6313
  %6315 = vrot.lane.b32.xlu0 %v6168, 96
  %v6316 = vpop.permute.xlu0 %6315
  %6317 = vrot.lane.b32.xlu0 %v6169, 96
  %v6318 = vpop.permute.xlu0 %6317
  %6319 = vrot.lane.b32.xlu0 %v6170, 96
  %v6320 = vpop.permute.xlu0 %6319
  %6321 = vrot.lane.b32.xlu0 %v6171, 96
  %v6322 = vpop.permute.xlu0 %6321
  %6323 = vrot.lane.b32.xlu0 %v6172, 96
  %v6324 = vpop.permute.xlu0 %6323
  %6325 = vrot.lane.b32.xlu0 %v6173, 96
  %v6326 = vpop.permute.xlu0 %6325
  %6327 = vrot.lane.b32.xlu0 %v6174, 96
  %v6328 = vpop.permute.xlu0 %6327
  %6329 = vrot.lane.b32.xlu0 %v6175, 96
  %v6330 = vpop.permute.xlu0 %6329
  %6331 = vrot.lane.b32.xlu0 %v6176, 96
  %v6332 = vpop.permute.xlu0 %6331
  %6333 = vrot.lane.b32.xlu0 %v6177, 96
  %v6334 = vpop.permute.xlu0 %6333
  %6335 = vrot.lane.b32.xlu0 %v6178, 96
  %v6336 = vpop.permute.xlu0 %6335
  %6337 = vrot.lane.b32.xlu0 %v6179, 96
  %v6338 = vpop.permute.xlu0 %6337
  %6339 = vrot.lane.b32.xlu0 %v6180, 96
  %v6340 = vpop.permute.xlu0 %6339
  %6341 = vrot.lane.b32.xlu0 %v6181, 96
  %v6342 = vpop.permute.xlu0 %6341
  %6343 = vrot.lane.b32.xlu0 %v6182, 96
  %v6344 = vpop.permute.xlu0 %6343
  %6345 = vrot.lane.b32.xlu0 %v6183, 96
  %v6346 = vpop.permute.xlu0 %6345
  %6347 = vrot.lane.b32.xlu0 %v6184, 96
  %v6348 = vpop.permute.xlu0 %6347
  %6349 = vrot.lane.b32.xlu0 %v6185, 96
  %v6350 = vpop.permute.xlu0 %6349
  %6351 = vrot.lane.b32.xlu0 %v6186, 96
  %v6352 = vpop.permute.xlu0 %6351
  %6353 = vrot.lane.b32.xlu0 %v6187, 96
  %v6354 = vpop.permute.xlu0 %6353
  %6355 = vrot.lane.b32.xlu0 %v6188, 96
  %v6356 = vpop.permute.xlu0 %6355
  %6357 = vrot.lane.b32.xlu0 %v6189, 96
  %v6358 = vpop.permute.xlu0 %6357
  %6359 = vrot.lane.b32.xlu0 %v6190, 96
  %v6360 = vpop.permute.xlu0 %6359
  %6361 = vrot.lane.b32.xlu0 %v6191, 96
  %v6362 = vpop.permute.xlu0 %6361
  %6363 = vrot.lane.b32.xlu0 %v6192, 96
  %v6364 = vpop.permute.xlu0 %6363
  %6365 = vrot.lane.b32.xlu0 %v6193, 96
  %v6366 = vpop.permute.xlu0 %6365
  %6367 = vrot.lane.b32.xlu0 %v6194, 96
  %v6368 = vpop.permute.xlu0 %6367
  %6369 = vrot.lane.b32.xlu0 %v6195, 96
  %v6370 = vpop.permute.xlu0 %6369
  %6371 = vrot.lane.b32.xlu0 %v6196, 96
  %v6372 = vpop.permute.xlu0 %6371
  %6373 = vrot.lane.b32.xlu0 %v6197, 96
  %v6374 = vpop.permute.xlu0 %6373
  %6375 = vrot.lane.b32.xlu0 %v6198, 96
  %v6376 = vpop.permute.xlu0 %6375
  %6377 = vrot.lane.b32.xlu0 %v6199, 96
  %v6378 = vpop.permute.xlu0 %6377
  %6379 = vrot.lane.b32.xlu0 %v6200, 96
  %v6380 = vpop.permute.xlu0 %6379
  %6381 = vrot.lane.b32.xlu0 %v6201, 96
  %v6382 = vpop.permute.xlu0 %6381
  %6383 = vrot.lane.b32.xlu0 %v6202, 96
  %v6384 = vpop.permute.xlu0 %6383
  %6385 = vrot.lane.b32.xlu0 %v6203, 96
  %v6386 = vpop.permute.xlu0 %6385
  %6387 = vrot.lane.b32.xlu0 %v6204, 96
  %v6388 = vpop.permute.xlu0 %6387
  %6389 = vrot.lane.b32.xlu0 %v6205, 96
  %v6390 = vpop.permute.xlu0 %6389
  %6391 = vrot.lane.b32.xlu0 %v6206, 96
  %v6392 = vpop.permute.xlu0 %6391
  %6393 = vrot.lane.b32.xlu0 %v6207, 96
  %v6394 = vpop.permute.xlu0 %6393
  %6395 = vrot.lane.b32.xlu0 %v6208, 96
  %v6396 = vpop.permute.xlu0 %6395
  %6397 = vrot.lane.b32.xlu0 %v6209, 96
  %v6398 = vpop.permute.xlu0 %6397
  %6399 = vrot.lane.b32.xlu0 %v6210, 96
  %v6400 = vpop.permute.xlu0 %6399
  %6401 = vrot.lane.b32.xlu0 %v6211, 96
  %v6402 = vpop.permute.xlu0 %6401
  %6403 = vrot.lane.b32.xlu0 %v6212, 96
  %v6404 = vpop.permute.xlu0 %6403
  %v6469 = vmul.f32 %v5061, %v6278
  %v6470 = vmul.f32 %v5062, %v6280
  %v6471 = vmul.f32 %v5063, %v6282
  %v6472 = vmul.f32 %v5064, %v6284
  %v6473 = vmul.f32 %v5065, %v6286
  %v6474 = vmul.f32 %v5066, %v6288
  %v6475 = vmul.f32 %v5067, %v6290
  %v6476 = vmul.f32 %v5068, %v6292
  %v6477 = vmul.f32 %v5069, %v6294
  %v6478 = vmul.f32 %v5070, %v6296
  %v6479 = vmul.f32 %v5071, %v6298
  %v6480 = vmul.f32 %v5072, %v6300
  %v6481 = vmul.f32 %v5073, %v6302
  %v6482 = vmul.f32 %v5074, %v6304
  %v6483 = vmul.f32 %v5075, %v6306
  %v6484 = vmul.f32 %v5076, %v6308
  %v6485 = vmul.f32 %v5077, %v6310
  %v6486 = vmul.f32 %v5078, %v6312
  %v6487 = vmul.f32 %v5079, %v6314
  %v6488 = vmul.f32 %v5080, %v6316
  %v6489 = vmul.f32 %v5081, %v6318
  %v6490 = vmul.f32 %v5082, %v6320
  %v6491 = vmul.f32 %v5083, %v6322
  %v6492 = vmul.f32 %v5084, %v6324
  %v6493 = vmul.f32 %v5085, %v6326
  %v6494 = vmul.f32 %v5086, %v6328
  %v6495 = vmul.f32 %v5087, %v6330
  %v6496 = vmul.f32 %v5088, %v6332
  %v6497 = vmul.f32 %v5089, %v6334
  %v6498 = vmul.f32 %v5090, %v6336
  %v6499 = vmul.f32 %v5091, %v6338
  %v6500 = vmul.f32 %v5092, %v6340
  %v6501 = vmul.f32 %v5093, %v6342
  %v6502 = vmul.f32 %v5094, %v6344
  %v6503 = vmul.f32 %v5095, %v6346
  %v6504 = vmul.f32 %v5096, %v6348
  %v6505 = vmul.f32 %v5097, %v6350
  %v6506 = vmul.f32 %v5098, %v6352
  %v6507 = vmul.f32 %v5099, %v6354
  %v6508 = vmul.f32 %v5100, %v6356
  %v6509 = vmul.f32 %v5101, %v6358
  %v6510 = vmul.f32 %v5102, %v6360
  %v6511 = vmul.f32 %v5103, %v6362
  %v6512 = vmul.f32 %v5104, %v6364
  %v6513 = vmul.f32 %v5105, %v6366
  %v6514 = vmul.f32 %v5106, %v6368
  %v6515 = vmul.f32 %v5107, %v6370
  %v6516 = vmul.f32 %v5108, %v6372
  %v6517 = vmul.f32 %v5109, %v6374
  %v6518 = vmul.f32 %v5110, %v6376
  %v6519 = vmul.f32 %v5111, %v6378
  %v6520 = vmul.f32 %v5112, %v6380
  %v6521 = vmul.f32 %v5113, %v6382
  %v6522 = vmul.f32 %v5114, %v6384
  %v6523 = vmul.f32 %v5115, %v6386
  %v6524 = vmul.f32 %v5116, %v6388
  %v6525 = vmul.f32 %v5117, %v6390
  %v6526 = vmul.f32 %v5118, %v6392
  %v6527 = vmul.f32 %v5119, %v6394
  %v6528 = vmul.f32 %v5120, %v6396
  %v6529 = vmul.f32 %v5121, %v6398
  %v6530 = vmul.f32 %v5122, %v6400
  %v6531 = vmul.f32 %v5123, %v6402
  %v6532 = vmul.f32 %v5124, %v6404
  %6597 = vrot.lane.b32.xlu0 %v6469, 96
  %v6598 = vpop.permute.xlu0 %6597
  %6599 = vrot.lane.b32.xlu0 %v6470, 96
  %v6600 = vpop.permute.xlu0 %6599
  %6601 = vrot.lane.b32.xlu0 %v6471, 96
  %v6602 = vpop.permute.xlu0 %6601
  %6603 = vrot.lane.b32.xlu0 %v6472, 96
  %v6604 = vpop.permute.xlu0 %6603
  %6605 = vrot.lane.b32.xlu0 %v6473, 96
  %v6606 = vpop.permute.xlu0 %6605
  %6607 = vrot.lane.b32.xlu0 %v6474, 96
  %v6608 = vpop.permute.xlu0 %6607
  %6609 = vrot.lane.b32.xlu0 %v6475, 96
  %v6610 = vpop.permute.xlu0 %6609
  %6611 = vrot.lane.b32.xlu0 %v6476, 96
  %v6612 = vpop.permute.xlu0 %6611
  %6613 = vrot.lane.b32.xlu0 %v6477, 96
  %v6614 = vpop.permute.xlu0 %6613
  %6615 = vrot.lane.b32.xlu0 %v6478, 96
  %v6616 = vpop.permute.xlu0 %6615
  %6617 = vrot.lane.b32.xlu0 %v6479, 96
  %v6618 = vpop.permute.xlu0 %6617
  %6619 = vrot.lane.b32.xlu0 %v6480, 96
  %v6620 = vpop.permute.xlu0 %6619
  %6621 = vrot.lane.b32.xlu0 %v6481, 96
  %v6622 = vpop.permute.xlu0 %6621
  %6623 = vrot.lane.b32.xlu0 %v6482, 96
  %v6624 = vpop.permute.xlu0 %6623
  %6625 = vrot.lane.b32.xlu0 %v6483, 96
  %v6626 = vpop.permute.xlu0 %6625
  %6627 = vrot.lane.b32.xlu0 %v6484, 96
  %v6628 = vpop.permute.xlu0 %6627
  %6629 = vrot.lane.b32.xlu0 %v6485, 96
  %v6630 = vpop.permute.xlu0 %6629
  %6631 = vrot.lane.b32.xlu0 %v6486, 96
  %v6632 = vpop.permute.xlu0 %6631
  %6633 = vrot.lane.b32.xlu0 %v6487, 96
  %v6634 = vpop.permute.xlu0 %6633
  %6635 = vrot.lane.b32.xlu0 %v6488, 96
  %v6636 = vpop.permute.xlu0 %6635
  %6637 = vrot.lane.b32.xlu0 %v6489, 96
  %v6638 = vpop.permute.xlu0 %6637
  %6639 = vrot.lane.b32.xlu0 %v6490, 96
  %v6640 = vpop.permute.xlu0 %6639
  %6641 = vrot.lane.b32.xlu0 %v6491, 96
  %v6642 = vpop.permute.xlu0 %6641
  %6643 = vrot.lane.b32.xlu0 %v6492, 96
  %v6644 = vpop.permute.xlu0 %6643
  %6645 = vrot.lane.b32.xlu0 %v6493, 96
  %v6646 = vpop.permute.xlu0 %6645
  %6647 = vrot.lane.b32.xlu0 %v6494, 96
  %v6648 = vpop.permute.xlu0 %6647
  %6649 = vrot.lane.b32.xlu0 %v6495, 96
  %v6650 = vpop.permute.xlu0 %6649
  %6651 = vrot.lane.b32.xlu0 %v6496, 96
  %v6652 = vpop.permute.xlu0 %6651
  %6653 = vrot.lane.b32.xlu0 %v6497, 96
  %v6654 = vpop.permute.xlu0 %6653
  %6655 = vrot.lane.b32.xlu0 %v6498, 96
  %v6656 = vpop.permute.xlu0 %6655
  %6657 = vrot.lane.b32.xlu0 %v6499, 96
  %v6658 = vpop.permute.xlu0 %6657
  %6659 = vrot.lane.b32.xlu0 %v6500, 96
  %v6660 = vpop.permute.xlu0 %6659
  %6661 = vrot.lane.b32.xlu0 %v6501, 96
  %v6662 = vpop.permute.xlu0 %6661
  %6663 = vrot.lane.b32.xlu0 %v6502, 96
  %v6664 = vpop.permute.xlu0 %6663
  %6665 = vrot.lane.b32.xlu0 %v6503, 96
  %v6666 = vpop.permute.xlu0 %6665
  %6667 = vrot.lane.b32.xlu0 %v6504, 96
  %v6668 = vpop.permute.xlu0 %6667
  %6669 = vrot.lane.b32.xlu0 %v6505, 96
  %v6670 = vpop.permute.xlu0 %6669
  %6671 = vrot.lane.b32.xlu0 %v6506, 96
  %v6672 = vpop.permute.xlu0 %6671
  %6673 = vrot.lane.b32.xlu0 %v6507, 96
  %v6674 = vpop.permute.xlu0 %6673
  %6675 = vrot.lane.b32.xlu0 %v6508, 96
  %v6676 = vpop.permute.xlu0 %6675
  %6677 = vrot.lane.b32.xlu0 %v6509, 96
  %v6678 = vpop.permute.xlu0 %6677
  %6679 = vrot.lane.b32.xlu0 %v6510, 96
  %v6680 = vpop.permute.xlu0 %6679
  %6681 = vrot.lane.b32.xlu0 %v6511, 96
  %v6682 = vpop.permute.xlu0 %6681
  %6683 = vrot.lane.b32.xlu0 %v6512, 96
  %v6684 = vpop.permute.xlu0 %6683
  %6685 = vrot.lane.b32.xlu0 %v6513, 96
  %v6686 = vpop.permute.xlu0 %6685
  %6687 = vrot.lane.b32.xlu0 %v6514, 96
  %v6688 = vpop.permute.xlu0 %6687
  %6689 = vrot.lane.b32.xlu0 %v6515, 96
  %v6690 = vpop.permute.xlu0 %6689
  %6691 = vrot.lane.b32.xlu0 %v6516, 96
  %v6692 = vpop.permute.xlu0 %6691
  %6693 = vrot.lane.b32.xlu0 %v6517, 96
  %v6694 = vpop.permute.xlu0 %6693
  %6695 = vrot.lane.b32.xlu0 %v6518, 96
  %v6696 = vpop.permute.xlu0 %6695
  %6697 = vrot.lane.b32.xlu0 %v6519, 96
  %v6698 = vpop.permute.xlu0 %6697
  %6699 = vrot.lane.b32.xlu0 %v6520, 96
  %v6700 = vpop.permute.xlu0 %6699
  %6701 = vrot.lane.b32.xlu0 %v6521, 96
  %v6702 = vpop.permute.xlu0 %6701
  %6703 = vrot.lane.b32.xlu0 %v6522, 96
  %v6704 = vpop.permute.xlu0 %6703
  %6705 = vrot.lane.b32.xlu0 %v6523, 96
  %v6706 = vpop.permute.xlu0 %6705
  %6707 = vrot.lane.b32.xlu0 %v6524, 96
  %v6708 = vpop.permute.xlu0 %6707
  %6709 = vrot.lane.b32.xlu0 %v6525, 96
  %v6710 = vpop.permute.xlu0 %6709
  %6711 = vrot.lane.b32.xlu0 %v6526, 96
  %v6712 = vpop.permute.xlu0 %6711
  %6713 = vrot.lane.b32.xlu0 %v6527, 96
  %v6714 = vpop.permute.xlu0 %6713
  %6715 = vrot.lane.b32.xlu0 %v6528, 96
  %v6716 = vpop.permute.xlu0 %6715
  %6717 = vrot.lane.b32.xlu0 %v6529, 96
  %v6718 = vpop.permute.xlu0 %6717
  %6719 = vrot.lane.b32.xlu0 %v6530, 96
  %v6720 = vpop.permute.xlu0 %6719
  %6721 = vrot.lane.b32.xlu0 %v6531, 96
  %v6722 = vpop.permute.xlu0 %6721
  %6723 = vrot.lane.b32.xlu0 %v6532, 96
  %v6724 = vpop.permute.xlu0 %6723
  %v6789 = vadd.f32 %v5829, %v6598
  %v6790 = vadd.f32 %v5830, %v6600
  %v6791 = vadd.f32 %v5831, %v6602
  %v6792 = vadd.f32 %v5832, %v6604
  %v6793 = vadd.f32 %v5833, %v6606
  %v6794 = vadd.f32 %v5834, %v6608
  %v6795 = vadd.f32 %v5835, %v6610
  %v6796 = vadd.f32 %v5836, %v6612
  %v6797 = vadd.f32 %v5837, %v6614
  %v6798 = vadd.f32 %v5838, %v6616
  %v6799 = vadd.f32 %v5839, %v6618
  %v6800 = vadd.f32 %v5840, %v6620
  %v6801 = vadd.f32 %v5841, %v6622
  %v6802 = vadd.f32 %v5842, %v6624
  %v6803 = vadd.f32 %v5843, %v6626
  %v6804 = vadd.f32 %v5844, %v6628
  %v6805 = vadd.f32 %v5845, %v6630
  %v6806 = vadd.f32 %v5846, %v6632
  %v6807 = vadd.f32 %v5847, %v6634
  %v6808 = vadd.f32 %v5848, %v6636
  %v6809 = vadd.f32 %v5849, %v6638
  %v6810 = vadd.f32 %v5850, %v6640
  %v6811 = vadd.f32 %v5851, %v6642
  %v6812 = vadd.f32 %v5852, %v6644
  %v6813 = vadd.f32 %v5853, %v6646
  %v6814 = vadd.f32 %v5854, %v6648
  %v6815 = vadd.f32 %v5855, %v6650
  %v6816 = vadd.f32 %v5856, %v6652
  %v6817 = vadd.f32 %v5857, %v6654
  %v6818 = vadd.f32 %v5858, %v6656
  %v6819 = vadd.f32 %v5859, %v6658
  %v6820 = vadd.f32 %v5860, %v6660
  %v6821 = vadd.f32 %v5861, %v6662
  %v6822 = vadd.f32 %v5862, %v6664
  %v6823 = vadd.f32 %v5863, %v6666
  %v6824 = vadd.f32 %v5864, %v6668
  %v6825 = vadd.f32 %v5865, %v6670
  %v6826 = vadd.f32 %v5866, %v6672
  %v6827 = vadd.f32 %v5867, %v6674
  %v6828 = vadd.f32 %v5868, %v6676
  %v6829 = vadd.f32 %v5869, %v6678
  %v6830 = vadd.f32 %v5870, %v6680
  %v6831 = vadd.f32 %v5871, %v6682
  %v6832 = vadd.f32 %v5872, %v6684
  %v6833 = vadd.f32 %v5873, %v6686
  %v6834 = vadd.f32 %v5874, %v6688
  %v6835 = vadd.f32 %v5875, %v6690
  %v6836 = vadd.f32 %v5876, %v6692
  %v6837 = vadd.f32 %v5877, %v6694
  %v6838 = vadd.f32 %v5878, %v6696
  %v6839 = vadd.f32 %v5879, %v6698
  %v6840 = vadd.f32 %v5880, %v6700
  %v6841 = vadd.f32 %v5881, %v6702
  %v6842 = vadd.f32 %v5882, %v6704
  %v6843 = vadd.f32 %v5883, %v6706
  %v6844 = vadd.f32 %v5884, %v6708
  %v6845 = vadd.f32 %v5885, %v6710
  %v6846 = vadd.f32 %v5886, %v6712
  %v6847 = vadd.f32 %v5887, %v6714
  %v6848 = vadd.f32 %v5888, %v6716
  %v6849 = vadd.f32 %v5889, %v6718
  %v6850 = vadd.f32 %v5890, %v6720
  %v6851 = vadd.f32 %v5891, %v6722
  %v6852 = vadd.f32 %v5892, %v6724
  %6853 = vst.msk [vmem:[%s6] sm:$0xff] %vm2037, %v6789
  %6854 = vst.msk [vmem:[%s6 + $0x8] sm:$0xff] %vm2037, %v6790
  %6855 = vst.msk [vmem:[%s6 + $0x10] sm:$0xff] %vm2037, %v6791
  %6856 = vst.msk [vmem:[%s6 + $0x18] sm:$0xff] %vm2037, %v6792
  %6857 = vst.msk [vmem:[%s6 + $0x20] sm:$0xff] %vm2037, %v6793
  %6858 = vst.msk [vmem:[%s6 + $0x28] sm:$0xff] %vm2037, %v6794
  %6859 = vst.msk [vmem:[%s6 + $0x30] sm:$0xff] %vm2037, %v6795
  %6860 = vst.msk [vmem:[%s6 + $0x38] sm:$0xff] %vm2037, %v6796
  %6861 = vst.msk [vmem:[%s6 + $0x40] sm:$0xff] %vm2037, %v6797
  %6862 = vst.msk [vmem:[%s6 + $0x48] sm:$0xff] %vm2037, %v6798
  %6863 = vst.msk [vmem:[%s6 + $0x50] sm:$0xff] %vm2037, %v6799
  %6864 = vst.msk [vmem:[%s6 + $0x58] sm:$0xff] %vm2037, %v6800
  %6865 = vst.msk [vmem:[%s6 + $0x60] sm:$0xff] %vm2037, %v6801
  %6866 = vst.msk [vmem:[%s6 + $0x68] sm:$0xff] %vm2037, %v6802
  %6867 = vst.msk [vmem:[%s6 + $0x70] sm:$0xff] %vm2037, %v6803
  %6868 = vst.msk [vmem:[%s6 + $0x78] sm:$0xff] %vm2037, %v6804
  %6869 = vst.msk [vmem:[%s6 + $0x80] sm:$0xff] %vm2037, %v6805
  %6870 = vst.msk [vmem:[%s6 + $0x88] sm:$0xff] %vm2037, %v6806
  %6871 = vst.msk [vmem:[%s6 + $0x90] sm:$0xff] %vm2037, %v6807
  %6872 = vst.msk [vmem:[%s6 + $0x98] sm:$0xff] %vm2037, %v6808
  %6873 = vst.msk [vmem:[%s6 + $0xa0] sm:$0xff] %vm2037, %v6809
  %6874 = vst.msk [vmem:[%s6 + $0xa8] sm:$0xff] %vm2037, %v6810
  %6875 = vst.msk [vmem:[%s6 + $0xb0] sm:$0xff] %vm2037, %v6811
  %6876 = vst.msk [vmem:[%s6 + $0xb8] sm:$0xff] %vm2037, %v6812
  %6877 = vst.msk [vmem:[%s6 + $0xc0] sm:$0xff] %vm2037, %v6813
  %6878 = vst.msk [vmem:[%s6 + $0xc8] sm:$0xff] %vm2037, %v6814
  %6879 = vst.msk [vmem:[%s6 + $0xd0] sm:$0xff] %vm2037, %v6815
  %6880 = vst.msk [vmem:[%s6 + $0xd8] sm:$0xff] %vm2037, %v6816
  %6881 = vst.msk [vmem:[%s6 + $0xe0] sm:$0xff] %vm2037, %v6817
  %6882 = vst.msk [vmem:[%s6 + $0xe8] sm:$0xff] %vm2037, %v6818
  %6883 = vst.msk [vmem:[%s6 + $0xf0] sm:$0xff] %vm2037, %v6819
  %6884 = vst.msk [vmem:[%s6 + $0xf8] sm:$0xff] %vm2037, %v6820
  %6885 = vst.msk [vmem:[%s6 + $0x100] sm:$0xff] %vm2037, %v6821
  %6886 = vst.msk [vmem:[%s6 + $0x108] sm:$0xff] %vm2037, %v6822
  %6887 = vst.msk [vmem:[%s6 + $0x110] sm:$0xff] %vm2037, %v6823
  %6888 = vst.msk [vmem:[%s6 + $0x118] sm:$0xff] %vm2037, %v6824
  %6889 = vst.msk [vmem:[%s6 + $0x120] sm:$0xff] %vm2037, %v6825
  %6890 = vst.msk [vmem:[%s6 + $0x128] sm:$0xff] %vm2037, %v6826
  %6891 = vst.msk [vmem:[%s6 + $0x130] sm:$0xff] %vm2037, %v6827
  %6892 = vst.msk [vmem:[%s6 + $0x138] sm:$0xff] %vm2037, %v6828
  %6893 = vst.msk [vmem:[%s6 + $0x140] sm:$0xff] %vm2037, %v6829
  %6894 = vst.msk [vmem:[%s6 + $0x148] sm:$0xff] %vm2037, %v6830
  %6895 = vst.msk [vmem:[%s6 + $0x150] sm:$0xff] %vm2037, %v6831
  %6896 = vst.msk [vmem:[%s6 + $0x158] sm:$0xff] %vm2037, %v6832
  %6897 = vst.msk [vmem:[%s6 + $0x160] sm:$0xff] %vm2037, %v6833
  %6898 = vst.msk [vmem:[%s6 + $0x168] sm:$0xff] %vm2037, %v6834
  %6899 = vst.msk [vmem:[%s6 + $0x170] sm:$0xff] %vm2037, %v6835
  %6900 = vst.msk [vmem:[%s6 + $0x178] sm:$0xff] %vm2037, %v6836
  %6901 = vst.msk [vmem:[%s6 + $0x180] sm:$0xff] %vm2037, %v6837
  %6902 = vst.msk [vmem:[%s6 + $0x188] sm:$0xff] %vm2037, %v6838
  %6903 = vst.msk [vmem:[%s6 + $0x190] sm:$0xff] %vm2037, %v6839
  %6904 = vst.msk [vmem:[%s6 + $0x198] sm:$0xff] %vm2037, %v6840
  %6905 = vst.msk [vmem:[%s6 + $0x1a0] sm:$0xff] %vm2037, %v6841
  %6906 = vst.msk [vmem:[%s6 + $0x1a8] sm:$0xff] %vm2037, %v6842
  %6907 = vst.msk [vmem:[%s6 + $0x1b0] sm:$0xff] %vm2037, %v6843
  %6908 = vst.msk [vmem:[%s6 + $0x1b8] sm:$0xff] %vm2037, %v6844
  %6909 = vst.msk [vmem:[%s6 + $0x1c0] sm:$0xff] %vm2037, %v6845
  %6910 = vst.msk [vmem:[%s6 + $0x1c8] sm:$0xff] %vm2037, %v6846
  %6911 = vst.msk [vmem:[%s6 + $0x1d0] sm:$0xff] %vm2037, %v6847
  %6912 = vst.msk [vmem:[%s6 + $0x1d8] sm:$0xff] %vm2037, %v6848
  %6913 = vst.msk [vmem:[%s6 + $0x1e0] sm:$0xff] %vm2037, %v6849
  %6914 = vst.msk [vmem:[%s6 + $0x1e8] sm:$0xff] %vm2037, %v6850
  %6915 = vst.msk [vmem:[%s6 + $0x1f0] sm:$0xff] %vm2037, %v6851
  %6916 = vst.msk [vmem:[%s6 + $0x1f8] sm:$0xff] %vm2037, %v6852
  // Predicated region
  $region26: #{tpu_custom_call.1} parent=0 // pred_check
    _
  $region27: #{tpu_custom_call.1} parent=0 // pred_check_branch
    %6918 = sbr.rel (0) target = $region29
  $region28: #{tpu_custom_call.1} parent=0 // pred_region
    _
  $region29: #{tpu_custom_call.1} parent=0 // pred_fallthru
    _
  // Predicated region
  $region30: #{tpu_custom_call.1} parent=0 // pred_check
    _
  $region31: #{tpu_custom_call.1} parent=0 // pred_check_branch
    %6920 = sbr.rel (0) target = $region33
  $region32: #{tpu_custom_call.1} parent=0 // pred_region
    _
  $region33: #{tpu_custom_call.1} parent=0 // pred_fallthru
    _

</llo_original>
